<compile_context>
chip_gen: v7x
topology: tpu7x:2x2x1
jax: 0.10.0
libtpu: 0.0.40
codegen_flags: <defaults>
</compile_context>

<pallas_src>
import numpy as np

import jax
import jax.numpy as jnp
from jax.experimental import pallas as pl
from jax.experimental.pallas import tpu as pltpu

# ------------------------- model hyperparameters -------------------------
D_IN = 3
D_OUT = 1
WIDTH = 32
DEPTH = 3
MULTIRES = 2
SOFTPLUS_BETA = 100.0
SOFTPLUS_INV_BETA = 1.0 / SOFTPLUS_BETA   # hoisted: multiply, not divide (EUP-bound kernel)
SOFTPLUS_THRESHOLD = 20.0
BN_EPS = 1e-5


def _round_up(n, m):
    return ((n + m - 1) // m) * m


def _my_softplus(x):
    """PyTorch Softplus(beta=100, threshold=20): linear where beta*x > threshold."""
    z = SOFTPLUS_BETA * x
    safe = jnp.minimum(z, SOFTPLUS_THRESHOLD)          # avoid overflow in untaken branch
    return jnp.where(z > SOFTPLUS_THRESHOLD, x,
                     jnp.log1p(jnp.exp(safe)) * SOFTPLUS_INV_BETA)


# ------------------------------ Pallas kernel ------------------------------
def _make_kernel(multires, n_hidden_act, act_dtype):
    """Fused PE + MLP forward.

    Feature-major layout: every activation is (features, tm) so the row axis
    maps to the 128-lane axis (lane-dense VPU/EUP work, lane-dense stores).
    """

    def kernel(x_ref, w1s_ref, b1_ref, *refs):
        out_ref = refs[-1]
        rest = refs[:-1]          # (w, b) pairs: (n_hidden_act - 1) activated + 1 fused final
        w_dtype = w1s_ref.dtype   # bf16 weights -> single-pass MXU, half operand traffic

        x = x_ref[...]            # (d_in, tm) f32

        # First (BN-folded) linear with eager accumulation: each PE feature is
        # consumed by its small matmul right after it is produced (no 5-entry
        # feature list kept live). Higher octaves use double-angle identities
        # on the VPU; only one sin/cos pair hits the EUP.
        acc = jnp.dot(w1s_ref[0], x.astype(w_dtype), preferred_element_type=jnp.float32)
        if multires > 0:
            s, c = jnp.sin(x), jnp.cos(x)
            acc = acc + jnp.dot(w1s_ref[1], s.astype(w_dtype),
                                preferred_element_type=jnp.float32)
            acc = acc + jnp.dot(w1s_ref[2], c.astype(w_dtype),
                                preferred_element_type=jnp.float32)
            for o in range(1, multires):
                s, c = 2.0 * s * c, c * c - s * s
                acc = acc + jnp.dot(w1s_ref[2 * o + 1], s.astype(w_dtype),
                                    preferred_element_type=jnp.float32)
                acc = acc + jnp.dot(w1s_ref[2 * o + 2], c.astype(w_dtype),
                                    preferred_element_type=jnp.float32)
        acc = acc + b1_ref[...]                       # f32 bias add on the f32 accumulator
        h = _my_softplus(acc.astype(act_dtype))       # MySoftplus; Dropout(0) is identity

        # Remaining activated hidden layers (BN folded into W / b).
        idx = 0
        for _ in range(n_hidden_act - 1):
            w, b = rest[idx], rest[idx + 1]
            idx += 2
            acc = jnp.dot(w[...], h.astype(w_dtype),
                          preferred_element_type=jnp.float32) + b[...]
            h = _my_softplus(acc.astype(act_dtype))

        # Fused (last hidden Linear @ output Linear), computed offline.
        w, b = rest[idx], rest[idx + 1]
        out = jnp.dot(w[...], h.astype(w_dtype),
                      preferred_element_type=jnp.float32) + b[...]
        out_ref[...] = out.astype(out_ref.dtype)

    return kernel


def implicit_network_forward_t(x_t, kernel_params, *, multires=MULTIRES, tm_eff=1024,
                               act_dtype=jnp.float32):
    """Pre-transposed / pre-padded entry point.

    x_t: (d_in, n_pad) f32 with n_pad a multiple of tm_eff; rows on the lane axis.
    Returns (d_out, n_pad) f32.
    """
    d_in, n_pad = x_t.shape
    assert n_pad % tm_eff == 0, (n_pad, tm_eff)
    rest = kernel_params[2:]
    width = kernel_params[0].shape[1]
    d_out = rest[-2].shape[0]
    n_hidden_act = 1 + (len(rest) - 2) // 2
    d_pe = d_in * (1 + 2 * multires)

    in_specs = [pl.BlockSpec((d_in, tm_eff), lambda i: (0, i))]
    for p in kernel_params:
        # small parameter tensors: full-array blocks, resident every grid step
        in_specs.append(pl.BlockSpec(p.shape, lambda i, nd=p.ndim: (0,) * nd))

    # Compute-heavy / memory-trivial hint for XLA's scheduler.
    n_param_bytes = sum(int(np.prod(p.shape)) * p.dtype.itemsize for p in kernel_params)
    cost = pl.CostEstimate(
        flops=2 * n_pad * (d_pe * width + (n_hidden_act - 1) * width * width + width * d_out),
        transcendentals=n_pad * (2 * d_in + 2 * 2 * n_hidden_act * width),
        bytes_accessed=4 * n_pad * (d_in + d_out) + n_param_bytes,
    )

    return pl.pallas_call(
        _make_kernel(multires, n_hidden_act, act_dtype),
        out_shape=jax.ShapeDtypeStruct((d_out, n_pad), jnp.float32),
        grid_spec=pl.GridSpec(
            grid=(n_pad // tm_eff,),
            in_specs=in_specs,
            out_specs=pl.BlockSpec((d_out, tm_eff), lambda i: (0, i)),
        ),
        compiler_params=pltpu.CompilerParams(dimension_semantics=("parallel",)),
        cost_estimate=cost,
    )(x_t, *kernel_params)


def implicit_network_forward(x3d, kernel_params, *, multires=MULTIRES, tm=1024,
                             act_dtype=jnp.float32):
    """x3d: (batch, n_points, d_in) float32 -> (batch, n_points, d_out)."""
    B, P, d_in = x3d.shape
    N = B * P

    # Row tile: large to amortize per-step overhead, but sized so the grid has
    # >= 2 steps whenever possible (both v7x TensorCores get work); padded so
    # any N works.
    tm = max(128, _round_up(tm, 128))
    tm_eff = min(tm, _round_up(-(-N // 2), 128))
    n_pad = _round_up(N, tm_eff)

    # Layout plumbing: rows onto the lane axis. This is one tiny XLA op before
    # the fused kernel; callers that reuse x across calls should pre-transpose /
    # pre-pad once and call implicit_network_forward_t directly.
    x_t = x3d.reshape(N, d_in).T                       # (d_in, N)
    if n_pad != N:
        x_t = jnp.pad(x_t, ((0, 0), (0, n_pad - N)))

    out_t = implicit_network_forward_t(x_t, kernel_params, multires=multires,
                                       tm_eff=tm_eff, act_dtype=act_dtype)
    d_out = out_t.shape[0]
    return out_t[:, :N].T.reshape(B, P, d_out)


# ------------------------- parameters (PyTorch layout) -------------------------
def init_raw_params(key):
    """Raw per-layer params in PyTorch (out, in) layout.

    geometric_init in this module: Normal(0, 0.01) weights, zero biases.
    BatchNorm1d: default affine (gamma=1, beta=0), eval running stats (0, 1).
    """
    d_input = D_IN + D_IN * 2 * MULTIRES   # 15
    in_dims = [d_input] + [WIDTH] * (DEPTH - 1)
    layers = []
    # hidden_channels[:-1] blocks: Linear + BN + MySoftplus (+ Dropout(0))
    for li in range(DEPTH - 1):
        key, sub = jax.random.split(key)
        w = 0.01 * jax.random.normal(sub, (WIDTH, in_dims[li]), jnp.float32)
        b = jnp.zeros((WIDTH,), jnp.float32)
        bn = dict(gamma=jnp.ones((WIDTH,), jnp.float32),
                  beta=jnp.zeros((WIDTH,), jnp.float32),
                  mean=jnp.zeros((WIDTH,), jnp.float32),
                  var=jnp.ones((WIDTH,), jnp.float32))
        layers.append(("lin_bn_act", w, b, bn))
    # last hidden Linear (no BN / activation)
    key, sub = jax.random.split(key)
    layers.append(("lin", 0.01 * jax.random.normal(sub, (WIDTH, WIDTH), jnp.float32),
                   jnp.zeros((WIDTH,), jnp.float32), None))
    # output_layer
    key, sub = jax.random.split(key)
    layers.append(("lin", 0.01 * jax.random.normal(sub, (D_OUT, WIDTH), jnp.float32),
                   jnp.zeros((D_OUT,), jnp.float32), None))
    return layers


def fold_params(raw_layers, *, multires=MULTIRES, weight_dtype=jnp.bfloat16):
    """Fold eval-mode BN into the linears; fuse last hidden Linear with the output Linear.

    Weights are cast offline to `weight_dtype` (bf16 -> explicit single-pass MXU
    operands on all generations); biases stay f32 and are added to the f32 accumulator.
    """
    folded = []
    for kind, w, b, bn in raw_layers:
        if kind == "lin_bn_act":
            s = bn["gamma"] / jnp.sqrt(bn["var"] + BN_EPS)
            t = bn["beta"] - bn["mean"] * s
            w = w * s[:, None]
            b = b * s + t
        folded.append((w, b))

    # y = Wo @ (W3 @ h + b3) + bo  ->  Wf = Wo @ W3, bf = Wo @ b3 + bo
    (w3, b3), (wo, bo) = folded[-2], folded[-1]
    wf = wo @ w3
    bf = wo @ b3 + bo
    folded = folded[:-2] + [(wf, bf)]

    # Split the first weight into per-PE-block (width, d_in) slices, stacked.
    w1, b1 = folded[0]
    n_pe = 1 + 2 * multires
    w1_stack = jnp.stack([w1[:, k * D_IN:(k + 1) * D_IN] for k in range(n_pe)], axis=0)

    params = [w1_stack.astype(weight_dtype), b1.reshape(-1, 1).astype(jnp.float32)]
    for w, b in folded[1:]:
        params += [w.astype(weight_dtype), b.reshape(-1, 1).astype(jnp.float32)]
    return params


# ------------------------------ pure-JAX reference ------------------------------
def reference_forward(x3d, raw_layers, *, multires=MULTIRES):
    """Faithful (unfused) eval-mode forward matching the PyTorch module structure."""
    B, P, d_in = x3d.shape
    h = x3d.reshape(B * P, d_in)
    if multires > 0:
        feats = [h]
        for i in range(multires):
            feats.append(jnp.sin((2.0 ** i) * h))
            feats.append(jnp.cos((2.0 ** i) * h))
        h = jnp.concatenate(feats, axis=-1)
    for kind, w, b, bn in raw_layers:
        h = h @ w.T + b
        if kind == "lin_bn_act":
            h = (h - bn["mean"]) / jnp.sqrt(bn["var"] + BN_EPS) * bn["gamma"] + bn["beta"]
            h = _my_softplus(h)   # Dropout(p=0) is identity
    return h.reshape(B, P, -1)


if __name__ == "__main__":
    key = jax.random.PRNGKey(0)
    key, xkey = jax.random.split(key)

    batch, n_points = 2, 1024   # N = 2048 -> 2 grid steps at tm=1024 (both v7x TCs busy)
    x = jax.random.normal(xkey, (batch, n_points, D_IN), jnp.float32)
    cond = {}   # no pose/shape/latent conditioning in this instantiation

    raw_layers = init_raw_params(key)
    kernel_params = fold_params(raw_layers)

    ref = reference_forward(x, raw_layers)

    # Default path: f32 activations/softplus (v5e-safe) with bf16 matmul operands.
    out = jax.block_until_ready(implicit_network_forward(x, kernel_params))
    assert out.shape == (batch, n_points, D_OUT), out.shape
    np.testing.assert_allclose(np.asarray(out), np.asarray(ref), rtol=1e-3, atol=2e-6)

    # bf16 activation/softplus path (v6e/v7x EUP/VPU win; numerically looser).
    out_bf16 = jax.block_until_ready(
        implicit_network_forward(x, kernel_params, act_dtype=jnp.bfloat16))
    np.testing.assert_allclose(np.asarray(out_bf16), np.asarray(ref), rtol=2e-2, atol=5e-6)

    print("KERNEL_OK")
</pallas_src>

<mosaic_0001>
module attributes {stable_mosaic.version = 11 : i64} {
  func.func @kernel(%arg0: i32, %arg1: memref<3x1024xf32, #tpu.memory_space<vmem>>, %arg2: memref<5x32x3xbf16, #tpu.memory_space<vmem>>, %arg3: memref<32x1xf32, #tpu.memory_space<vmem>>, %arg4: memref<32x32xbf16, #tpu.memory_space<vmem>>, %arg5: memref<32x1xf32, #tpu.memory_space<vmem>>, %arg6: memref<1x32xbf16, #tpu.memory_space<vmem>>, %arg7: memref<1x1xf32, #tpu.memory_space<vmem>>, %arg8: memref<1x1024xf32, #tpu.memory_space<vmem>>) attributes {dimension_semantics = [#tpu.dimension_semantics<parallel>], iteration_bounds = array<i64: 2>, scalar_prefetch = 0 : i64, scratch_operands = 0 : i64, tpu.core_type = #tpu.core_type<tc>, window_params = [{transform_indices = @transform_0, window_bounds = array<i64: 3, 1024>}, {pipeline_mode = #tpu.pipeline_mode<synchronous>, transform_indices = @transform_1, window_bounds = array<i64: 5, 32, 3>}, {pipeline_mode = #tpu.pipeline_mode<synchronous>, transform_indices = @transform_2, window_bounds = array<i64: 32, 1>}, {pipeline_mode = #tpu.pipeline_mode<synchronous>, transform_indices = @transform_3, window_bounds = array<i64: 32, 32>}, {pipeline_mode = #tpu.pipeline_mode<synchronous>, transform_indices = @transform_4, window_bounds = array<i64: 32, 1>}, {pipeline_mode = #tpu.pipeline_mode<synchronous>, transform_indices = @transform_5, window_bounds = array<i64: 1, 32>}, {pipeline_mode = #tpu.pipeline_mode<synchronous>, transform_indices = @transform_6, window_bounds = array<i64: 1, 1>}, {transform_indices = @transform_7, window_bounds = array<i64: 1, 1024>}]} {
    %c0 = arith.constant 0 : index
    %c0_0 = arith.constant 0 : index
    %0 = vector.load %arg1[%c0, %c0_0] : memref<3x1024xf32, #tpu.memory_space<vmem>>, vector<3x1024xf32>
    %c0_1 = arith.constant 0 : index
    %c0_2 = arith.constant 0 : index
    %c0_3 = arith.constant 0 : index
    %1 = vector.load %arg2[%c0_1, %c0_2, %c0_3] : memref<5x32x3xbf16, #tpu.memory_space<vmem>>, vector<1x32x3xbf16>
    %2 = vector.shape_cast %1 : vector<1x32x3xbf16> to vector<32x3xbf16>
    %3 = arith.truncf %0 : vector<3x1024xf32> to vector<3x1024xbf16>
    %cst = arith.constant dense<0.000000e+00> : vector<32x1024xf32>
    %4 = tpu.matmul %2, %3, %cst {dimension_numbers = #tpu.dot_dimension_numbers<[1], [0], [0], [1], [0, 0, 1, 1], [], []>} : vector<32x3xbf16>, vector<3x1024xbf16>, vector<32x1024xf32> -> vector<32x1024xf32>
    %5 = math.sin %0 : vector<3x1024xf32>
    %6 = math.cos %0 : vector<3x1024xf32>
    %c1 = arith.constant 1 : index
    %c0_4 = arith.constant 0 : index
    %c0_5 = arith.constant 0 : index
    %7 = vector.load %arg2[%c1, %c0_4, %c0_5] : memref<5x32x3xbf16, #tpu.memory_space<vmem>>, vector<1x32x3xbf16>
    %8 = vector.shape_cast %7 : vector<1x32x3xbf16> to vector<32x3xbf16>
    %9 = arith.truncf %5 : vector<3x1024xf32> to vector<3x1024xbf16>
    %cst_6 = arith.constant dense<0.000000e+00> : vector<32x1024xf32>
    %10 = tpu.matmul %8, %9, %cst_6 {dimension_numbers = #tpu.dot_dimension_numbers<[1], [0], [0], [1], [0, 0, 1, 1], [], []>} : vector<32x3xbf16>, vector<3x1024xbf16>, vector<32x1024xf32> -> vector<32x1024xf32>
    %11 = arith.addf %4, %10 : vector<32x1024xf32>
    %c2 = arith.constant 2 : index
    %c0_7 = arith.constant 0 : index
    %c0_8 = arith.constant 0 : index
    %12 = vector.load %arg2[%c2, %c0_7, %c0_8] : memref<5x32x3xbf16, #tpu.memory_space<vmem>>, vector<1x32x3xbf16>
    %13 = vector.shape_cast %12 : vector<1x32x3xbf16> to vector<32x3xbf16>
    %14 = arith.truncf %6 : vector<3x1024xf32> to vector<3x1024xbf16>
    %cst_9 = arith.constant dense<0.000000e+00> : vector<32x1024xf32>
    %15 = tpu.matmul %13, %14, %cst_9 {dimension_numbers = #tpu.dot_dimension_numbers<[1], [0], [0], [1], [0, 0, 1, 1], [], []>} : vector<32x3xbf16>, vector<3x1024xbf16>, vector<32x1024xf32> -> vector<32x1024xf32>
    %16 = arith.addf %11, %15 : vector<32x1024xf32>
    %cst_10 = arith.constant 2.000000e+00 : f32
    %17 = vector.broadcast %cst_10 : f32 to vector<3x1024xf32>
    %18 = arith.mulf %17, %5 : vector<3x1024xf32>
    %19 = arith.mulf %18, %6 : vector<3x1024xf32>
    %20 = arith.mulf %6, %6 : vector<3x1024xf32>
    %21 = arith.mulf %5, %5 : vector<3x1024xf32>
    %22 = arith.subf %20, %21 : vector<3x1024xf32>
    %c3 = arith.constant 3 : index
    %c0_11 = arith.constant 0 : index
    %c0_12 = arith.constant 0 : index
    %23 = vector.load %arg2[%c3, %c0_11, %c0_12] : memref<5x32x3xbf16, #tpu.memory_space<vmem>>, vector<1x32x3xbf16>
    %24 = vector.shape_cast %23 : vector<1x32x3xbf16> to vector<32x3xbf16>
    %25 = arith.truncf %19 : vector<3x1024xf32> to vector<3x1024xbf16>
    %cst_13 = arith.constant dense<0.000000e+00> : vector<32x1024xf32>
    %26 = tpu.matmul %24, %25, %cst_13 {dimension_numbers = #tpu.dot_dimension_numbers<[1], [0], [0], [1], [0, 0, 1, 1], [], []>} : vector<32x3xbf16>, vector<3x1024xbf16>, vector<32x1024xf32> -> vector<32x1024xf32>
    %27 = arith.addf %16, %26 : vector<32x1024xf32>
    %c4 = arith.constant 4 : index
    %c0_14 = arith.constant 0 : index
    %c0_15 = arith.constant 0 : index
    %28 = vector.load %arg2[%c4, %c0_14, %c0_15] : memref<5x32x3xbf16, #tpu.memory_space<vmem>>, vector<1x32x3xbf16>
    %29 = vector.shape_cast %28 : vector<1x32x3xbf16> to vector<32x3xbf16>
    %30 = arith.truncf %22 : vector<3x1024xf32> to vector<3x1024xbf16>
    %cst_16 = arith.constant dense<0.000000e+00> : vector<32x1024xf32>
    %31 = tpu.matmul %29, %30, %cst_16 {dimension_numbers = #tpu.dot_dimension_numbers<[1], [0], [0], [1], [0, 0, 1, 1], [], []>} : vector<32x3xbf16>, vector<3x1024xbf16>, vector<32x1024xf32> -> vector<32x1024xf32>
    %32 = arith.addf %27, %31 : vector<32x1024xf32>
    %c0_17 = arith.constant 0 : index
    %c0_18 = arith.constant 0 : index
    %33 = vector.load %arg3[%c0_17, %c0_18] : memref<32x1xf32, #tpu.memory_space<vmem>>, vector<32x1xf32>
    %34 = vector.broadcast %33 : vector<32x1xf32> to vector<32x1024xf32>
    %35 = arith.addf %32, %34 : vector<32x1024xf32>
    %cst_19 = arith.constant 1.000000e+02 : f32
    %36 = vector.broadcast %cst_19 : f32 to vector<32x1024xf32>
    %37 = arith.mulf %36, %35 : vector<32x1024xf32>
    %cst_20 = arith.constant 2.000000e+01 : f32
    %38 = vector.broadcast %cst_20 : f32 to vector<32x1024xf32>
    %39 = arith.minimumf %37, %38 : vector<32x1024xf32>
    %cst_21 = arith.constant 2.000000e+01 : f32
    %40 = vector.broadcast %cst_21 : f32 to vector<32x1024xf32>
    %41 = arith.cmpf ogt, %37, %40 : vector<32x1024xf32>
    %42 = math.exp %39 : vector<32x1024xf32>
    %43 = math.log1p %42 : vector<32x1024xf32>
    %cst_22 = arith.constant 0.00999999977 : f32
    %44 = vector.broadcast %cst_22 : f32 to vector<32x1024xf32>
    %45 = arith.mulf %43, %44 : vector<32x1024xf32>
    %46 = arith.select %41, %35, %45 : vector<32x1024xi1>, vector<32x1024xf32>
    %c0_23 = arith.constant 0 : index
    %c0_24 = arith.constant 0 : index
    %47 = vector.load %arg4[%c0_23, %c0_24] : memref<32x32xbf16, #tpu.memory_space<vmem>>, vector<32x32xbf16>
    %48 = arith.truncf %46 : vector<32x1024xf32> to vector<32x1024xbf16>
    %cst_25 = arith.constant dense<0.000000e+00> : vector<32x1024xf32>
    %49 = tpu.matmul %47, %48, %cst_25 {dimension_numbers = #tpu.dot_dimension_numbers<[1], [0], [0], [1], [0, 0, 1, 1], [], []>} : vector<32x32xbf16>, vector<32x1024xbf16>, vector<32x1024xf32> -> vector<32x1024xf32>
    %c0_26 = arith.constant 0 : index
    %c0_27 = arith.constant 0 : index
    %50 = vector.load %arg5[%c0_26, %c0_27] : memref<32x1xf32, #tpu.memory_space<vmem>>, vector<32x1xf32>
    %51 = vector.broadcast %50 : vector<32x1xf32> to vector<32x1024xf32>
    %52 = arith.addf %49, %51 : vector<32x1024xf32>
    %cst_28 = arith.constant 1.000000e+02 : f32
    %53 = vector.broadcast %cst_28 : f32 to vector<32x1024xf32>
    %54 = arith.mulf %53, %52 : vector<32x1024xf32>
    %cst_29 = arith.constant 2.000000e+01 : f32
    %55 = vector.broadcast %cst_29 : f32 to vector<32x1024xf32>
    %56 = arith.minimumf %54, %55 : vector<32x1024xf32>
    %cst_30 = arith.constant 2.000000e+01 : f32
    %57 = vector.broadcast %cst_30 : f32 to vector<32x1024xf32>
    %58 = arith.cmpf ogt, %54, %57 : vector<32x1024xf32>
    %59 = math.exp %56 : vector<32x1024xf32>
    %60 = math.log1p %59 : vector<32x1024xf32>
    %cst_31 = arith.constant 0.00999999977 : f32
    %61 = vector.broadcast %cst_31 : f32 to vector<32x1024xf32>
    %62 = arith.mulf %60, %61 : vector<32x1024xf32>
    %63 = arith.select %58, %52, %62 : vector<32x1024xi1>, vector<32x1024xf32>
    %c0_32 = arith.constant 0 : index
    %c0_33 = arith.constant 0 : index
    %64 = vector.load %arg6[%c0_32, %c0_33] : memref<1x32xbf16, #tpu.memory_space<vmem>>, vector<1x32xbf16>
    %65 = arith.truncf %63 : vector<32x1024xf32> to vector<32x1024xbf16>
    %cst_34 = arith.constant dense<0.000000e+00> : vector<1x1024xf32>
    %66 = tpu.matmul %64, %65, %cst_34 {dimension_numbers = #tpu.dot_dimension_numbers<[1], [0], [0], [1], [0, 0, 1, 1], [], []>} : vector<1x32xbf16>, vector<32x1024xbf16>, vector<1x1024xf32> -> vector<1x1024xf32>
    %c0_35 = arith.constant 0 : index
    %c0_36 = arith.constant 0 : index
    %67 = vector.load %arg7[%c0_35, %c0_36] : memref<1x1xf32, #tpu.memory_space<vmem>>, vector<1x1xf32>
    %68 = vector.broadcast %67 : vector<1x1xf32> to vector<1x1024xf32>
    %69 = arith.addf %66, %68 : vector<1x1024xf32>
    %c0_37 = arith.constant 0 : index
    %c0_38 = arith.constant 0 : index
    %70 = vector.load %arg8[%c0_37, %c0_38] : memref<1x1024xf32, #tpu.memory_space<vmem>>, vector<1x1024xf32>
    tpu.vector_store %arg8[%c0_37, %c0_38], %69 {strides = array<i32>} : memref<1x1024xf32, #tpu.memory_space<vmem>>, vector<1x1024xf32>,
    return
  }
  func.func @transform_0(%arg0: i32) -> (i32, i32) {
    %c0_i32 = arith.constant 0 : i32
    %c0_i32_0 = arith.constant 0 : i32
    return %c0_i32, %arg0 : i32, i32
  }
  func.func @transform_1(%arg0: i32) -> (i32, i32, i32) {
    %c0_i32 = arith.constant 0 : i32
    %c0_i32_0 = arith.constant 0 : i32
    %c0_i32_1 = arith.constant 0 : i32
    %c0_i32_2 = arith.constant 0 : i32
    return %c0_i32, %c0_i32_0, %c0_i32_1 : i32, i32, i32
  }
  func.func @transform_2(%arg0: i32) -> (i32, i32) {
    %c0_i32 = arith.constant 0 : i32
    %c0_i32_0 = arith.constant 0 : i32
    %c0_i32_1 = arith.constant 0 : i32
    return %c0_i32, %c0_i32_0 : i32, i32
  }
  func.func @transform_3(%arg0: i32) -> (i32, i32) {
    %c0_i32 = arith.constant 0 : i32
    %c0_i32_0 = arith.constant 0 : i32
    %c0_i32_1 = arith.constant 0 : i32
    return %c0_i32, %c0_i32_0 : i32, i32
  }
  func.func @transform_4(%arg0: i32) -> (i32, i32) {
    %c0_i32 = arith.constant 0 : i32
    %c0_i32_0 = arith.constant 0 : i32
    %c0_i32_1 = arith.constant 0 : i32
    return %c0_i32, %c0_i32_0 : i32, i32
  }
  func.func @transform_5(%arg0: i32) -> (i32, i32) {
    %c0_i32 = arith.constant 0 : i32
    %c0_i32_0 = arith.constant 0 : i32
    %c0_i32_1 = arith.constant 0 : i32
    return %c0_i32, %c0_i32_0 : i32, i32
  }
  func.func @transform_6(%arg0: i32) -> (i32, i32) {
    %c0_i32 = arith.constant 0 : i32
    %c0_i32_0 = arith.constant 0 : i32
    %c0_i32_1 = arith.constant 0 : i32
    return %c0_i32, %c0_i32_0 : i32, i32
  }
  func.func @transform_7(%arg0: i32) -> (i32, i32) {
    %c0_i32 = arith.constant 0 : i32
    %c0_i32_0 = arith.constant 0 : i32
    return %c0_i32, %arg0 : i32, i32
  }
}

</mosaic_0001>

<llo_original>
// kernel: tpu_custom_call.1
$region0: #{tpu_custom_call.1}
  #allocation0 [shape = 'u32[]', space=smem, size = 0x4, offset = 0x4, fixed_abs, tag = 'smem constant byte address 0x4 - core index']
  #allocation1 [shape = 'u32[144,128]{1,0:T(1,128)}', space=vmem, size = 0x12000, scoped, tag = 'internal scratch']
  #allocation2 [shape = 'f32[1,1]{1,0:T(1,128)S(1)}', space=vmem, size = 0x200, scoped, tag = 'scoped memory for tpu_custom_call.1']
  %s0 = inlined_call_operand.vmem [shape: f32[3,2048], index: 0, kind: input, shape index: {}]
  %s1 = inlined_call_operand.vmem [shape: bf16[5,32,3], index: 1, kind: input, shape index: {}]
  %s2 = inlined_call_operand.vmem [shape: f32[32,1], index: 2, kind: input, shape index: {}]
  %s3 = inlined_call_operand.vmem [shape: bf16[32,32], index: 3, kind: input, shape index: {}]
  %s4 = inlined_call_operand.vmem [shape: f32[32,1], index: 4, kind: input, shape index: {}]
  %s5 = inlined_call_operand.vmem [shape: bf16[1,32], index: 5, kind: input, shape index: {}]
  %s6 = inlined_call_operand.<no memory space> [shape: f32[1,1], index: 6, kind: input, shape index: {}]
  %s7 = inlined_call_operand.hbm [shape: f32[1,2048], index: 7, kind: output, shape index: {}]
  %s8 = sld [smem:[#allocation0]]
  $region61: #{tpu_custom_call.1} parent=0
    _
  %s10 = ssub.s32 1, %s8
  %s11 = scalar_select 0, %s10, %s8
  %v12 = vstv %s6
  %13 = vst [vmem:[#allocation2] sm:$0x1] %v12
  $region1: #{tpu_custom_call.1} parent=0
    #allocation3 [shape = 'u8[8192]{0}', space=vmem, size = 0x2000, scoped, tag = 'output window, operand 0']
    #allocation4 [shape = 's32[2]{0}', space=sflag, size = 0x8, scoped, tag = 'scoped memory for tpu_custom_call.1']
    %14 = vsyncpa [#allocation4], 0
    %s15 = scalar_lea.sflag [#allocation4], 1
    %16 = vsyncpa %s15, 0
    loop: start=0, step=1, limit=4
    $region2: #{tpu_custom_call.1} parent=1 // loop_pre_header
      _
    $region3: #{tpu_custom_call.1} parent=1 // loop_header
      %s18 = sphi 0, %s22
      %p19 = scmp.ge.s32.totalorder %s18, 4
      %s28 = sphi 0, %s30
      %s31 = sphi 0, %s28
      %s32 = sphi 0, %s31
      %s48 = sphi 0, %s32
      %s52 = sphi 0, %s52
      %s54 = sphi 0, %s52
      %s55 = sphi 0, %s54
      %s69 = sphi 0, %s55
      %s73 = sphi 0, %s73
      %s75 = sphi 0, %s73
      %s76 = sphi 0, %s75
      %s90 = sphi 0, %s76
      %s94 = sphi 0, %s94
      %s96 = sphi 0, %s94
      %s97 = sphi 0, %s96
      %s111 = sphi 0, %s97
      %s115 = sphi 0, %s115
      %s117 = sphi 0, %s115
      %s118 = sphi 0, %s117
      %s132 = sphi 0, %s118
      %s136 = sphi 0, %s136
      %s138 = sphi 0, %s136
      %s139 = sphi 0, %s138
      %s153 = sphi 0, %s139
      %s157 = sphi 0, %s157
      %s159 = sphi 0, %s157
      %s160 = sphi 0, %s159
      %s174 = sphi 0, %s160
      %s180 = sphi 0, %s182
      %s183 = sphi 0, %s180
      %s184 = sphi 0, %s183
      %s200 = sphi 0, %s184
    $region4: #{tpu_custom_call.1} parent=1 // loop_header_branch
      %21 = sbr.rel (%p19) target = $region8
    $region5: #{tpu_custom_call.1} parent=1 // loop_body
      %s23 = ssub.s32 %s18, 1
      %s24 = ssub.s32 %s18, 2
      %s25 = sadd.s32 %s18, 1
      %s26 = ssub.s32 %s18, %s25
      %p27 = scmp.eq.s32.totalorder %s26, 0
      %s29 = sadd.s32 %s28, 1
      %s30 = scalar_select %p27, %s28, %s29
      %p33 = pneg %p27
      %p34 = scmp.eq.s32.totalorder %s18, 1
      %p35 = por %p33, %p34
      %p36 = scmp.ne.s32.totalorder %s28, %s31
      %p37 = scmp.eq.s32.totalorder %s18, 0
      %p38 = por %p36, %p37
      %p39 = scmp.ne.s32.totalorder %s28, %s31
      %p40 = scmp.eq.s32.totalorder %s23, 1
      %p41 = por %p39, %p40
      %p42 = scmp.ne.s32.totalorder %s31, %s32
      %p43 = scmp.eq.s32.totalorder %s23, 0
      %p44 = por %p42, %p43
      %p45 = scmp.ne.s32.totalorder %s31, %s32
      %p46 = scmp.eq.s32.totalorder %s24, 1
      %p47 = por %p45, %p46
      %p49 = scmp.ne.s32.totalorder %s32, %s48
      %p50 = scmp.eq.s32.totalorder %s24, 0
      %p51 = por %p49, %p50
      %s53 = sadd.s32 %s52, 1
      %p56 = scmp.eq.s32.totalorder %s18, 1
      %p57 = scmp.ne.s32.totalorder %s52, %s54
      %p58 = scmp.eq.s32.totalorder %s18, 0
      %p59 = por %p57, %p58
      %p60 = scmp.ne.s32.totalorder %s52, %s54
      %p61 = scmp.eq.s32.totalorder %s23, 1
      %p62 = por %p60, %p61
      %p63 = scmp.ne.s32.totalorder %s54, %s55
      %p64 = scmp.eq.s32.totalorder %s23, 0
      %p65 = por %p63, %p64
      %p66 = scmp.ne.s32.totalorder %s54, %s55
      %p67 = scmp.eq.s32.totalorder %s24, 1
      %p68 = por %p66, %p67
      %p70 = scmp.ne.s32.totalorder %s55, %s69
      %p71 = scmp.eq.s32.totalorder %s24, 0
      %p72 = por %p70, %p71
      %s74 = sadd.s32 %s73, 1
      %p77 = scmp.eq.s32.totalorder %s18, 1
      %p78 = scmp.ne.s32.totalorder %s73, %s75
      %p79 = scmp.eq.s32.totalorder %s18, 0
      %p80 = por %p78, %p79
      %p81 = scmp.ne.s32.totalorder %s73, %s75
      %p82 = scmp.eq.s32.totalorder %s23, 1
      %p83 = por %p81, %p82
      %p84 = scmp.ne.s32.totalorder %s75, %s76
      %p85 = scmp.eq.s32.totalorder %s23, 0
      %p86 = por %p84, %p85
      %p87 = scmp.ne.s32.totalorder %s75, %s76
      %p88 = scmp.eq.s32.totalorder %s24, 1
      %p89 = por %p87, %p88
      %p91 = scmp.ne.s32.totalorder %s76, %s90
      %p92 = scmp.eq.s32.totalorder %s24, 0
      %p93 = por %p91, %p92
      %s95 = sadd.s32 %s94, 1
      %p98 = scmp.eq.s32.totalorder %s18, 1
      %p99 = scmp.ne.s32.totalorder %s94, %s96
      %p100 = scmp.eq.s32.totalorder %s18, 0
      %p101 = por %p99, %p100
      %p102 = scmp.ne.s32.totalorder %s94, %s96
      %p103 = scmp.eq.s32.totalorder %s23, 1
      %p104 = por %p102, %p103
      %p105 = scmp.ne.s32.totalorder %s96, %s97
      %p106 = scmp.eq.s32.totalorder %s23, 0
      %p107 = por %p105, %p106
      %p108 = scmp.ne.s32.totalorder %s96, %s97
      %p109 = scmp.eq.s32.totalorder %s24, 1
      %p110 = por %p108, %p109
      %p112 = scmp.ne.s32.totalorder %s97, %s111
      %p113 = scmp.eq.s32.totalorder %s24, 0
      %p114 = por %p112, %p113
      %s116 = sadd.s32 %s115, 1
      %p119 = scmp.eq.s32.totalorder %s18, 1
      %p120 = scmp.ne.s32.totalorder %s115, %s117
      %p121 = scmp.eq.s32.totalorder %s18, 0
      %p122 = por %p120, %p121
      %p123 = scmp.ne.s32.totalorder %s115, %s117
      %p124 = scmp.eq.s32.totalorder %s23, 1
      %p125 = por %p123, %p124
      %p126 = scmp.ne.s32.totalorder %s117, %s118
      %p127 = scmp.eq.s32.totalorder %s23, 0
      %p128 = por %p126, %p127
      %p129 = scmp.ne.s32.totalorder %s117, %s118
      %p130 = scmp.eq.s32.totalorder %s24, 1
      %p131 = por %p129, %p130
      %p133 = scmp.ne.s32.totalorder %s118, %s132
      %p134 = scmp.eq.s32.totalorder %s24, 0
      %p135 = por %p133, %p134
      %s137 = sadd.s32 %s136, 1
      %p140 = scmp.eq.s32.totalorder %s18, 1
      %p141 = scmp.ne.s32.totalorder %s136, %s138
      %p142 = scmp.eq.s32.totalorder %s18, 0
      %p143 = por %p141, %p142
      %p144 = scmp.ne.s32.totalorder %s136, %s138
      %p145 = scmp.eq.s32.totalorder %s23, 1
      %p146 = por %p144, %p145
      %p147 = scmp.ne.s32.totalorder %s138, %s139
      %p148 = scmp.eq.s32.totalorder %s23, 0
      %p149 = por %p147, %p148
      %p150 = scmp.ne.s32.totalorder %s138, %s139
      %p151 = scmp.eq.s32.totalorder %s24, 1
      %p152 = por %p150, %p151
      %p154 = scmp.ne.s32.totalorder %s139, %s153
      %p155 = scmp.eq.s32.totalorder %s24, 0
      %p156 = por %p154, %p155
      %s158 = sadd.s32 %s157, 1
      %p161 = scmp.eq.s32.totalorder %s18, 1
      %p162 = scmp.ne.s32.totalorder %s157, %s159
      %p163 = scmp.eq.s32.totalorder %s18, 0
      %p164 = por %p162, %p163
      %p165 = scmp.ne.s32.totalorder %s157, %s159
      %p166 = scmp.eq.s32.totalorder %s23, 1
      %p167 = por %p165, %p166
      %p168 = scmp.ne.s32.totalorder %s159, %s160
      %p169 = scmp.eq.s32.totalorder %s23, 0
      %p170 = por %p168, %p169
      %p171 = scmp.ne.s32.totalorder %s159, %s160
      %p172 = scmp.eq.s32.totalorder %s24, 1
      %p173 = por %p171, %p172
      %p175 = scmp.ne.s32.totalorder %s160, %s174
      %p176 = scmp.eq.s32.totalorder %s24, 0
      %p177 = por %p175, %p176
      %s178 = ssub.s32 %s18, %s25
      %p179 = scmp.eq.s32.totalorder %s178, 0
      %s181 = sadd.s32 %s180, 1
      %s182 = scalar_select %p179, %s180, %s181
      %p185 = pneg %p179
      %p186 = scmp.eq.s32.totalorder %s18, 1
      %p187 = por %p185, %p186
      %p188 = scmp.ne.s32.totalorder %s180, %s183
      %p189 = scmp.eq.s32.totalorder %s18, 0
      %p190 = por %p188, %p189
      %p191 = scmp.ne.s32.totalorder %s180, %s183
      %p192 = scmp.eq.s32.totalorder %s23, 1
      %p193 = por %p191, %p192
      %p194 = scmp.ne.s32.totalorder %s183, %s184
      %p195 = scmp.eq.s32.totalorder %s23, 0
      %p196 = por %p194, %p195
      %p197 = scmp.ne.s32.totalorder %s183, %s184
      %p198 = scmp.eq.s32.totalorder %s24, 1
      %p199 = por %p197, %p198
      %p201 = scmp.ne.s32.totalorder %s184, %s200
      %p202 = scmp.eq.s32.totalorder %s24, 0
      %p203 = por %p201, %p202
      %p204 = scmp.le.s32.totalorder 1, %s18
      %p205 = scmp.lt.s32.totalorder %s18, 3
      %p206 = pnand %p204, %p205
      %p207 = pneg %p206
      // Predicated region
      $region9: #{tpu_custom_call.1} parent=5 // pred_check
        _
      $region10: #{tpu_custom_call.1} parent=5 // pred_check_branch
        %209 = sbr.rel (%p206) target = $region12
      $region11: #{tpu_custom_call.1} parent=5 // pred_region
        %s210 = ssub.s32 %s18, 1
        // Predicated region
        $region13: #{tpu_custom_call.1} parent=11 // pred_check
          %p211 = pneg %p65
        $region14: #{tpu_custom_call.1} parent=11 // pred_check_branch
          %213 = sbr.rel (%p211) target = $region16
        $region15: #{tpu_custom_call.1} parent=11 // pred_region
          _
        $region16: #{tpu_custom_call.1} parent=11 // pred_fallthru
          _
        // Predicated region
        $region17: #{tpu_custom_call.1} parent=11 // pred_check
          %p214 = pneg %p86
        $region18: #{tpu_custom_call.1} parent=11 // pred_check_branch
          %216 = sbr.rel (%p214) target = $region20
        $region19: #{tpu_custom_call.1} parent=11 // pred_region
          _
        $region20: #{tpu_custom_call.1} parent=11 // pred_fallthru
          _
        // Predicated region
        $region21: #{tpu_custom_call.1} parent=11 // pred_check
          %p217 = pneg %p107
        $region22: #{tpu_custom_call.1} parent=11 // pred_check_branch
          %219 = sbr.rel (%p217) target = $region24
        $region23: #{tpu_custom_call.1} parent=11 // pred_region
          _
        $region24: #{tpu_custom_call.1} parent=11 // pred_fallthru
          _
        // Predicated region
        $region25: #{tpu_custom_call.1} parent=11 // pred_check
          %p220 = pneg %p128
        $region26: #{tpu_custom_call.1} parent=11 // pred_check_branch
          %222 = sbr.rel (%p220) target = $region28
        $region27: #{tpu_custom_call.1} parent=11 // pred_region
          _
        $region28: #{tpu_custom_call.1} parent=11 // pred_fallthru
          _
        // Predicated region
        $region29: #{tpu_custom_call.1} parent=11 // pred_check
          %p223 = pneg %p149
        $region30: #{tpu_custom_call.1} parent=11 // pred_check_branch
          %225 = sbr.rel (%p223) target = $region32
        $region31: #{tpu_custom_call.1} parent=11 // pred_region
          _
        $region32: #{tpu_custom_call.1} parent=11 // pred_fallthru
          _
        // Predicated region
        $region33: #{tpu_custom_call.1} parent=11 // pred_check
          %p226 = pneg %p170
        $region34: #{tpu_custom_call.1} parent=11 // pred_check_branch
          %228 = sbr.rel (%p226) target = $region36
        $region35: #{tpu_custom_call.1} parent=11 // pred_region
          _
        $region36: #{tpu_custom_call.1} parent=11 // pred_fallthru
          _
      $region12: #{tpu_custom_call.1} parent=5 // pred_fallthru
        _
      %p229 = scmp.lt.s32.totalorder %s18, 2
      // Predicated region
      $region37: #{tpu_custom_call.1} parent=5 // pred_check
        %p230 = pneg %p229
      $region38: #{tpu_custom_call.1} parent=5 // pred_check_branch
        %232 = sbr.rel (%p230) target = $region40
      $region39: #{tpu_custom_call.1} parent=5 // pred_region
        // Predicated region
        $region41: #{tpu_custom_call.1} parent=39 // pred_check
          %p233 = pneg %p38
        $region42: #{tpu_custom_call.1} parent=39 // pred_check_branch
          %235 = sbr.rel (%p233) target = $region44
        $region43: #{tpu_custom_call.1} parent=39 // pred_region
          %s236 = smul.u32 8, %s18
          %p237 = scmp.lt.s32.totalorder %s236, 15
          %s238 = scalar_select %p237, %s236, 15
          %s239 = smul.addr %s238, 4
          %s240 = scalar_lea.vmem %s0, %s239
          %s241 = smul.u32 8, %s18
        $region44: #{tpu_custom_call.1} parent=39 // pred_fallthru
          _
      $region40: #{tpu_custom_call.1} parent=5 // pred_fallthru
        _
      %p242 = scmp.le.s32.totalorder 1, %s18
      %p243 = scmp.lt.s32.totalorder %s18, 3
      %p244 = pnand %p242, %p243
      %p245 = pneg %p244
      // Predicated region
      $region45: #{tpu_custom_call.1} parent=5 // pred_check
        _
      $region46: #{tpu_custom_call.1} parent=5 // pred_check_branch
        %247 = sbr.rel (%p244) target = $region48
      $region47: #{tpu_custom_call.1} parent=5 // pred_region
        %s248 = ssub.s32 %s18, 1
        %s249 = smul.u32 8, %s23
        %p250 = scmp.lt.s32.totalorder %s249, 15
        %s251 = scalar_select %p250, %s249, 15
        %s252 = smul.addr %s251, 4
        %s253 = scalar_lea.vmem %s0, %s252
        %p254 = pneg %p44
        %p255 = pneg %p41
        %p256 = pneg %p65
        %p257 = pneg %p62
        %p258 = pneg %p86
        %p259 = pneg %p83
        %p260 = pneg %p107
        %p261 = pneg %p104
        %p262 = pneg %p128
        %p263 = pneg %p125
        %p264 = pneg %p149
        %p265 = pneg %p146
        %p266 = pneg %p170
        %p267 = pneg %p167
        %p268 = pneg %p196
        %p269 = pneg %p193
        %s270 = sand.u32 %s183, 1
        %s271 = scalar_lea.sflag [#allocation4], %s270
        %s272 = sand.u32 %s183, 1
        %s273 = smul.addr %s272, 8
        %s274 = scalar_lea.vmem [#allocation3], %s273
        %s275 = smul.u32 8, %s23
        %p276 = scmp.lt.s32.totalorder %s275, 15
        %s277 = scalar_select %p276, %s275, 15
        %s278 = smul.addr %s277, 4
        %s279 = scalar_lea.vmem %s0, %s278
        %s280 = smul.u32 8, %s23
        %s281 = smul.u32 8, %s23
        %v283 = vld [vmem:[%s279] sm:$0x77]
        %v284 = vld [vmem:[%s279 + $0x8] sm:$0x77]
        %v285 = vld [vmem:[%s279 + $0x10] sm:$0x77]
        %v286 = vld [vmem:[%s279 + $0x18] sm:$0x77]
        %v287 = vld [vmem:[%s1] sm:$0xf]
        %v288 = vld [vmem:[%s1 + $0x4] sm:$0xf]
        %v289 = vld [vmem:[%s1 + $0x8] sm:$0xf]
        %v290 = vld [vmem:[%s1 + $0xc] sm:$0xf]
        %v295 = vcombine.high %v283, %v283
        %v296 = vcombine.high %v284, %v284
        %v297 = vcombine.high %v285, %v285
        %v298 = vcombine.high %v286, %v286
        %v303 = vpack.c.bf16 %v283, %v283
        %v304 = vpack.c.bf16 %v295, %v295
        %v305 = vpack.c.bf16 %v284, %v284
        %v306 = vpack.c.bf16 %v296, %v296
        %v307 = vpack.c.bf16 %v285, %v285
        %v308 = vpack.c.bf16 %v297, %v297
        %v309 = vpack.c.bf16 %v286, %v286
        %v310 = vpack.c.bf16 %v298, %v298
        %v311 = vand.u32 2147483647, %v283
        %vm312 = vcmp.le.f32.partialorder %v311, 0.7853982
        %vm313 = vcmp.lt.s32.totalorder %v283, 0
        %v314 = vand.u32 %v283, 2139095040
        %v315 = vshrl.u32 %v314, 23
        %v316 = vsub.s32 %v315, 127
        %v317 = vand.u32 2147483647, %v283
        %v318 = vand.u32 %v317, 8388607
        %v319 = vor.u32 %v318, 8388608
        %v320 = vsub.s32 0, %v319
        %v321 = vadd.s32 %v316, 1
        %vm322 = vcmp.gt.s32.totalorder %v321, 0
        %v323 = vsel %vm322, %v321, 0
        %v324 = vshrl.u32 %v323, 5
        %v325 = vand.u32 %v323, 31
        %v326 = vsub.s32 32, %v325
        %v327 = vshrl.u32 683565275, %v326
        %v328 = vshll.u32 683565275, %v325
        %v329 = vshrl.u32 2475754826, %v326
        %v330 = vor.u32 %v328, %v329
        %v331 = vshll.u32 2475754826, %v325
        %v332 = vshrl.u32 2131351028, %v326
        %v333 = vor.u32 %v331, %v332
        %v334 = vshll.u32 2131351028, %v325
        %v335 = vshrl.u32 2102212464, %v326
        %v336 = vor.u32 %v334, %v335
        %v337 = vshll.u32 2102212464, %v325
        %v338 = vshrl.u32 920167782, %v326
        %v339 = vor.u32 %v337, %v338
        %v340 = vshll.u32 920167782, %v325
        %v341 = vshrl.u32 1326507024, %v326
        %v342 = vor.u32 %v340, %v341
        %vm343 = vcmp.lt.s32.totalorder %v324, 1
        %vm344 = vcmp.lt.s32.totalorder %v324, 2
        %vm345 = vcmp.lt.s32.totalorder %v324, 3
        %vm346 = vcmp.lt.s32.totalorder %v324, 4
        %v347 = vsel %vm343, %v327, %v330
        %v348 = vsel %vm346, %v336, 2102212464
        %v349 = vsel %vm345, %v333, %v348
        %v350 = vsel %vm344, %v347, %v349
        %v351 = vsel %vm343, %v330, %v333
        %v352 = vsel %vm346, %v339, 920167782
        %v353 = vsel %vm345, %v336, %v352
        %v354 = vsel %vm344, %v351, %v353
        %v355 = vsel %vm343, %v333, %v336
        %v356 = vsel %vm346, %v342, 1326507024
        %v357 = vsel %vm345, %v339, %v356
        %v358 = vsel %vm344, %v355, %v357
        %v359 = vshll.u32 %v319, 8
        %v360 = vmul.u32.u64.compose %v359, %v358
        %v361 = vextract.low.u32 %v360
        %v362 = vextract.high.u32 %v360
        %v363 = vmul.u32.u64.compose %v359, %v354
        %v364 = vextract.low.u32 %v363
        %v365 = vextract.high.u32 %v363
        %v366 = vmul.u32 %v359, %v350
        %v367 = vadd.s32 %v362, %v364
        %vm368 = vc.u32 %v362, %v364
        %v369 = vadd.s32 %v365, 1
        %v370 = vsel %vm368, %v369, %v365
        %v371 = vadd.s32 %v366, %v370
        %v372 = vadd.s32 %v371, 536870912
        %v373 = vshrl.u32 %v372, 30
        %v374 = vshll.u32 %v373, 30
        %v375 = vsub.s32 %v371, %v374
        %vm376 = vcmp.lt.s32.totalorder %v375, 0
        %v377 = vsub.s32 0, %v375
        %v378 = vsel %vm376, %v377, %v375
        %v379 = vclz %v378
        %v380 = vsub.s32 %v379, 2
        %vm381 = vcmp.gt.s32.totalorder 0, %v380
        %v382 = vsel %vm381, 0, %v380
        %v383 = vsub.s32 32, %v382
        %v384 = vshll.u32 %v375, %v382
        %v385 = vshrl.u32 %v367, %v383
        %v386 = vor.u32 %v384, %v385
        %v387 = vsub.s32 4294967266, %v382
        %v388 = vadd.s32 %v387, 127
        %v389 = vshll.u32 %v388, 23
        %v390 = vor.u32 4788187, %v389
        %v391 = vand.u32 2147483647, %v390
        %v393 = vcvt.s32.f32 %v386
        %v394 = vmul.f32 %v393, %v391
        %v395 = vxor.u32 %v394, 2147483648
        %v396 = vsel %vm313, %v395, %v394
        %v397 = vsub.s32 4, %v373
        %v398 = vsel %vm313, %v397, %v373
        %v399 = vsel %vm312, %v283, %v396
        %v400 = vsel %vm312, 0, %v398
        %v401 = vcosq.f32.pop %v399
        %v402 = vsinq.f32.pop %v399
        %vm403 = vweird.f32 %v283
        %v404 = vadd.s32 %v400, 3
        %v405 = vand.u32 %v404, 3
        %vm406 = vcmp.lt.s32.totalorder %v405, 2
        %vm407 = vcmp.eq.s32.totalorder %v405, 0
        %v408 = vxor.u32 %v402, 2147483648
        %v409 = vsel %vm407, %v401, %v408
        %vm410 = vcmp.eq.s32.totalorder %v405, 2
        %v411 = vxor.u32 %v401, 2147483648
        %v412 = vsel %vm410, %v411, %v402
        %v413 = vsel %vm406, %v409, %v412
        %v414 = vsel %vm403, nan, %v413
        %v415 = vand.u32 2147483647, %v284
        %vm416 = vcmp.le.f32.partialorder %v415, 0.7853982
        %vm417 = vcmp.lt.s32.totalorder %v284, 0
        %v418 = vand.u32 %v284, 2139095040
        %v419 = vshrl.u32 %v418, 23
        %v420 = vsub.s32 %v419, 127
        %v421 = vand.u32 2147483647, %v284
        %v422 = vand.u32 %v421, 8388607
        %v423 = vor.u32 %v422, 8388608
        %v424 = vsub.s32 0, %v423
        %v425 = vadd.s32 %v420, 1
        %vm426 = vcmp.gt.s32.totalorder %v425, 0
        %v427 = vsel %vm426, %v425, 0
        %v428 = vshrl.u32 %v427, 5
        %v429 = vand.u32 %v427, 31
        %v430 = vsub.s32 32, %v429
        %v431 = vshrl.u32 683565275, %v430
        %v432 = vshll.u32 683565275, %v429
        %v433 = vshrl.u32 2475754826, %v430
        %v434 = vor.u32 %v432, %v433
        %v435 = vshll.u32 2475754826, %v429
        %v436 = vshrl.u32 2131351028, %v430
        %v437 = vor.u32 %v435, %v436
        %v438 = vshll.u32 2131351028, %v429
        %v439 = vshrl.u32 2102212464, %v430
        %v440 = vor.u32 %v438, %v439
        %v441 = vshll.u32 2102212464, %v429
        %v442 = vshrl.u32 920167782, %v430
        %v443 = vor.u32 %v441, %v442
        %v444 = vshll.u32 920167782, %v429
        %v445 = vshrl.u32 1326507024, %v430
        %v446 = vor.u32 %v444, %v445
        %vm447 = vcmp.lt.s32.totalorder %v428, 1
        %vm448 = vcmp.lt.s32.totalorder %v428, 2
        %vm449 = vcmp.lt.s32.totalorder %v428, 3
        %vm450 = vcmp.lt.s32.totalorder %v428, 4
        %v451 = vsel %vm447, %v431, %v434
        %v452 = vsel %vm450, %v440, 2102212464
        %v453 = vsel %vm449, %v437, %v452
        %v454 = vsel %vm448, %v451, %v453
        %v455 = vsel %vm447, %v434, %v437
        %v456 = vsel %vm450, %v443, 920167782
        %v457 = vsel %vm449, %v440, %v456
        %v458 = vsel %vm448, %v455, %v457
        %v459 = vsel %vm447, %v437, %v440
        %v460 = vsel %vm450, %v446, 1326507024
        %v461 = vsel %vm449, %v443, %v460
        %v462 = vsel %vm448, %v459, %v461
        %v463 = vshll.u32 %v423, 8
        %v464 = vmul.u32.u64.compose %v463, %v462
        %v465 = vextract.low.u32 %v464
        %v466 = vextract.high.u32 %v464
        %v467 = vmul.u32.u64.compose %v463, %v458
        %v468 = vextract.low.u32 %v467
        %v469 = vextract.high.u32 %v467
        %v470 = vmul.u32 %v463, %v454
        %v471 = vadd.s32 %v466, %v468
        %vm472 = vc.u32 %v466, %v468
        %v473 = vadd.s32 %v469, 1
        %v474 = vsel %vm472, %v473, %v469
        %v475 = vadd.s32 %v470, %v474
        %v476 = vadd.s32 %v475, 536870912
        %v477 = vshrl.u32 %v476, 30
        %v478 = vshll.u32 %v477, 30
        %v479 = vsub.s32 %v475, %v478
        %vm480 = vcmp.lt.s32.totalorder %v479, 0
        %v481 = vsub.s32 0, %v479
        %v482 = vsel %vm480, %v481, %v479
        %v483 = vclz %v482
        %v484 = vsub.s32 %v483, 2
        %vm485 = vcmp.gt.s32.totalorder 0, %v484
        %v486 = vsel %vm485, 0, %v484
        %v487 = vsub.s32 32, %v486
        %v488 = vshll.u32 %v479, %v486
        %v489 = vshrl.u32 %v471, %v487
        %v490 = vor.u32 %v488, %v489
        %v491 = vsub.s32 4294967266, %v486
        %v492 = vadd.s32 %v491, 127
        %v493 = vshll.u32 %v492, 23
        %v494 = vor.u32 4788187, %v493
        %v495 = vand.u32 2147483647, %v494
        %v497 = vcvt.s32.f32 %v490
        %v498 = vmul.f32 %v497, %v495
        %v499 = vxor.u32 %v498, 2147483648
        %v500 = vsel %vm417, %v499, %v498
        %v501 = vsub.s32 4, %v477
        %v502 = vsel %vm417, %v501, %v477
        %v503 = vsel %vm416, %v284, %v500
        %v504 = vsel %vm416, 0, %v502
        %v505 = vcosq.f32.pop %v503
        %v506 = vsinq.f32.pop %v503
        %vm507 = vweird.f32 %v284
        %v508 = vadd.s32 %v504, 3
        %v509 = vand.u32 %v508, 3
        %vm510 = vcmp.lt.s32.totalorder %v509, 2
        %vm511 = vcmp.eq.s32.totalorder %v509, 0
        %v512 = vxor.u32 %v506, 2147483648
        %v513 = vsel %vm511, %v505, %v512
        %vm514 = vcmp.eq.s32.totalorder %v509, 2
        %v515 = vxor.u32 %v505, 2147483648
        %v516 = vsel %vm514, %v515, %v506
        %v517 = vsel %vm510, %v513, %v516
        %v518 = vsel %vm507, nan, %v517
        %v519 = vand.u32 2147483647, %v285
        %vm520 = vcmp.le.f32.partialorder %v519, 0.7853982
        %vm521 = vcmp.lt.s32.totalorder %v285, 0
        %v522 = vand.u32 %v285, 2139095040
        %v523 = vshrl.u32 %v522, 23
        %v524 = vsub.s32 %v523, 127
        %v525 = vand.u32 2147483647, %v285
        %v526 = vand.u32 %v525, 8388607
        %v527 = vor.u32 %v526, 8388608
        %v528 = vsub.s32 0, %v527
        %v529 = vadd.s32 %v524, 1
        %vm530 = vcmp.gt.s32.totalorder %v529, 0
        %v531 = vsel %vm530, %v529, 0
        %v532 = vshrl.u32 %v531, 5
        %v533 = vand.u32 %v531, 31
        %v534 = vsub.s32 32, %v533
        %v535 = vshrl.u32 683565275, %v534
        %v536 = vshll.u32 683565275, %v533
        %v537 = vshrl.u32 2475754826, %v534
        %v538 = vor.u32 %v536, %v537
        %v539 = vshll.u32 2475754826, %v533
        %v540 = vshrl.u32 2131351028, %v534
        %v541 = vor.u32 %v539, %v540
        %v542 = vshll.u32 2131351028, %v533
        %v543 = vshrl.u32 2102212464, %v534
        %v544 = vor.u32 %v542, %v543
        %v545 = vshll.u32 2102212464, %v533
        %v546 = vshrl.u32 920167782, %v534
        %v547 = vor.u32 %v545, %v546
        %v548 = vshll.u32 920167782, %v533
        %v549 = vshrl.u32 1326507024, %v534
        %v550 = vor.u32 %v548, %v549
        %vm551 = vcmp.lt.s32.totalorder %v532, 1
        %vm552 = vcmp.lt.s32.totalorder %v532, 2
        %vm553 = vcmp.lt.s32.totalorder %v532, 3
        %vm554 = vcmp.lt.s32.totalorder %v532, 4
        %v555 = vsel %vm551, %v535, %v538
        %v556 = vsel %vm554, %v544, 2102212464
        %v557 = vsel %vm553, %v541, %v556
        %v558 = vsel %vm552, %v555, %v557
        %v559 = vsel %vm551, %v538, %v541
        %v560 = vsel %vm554, %v547, 920167782
        %v561 = vsel %vm553, %v544, %v560
        %v562 = vsel %vm552, %v559, %v561
        %v563 = vsel %vm551, %v541, %v544
        %v564 = vsel %vm554, %v550, 1326507024
        %v565 = vsel %vm553, %v547, %v564
        %v566 = vsel %vm552, %v563, %v565
        %v567 = vshll.u32 %v527, 8
        %v568 = vmul.u32.u64.compose %v567, %v566
        %v569 = vextract.low.u32 %v568
        %v570 = vextract.high.u32 %v568
        %v571 = vmul.u32.u64.compose %v567, %v562
        %v572 = vextract.low.u32 %v571
        %v573 = vextract.high.u32 %v571
        %v574 = vmul.u32 %v567, %v558
        %v575 = vadd.s32 %v570, %v572
        %vm576 = vc.u32 %v570, %v572
        %v577 = vadd.s32 %v573, 1
        %v578 = vsel %vm576, %v577, %v573
        %v579 = vadd.s32 %v574, %v578
        %v580 = vadd.s32 %v579, 536870912
        %v581 = vshrl.u32 %v580, 30
        %v582 = vshll.u32 %v581, 30
        %v583 = vsub.s32 %v579, %v582
        %vm584 = vcmp.lt.s32.totalorder %v583, 0
        %v585 = vsub.s32 0, %v583
        %v586 = vsel %vm584, %v585, %v583
        %v587 = vclz %v586
        %v588 = vsub.s32 %v587, 2
        %vm589 = vcmp.gt.s32.totalorder 0, %v588
        %v590 = vsel %vm589, 0, %v588
        %v591 = vsub.s32 32, %v590
        %v592 = vshll.u32 %v583, %v590
        %v593 = vshrl.u32 %v575, %v591
        %v594 = vor.u32 %v592, %v593
        %v595 = vsub.s32 4294967266, %v590
        %v596 = vadd.s32 %v595, 127
        %v597 = vshll.u32 %v596, 23
        %v598 = vor.u32 4788187, %v597
        %v599 = vand.u32 2147483647, %v598
        %v601 = vcvt.s32.f32 %v594
        %v602 = vmul.f32 %v601, %v599
        %v603 = vxor.u32 %v602, 2147483648
        %v604 = vsel %vm521, %v603, %v602
        %v605 = vsub.s32 4, %v581
        %v606 = vsel %vm521, %v605, %v581
        %v607 = vsel %vm520, %v285, %v604
        %v608 = vsel %vm520, 0, %v606
        %v609 = vcosq.f32.pop %v607
        %v610 = vsinq.f32.pop %v607
        %vm611 = vweird.f32 %v285
        %v612 = vadd.s32 %v608, 3
        %v613 = vand.u32 %v612, 3
        %vm614 = vcmp.lt.s32.totalorder %v613, 2
        %vm615 = vcmp.eq.s32.totalorder %v613, 0
        %v616 = vxor.u32 %v610, 2147483648
        %v617 = vsel %vm615, %v609, %v616
        %vm618 = vcmp.eq.s32.totalorder %v613, 2
        %v619 = vxor.u32 %v609, 2147483648
        %v620 = vsel %vm618, %v619, %v610
        %v621 = vsel %vm614, %v617, %v620
        %v622 = vsel %vm611, nan, %v621
        %v623 = vand.u32 2147483647, %v286
        %vm624 = vcmp.le.f32.partialorder %v623, 0.7853982
        %vm625 = vcmp.lt.s32.totalorder %v286, 0
        %v626 = vand.u32 %v286, 2139095040
        %v627 = vshrl.u32 %v626, 23
        %v628 = vsub.s32 %v627, 127
        %v629 = vand.u32 2147483647, %v286
        %v630 = vand.u32 %v629, 8388607
        %v631 = vor.u32 %v630, 8388608
        %v632 = vsub.s32 0, %v631
        %v633 = vadd.s32 %v628, 1
        %vm634 = vcmp.gt.s32.totalorder %v633, 0
        %v635 = vsel %vm634, %v633, 0
        %v636 = vshrl.u32 %v635, 5
        %v637 = vand.u32 %v635, 31
        %v638 = vsub.s32 32, %v637
        %v639 = vshrl.u32 683565275, %v638
        %v640 = vshll.u32 683565275, %v637
        %v641 = vshrl.u32 2475754826, %v638
        %v642 = vor.u32 %v640, %v641
        %v643 = vshll.u32 2475754826, %v637
        %v644 = vshrl.u32 2131351028, %v638
        %v645 = vor.u32 %v643, %v644
        %v646 = vshll.u32 2131351028, %v637
        %v647 = vshrl.u32 2102212464, %v638
        %v648 = vor.u32 %v646, %v647
        %v649 = vshll.u32 2102212464, %v637
        %v650 = vshrl.u32 920167782, %v638
        %v651 = vor.u32 %v649, %v650
        %v652 = vshll.u32 920167782, %v637
        %v653 = vshrl.u32 1326507024, %v638
        %v654 = vor.u32 %v652, %v653
        %vm655 = vcmp.lt.s32.totalorder %v636, 1
        %vm656 = vcmp.lt.s32.totalorder %v636, 2
        %vm657 = vcmp.lt.s32.totalorder %v636, 3
        %vm658 = vcmp.lt.s32.totalorder %v636, 4
        %v659 = vsel %vm655, %v639, %v642
        %v660 = vsel %vm658, %v648, 2102212464
        %v661 = vsel %vm657, %v645, %v660
        %v662 = vsel %vm656, %v659, %v661
        %v663 = vsel %vm655, %v642, %v645
        %v664 = vsel %vm658, %v651, 920167782
        %v665 = vsel %vm657, %v648, %v664
        %v666 = vsel %vm656, %v663, %v665
        %v667 = vsel %vm655, %v645, %v648
        %v668 = vsel %vm658, %v654, 1326507024
        %v669 = vsel %vm657, %v651, %v668
        %v670 = vsel %vm656, %v667, %v669
        %v671 = vshll.u32 %v631, 8
        %v672 = vmul.u32.u64.compose %v671, %v670
        %v673 = vextract.low.u32 %v672
        %v674 = vextract.high.u32 %v672
        %v675 = vmul.u32.u64.compose %v671, %v666
        %v676 = vextract.low.u32 %v675
        %v677 = vextract.high.u32 %v675
        %v678 = vmul.u32 %v671, %v662
        %v679 = vadd.s32 %v674, %v676
        %vm680 = vc.u32 %v674, %v676
        %v681 = vadd.s32 %v677, 1
        %v682 = vsel %vm680, %v681, %v677
        %v683 = vadd.s32 %v678, %v682
        %v684 = vadd.s32 %v683, 536870912
        %v685 = vshrl.u32 %v684, 30
        %v686 = vshll.u32 %v685, 30
        %v687 = vsub.s32 %v683, %v686
        %vm688 = vcmp.lt.s32.totalorder %v687, 0
        %v689 = vsub.s32 0, %v687
        %v690 = vsel %vm688, %v689, %v687
        %v691 = vclz %v690
        %v692 = vsub.s32 %v691, 2
        %vm693 = vcmp.gt.s32.totalorder 0, %v692
        %v694 = vsel %vm693, 0, %v692
        %v695 = vsub.s32 32, %v694
        %v696 = vshll.u32 %v687, %v694
        %v697 = vshrl.u32 %v679, %v695
        %v698 = vor.u32 %v696, %v697
        %v699 = vsub.s32 4294967266, %v694
        %v700 = vadd.s32 %v699, 127
        %v701 = vshll.u32 %v700, 23
        %v702 = vor.u32 4788187, %v701
        %v703 = vand.u32 2147483647, %v702
        %v705 = vcvt.s32.f32 %v698
        %v706 = vmul.f32 %v705, %v703
        %v707 = vxor.u32 %v706, 2147483648
        %v708 = vsel %vm625, %v707, %v706
        %v709 = vsub.s32 4, %v685
        %v710 = vsel %vm625, %v709, %v685
        %v711 = vsel %vm624, %v286, %v708
        %v712 = vsel %vm624, 0, %v710
        %v713 = vcosq.f32.pop %v711
        %v714 = vsinq.f32.pop %v711
        %vm715 = vweird.f32 %v286
        %v716 = vadd.s32 %v712, 3
        %v717 = vand.u32 %v716, 3
        %vm718 = vcmp.lt.s32.totalorder %v717, 2
        %vm719 = vcmp.eq.s32.totalorder %v717, 0
        %v720 = vxor.u32 %v714, 2147483648
        %v721 = vsel %vm719, %v713, %v720
        %vm722 = vcmp.eq.s32.totalorder %v717, 2
        %v723 = vxor.u32 %v713, 2147483648
        %v724 = vsel %vm722, %v723, %v714
        %v725 = vsel %vm718, %v721, %v724
        %v726 = vsel %vm715, nan, %v725
        %v727 = vand.u32 2147483647, %v283
        %vm728 = vcmp.le.f32.partialorder %v727, 0.7853982
        %vm729 = vcmp.lt.s32.totalorder %v283, 0
        %v730 = vand.u32 %v283, 2139095040
        %v731 = vshrl.u32 %v730, 23
        %v732 = vsub.s32 %v731, 127
        %v733 = vand.u32 2147483647, %v283
        %v734 = vand.u32 %v733, 8388607
        %v735 = vor.u32 %v734, 8388608
        %v736 = vsub.s32 0, %v735
        %v737 = vadd.s32 %v732, 1
        %vm738 = vcmp.gt.s32.totalorder %v737, 0
        %v739 = vsel %vm738, %v737, 0
        %v740 = vshrl.u32 %v739, 5
        %v741 = vand.u32 %v739, 31
        %v742 = vsub.s32 32, %v741
        %v743 = vshrl.u32 683565275, %v742
        %v744 = vshll.u32 683565275, %v741
        %v745 = vshrl.u32 2475754826, %v742
        %v746 = vor.u32 %v744, %v745
        %v747 = vshll.u32 2475754826, %v741
        %v748 = vshrl.u32 2131351028, %v742
        %v749 = vor.u32 %v747, %v748
        %v750 = vshll.u32 2131351028, %v741
        %v751 = vshrl.u32 2102212464, %v742
        %v752 = vor.u32 %v750, %v751
        %v753 = vshll.u32 2102212464, %v741
        %v754 = vshrl.u32 920167782, %v742
        %v755 = vor.u32 %v753, %v754
        %v756 = vshll.u32 920167782, %v741
        %v757 = vshrl.u32 1326507024, %v742
        %v758 = vor.u32 %v756, %v757
        %vm759 = vcmp.lt.s32.totalorder %v740, 1
        %vm760 = vcmp.lt.s32.totalorder %v740, 2
        %vm761 = vcmp.lt.s32.totalorder %v740, 3
        %vm762 = vcmp.lt.s32.totalorder %v740, 4
        %v763 = vsel %vm759, %v743, %v746
        %v764 = vsel %vm762, %v752, 2102212464
        %v765 = vsel %vm761, %v749, %v764
        %v766 = vsel %vm760, %v763, %v765
        %v767 = vsel %vm759, %v746, %v749
        %v768 = vsel %vm762, %v755, 920167782
        %v769 = vsel %vm761, %v752, %v768
        %v770 = vsel %vm760, %v767, %v769
        %v771 = vsel %vm759, %v749, %v752
        %v772 = vsel %vm762, %v758, 1326507024
        %v773 = vsel %vm761, %v755, %v772
        %v774 = vsel %vm760, %v771, %v773
        %v775 = vshll.u32 %v735, 8
        %v776 = vmul.u32.u64.compose %v775, %v774
        %v777 = vextract.low.u32 %v776
        %v778 = vextract.high.u32 %v776
        %v779 = vmul.u32.u64.compose %v775, %v770
        %v780 = vextract.low.u32 %v779
        %v781 = vextract.high.u32 %v779
        %v782 = vmul.u32 %v775, %v766
        %v783 = vadd.s32 %v778, %v780
        %vm784 = vc.u32 %v778, %v780
        %v785 = vadd.s32 %v781, 1
        %v786 = vsel %vm784, %v785, %v781
        %v787 = vadd.s32 %v782, %v786
        %v788 = vadd.s32 %v787, 536870912
        %v789 = vshrl.u32 %v788, 30
        %v790 = vshll.u32 %v789, 30
        %v791 = vsub.s32 %v787, %v790
        %vm792 = vcmp.lt.s32.totalorder %v791, 0
        %v793 = vsub.s32 0, %v791
        %v794 = vsel %vm792, %v793, %v791
        %v795 = vclz %v794
        %v796 = vsub.s32 %v795, 2
        %vm797 = vcmp.gt.s32.totalorder 0, %v796
        %v798 = vsel %vm797, 0, %v796
        %v799 = vsub.s32 32, %v798
        %v800 = vshll.u32 %v791, %v798
        %v801 = vshrl.u32 %v783, %v799
        %v802 = vor.u32 %v800, %v801
        %v803 = vsub.s32 4294967266, %v798
        %v804 = vadd.s32 %v803, 127
        %v805 = vshll.u32 %v804, 23
        %v806 = vor.u32 4788187, %v805
        %v807 = vand.u32 2147483647, %v806
        %v809 = vcvt.s32.f32 %v802
        %v810 = vmul.f32 %v809, %v807
        %v811 = vxor.u32 %v810, 2147483648
        %v812 = vsel %vm729, %v811, %v810
        %v813 = vsub.s32 4, %v789
        %v814 = vsel %vm729, %v813, %v789
        %v815 = vsel %vm728, %v283, %v812
        %v816 = vsel %vm728, 0, %v814
        %v817 = vcosq.f32.pop %v815
        %v818 = vsinq.f32.pop %v815
        %vm819 = vweird.f32 %v283
        %v820 = vand.u32 %v816, 3
        %vm821 = vcmp.lt.s32.totalorder %v820, 2
        %vm822 = vcmp.eq.s32.totalorder %v820, 0
        %v823 = vxor.u32 %v818, 2147483648
        %v824 = vsel %vm822, %v817, %v823
        %vm825 = vcmp.eq.s32.totalorder %v820, 2
        %v826 = vxor.u32 %v817, 2147483648
        %v827 = vsel %vm825, %v826, %v818
        %v828 = vsel %vm821, %v824, %v827
        %v829 = vsel %vm819, nan, %v828
        %v830 = vand.u32 2147483647, %v284
        %vm831 = vcmp.le.f32.partialorder %v830, 0.7853982
        %vm832 = vcmp.lt.s32.totalorder %v284, 0
        %v833 = vand.u32 %v284, 2139095040
        %v834 = vshrl.u32 %v833, 23
        %v835 = vsub.s32 %v834, 127
        %v836 = vand.u32 2147483647, %v284
        %v837 = vand.u32 %v836, 8388607
        %v838 = vor.u32 %v837, 8388608
        %v839 = vsub.s32 0, %v838
        %v840 = vadd.s32 %v835, 1
        %vm841 = vcmp.gt.s32.totalorder %v840, 0
        %v842 = vsel %vm841, %v840, 0
        %v843 = vshrl.u32 %v842, 5
        %v844 = vand.u32 %v842, 31
        %v845 = vsub.s32 32, %v844
        %v846 = vshrl.u32 683565275, %v845
        %v847 = vshll.u32 683565275, %v844
        %v848 = vshrl.u32 2475754826, %v845
        %v849 = vor.u32 %v847, %v848
        %v850 = vshll.u32 2475754826, %v844
        %v851 = vshrl.u32 2131351028, %v845
        %v852 = vor.u32 %v850, %v851
        %v853 = vshll.u32 2131351028, %v844
        %v854 = vshrl.u32 2102212464, %v845
        %v855 = vor.u32 %v853, %v854
        %v856 = vshll.u32 2102212464, %v844
        %v857 = vshrl.u32 920167782, %v845
        %v858 = vor.u32 %v856, %v857
        %v859 = vshll.u32 920167782, %v844
        %v860 = vshrl.u32 1326507024, %v845
        %v861 = vor.u32 %v859, %v860
        %vm862 = vcmp.lt.s32.totalorder %v843, 1
        %vm863 = vcmp.lt.s32.totalorder %v843, 2
        %vm864 = vcmp.lt.s32.totalorder %v843, 3
        %vm865 = vcmp.lt.s32.totalorder %v843, 4
        %v866 = vsel %vm862, %v846, %v849
        %v867 = vsel %vm865, %v855, 2102212464
        %v868 = vsel %vm864, %v852, %v867
        %v869 = vsel %vm863, %v866, %v868
        %v870 = vsel %vm862, %v849, %v852
        %v871 = vsel %vm865, %v858, 920167782
        %v872 = vsel %vm864, %v855, %v871
        %v873 = vsel %vm863, %v870, %v872
        %v874 = vsel %vm862, %v852, %v855
        %v875 = vsel %vm865, %v861, 1326507024
        %v876 = vsel %vm864, %v858, %v875
        %v877 = vsel %vm863, %v874, %v876
        %v878 = vshll.u32 %v838, 8
        %v879 = vmul.u32.u64.compose %v878, %v877
        %v880 = vextract.low.u32 %v879
        %v881 = vextract.high.u32 %v879
        %v882 = vmul.u32.u64.compose %v878, %v873
        %v883 = vextract.low.u32 %v882
        %v884 = vextract.high.u32 %v882
        %v885 = vmul.u32 %v878, %v869
        %v886 = vadd.s32 %v881, %v883
        %vm887 = vc.u32 %v881, %v883
        %v888 = vadd.s32 %v884, 1
        %v889 = vsel %vm887, %v888, %v884
        %v890 = vadd.s32 %v885, %v889
        %v891 = vadd.s32 %v890, 536870912
        %v892 = vshrl.u32 %v891, 30
        %v893 = vshll.u32 %v892, 30
        %v894 = vsub.s32 %v890, %v893
        %vm895 = vcmp.lt.s32.totalorder %v894, 0
        %v896 = vsub.s32 0, %v894
        %v897 = vsel %vm895, %v896, %v894
        %v898 = vclz %v897
        %v899 = vsub.s32 %v898, 2
        %vm900 = vcmp.gt.s32.totalorder 0, %v899
        %v901 = vsel %vm900, 0, %v899
        %v902 = vsub.s32 32, %v901
        %v903 = vshll.u32 %v894, %v901
        %v904 = vshrl.u32 %v886, %v902
        %v905 = vor.u32 %v903, %v904
        %v906 = vsub.s32 4294967266, %v901
        %v907 = vadd.s32 %v906, 127
        %v908 = vshll.u32 %v907, 23
        %v909 = vor.u32 4788187, %v908
        %v910 = vand.u32 2147483647, %v909
        %v912 = vcvt.s32.f32 %v905
        %v913 = vmul.f32 %v912, %v910
        %v914 = vxor.u32 %v913, 2147483648
        %v915 = vsel %vm832, %v914, %v913
        %v916 = vsub.s32 4, %v892
        %v917 = vsel %vm832, %v916, %v892
        %v918 = vsel %vm831, %v284, %v915
        %v919 = vsel %vm831, 0, %v917
        %v920 = vcosq.f32.pop %v918
        %v921 = vsinq.f32.pop %v918
        %vm922 = vweird.f32 %v284
        %v923 = vand.u32 %v919, 3
        %vm924 = vcmp.lt.s32.totalorder %v923, 2
        %vm925 = vcmp.eq.s32.totalorder %v923, 0
        %v926 = vxor.u32 %v921, 2147483648
        %v927 = vsel %vm925, %v920, %v926
        %vm928 = vcmp.eq.s32.totalorder %v923, 2
        %v929 = vxor.u32 %v920, 2147483648
        %v930 = vsel %vm928, %v929, %v921
        %v931 = vsel %vm924, %v927, %v930
        %v932 = vsel %vm922, nan, %v931
        %v933 = vand.u32 2147483647, %v285
        %vm934 = vcmp.le.f32.partialorder %v933, 0.7853982
        %vm935 = vcmp.lt.s32.totalorder %v285, 0
        %v936 = vand.u32 %v285, 2139095040
        %v937 = vshrl.u32 %v936, 23
        %v938 = vsub.s32 %v937, 127
        %v939 = vand.u32 2147483647, %v285
        %v940 = vand.u32 %v939, 8388607
        %v941 = vor.u32 %v940, 8388608
        %v942 = vsub.s32 0, %v941
        %v943 = vadd.s32 %v938, 1
        %vm944 = vcmp.gt.s32.totalorder %v943, 0
        %v945 = vsel %vm944, %v943, 0
        %v946 = vshrl.u32 %v945, 5
        %v947 = vand.u32 %v945, 31
        %v948 = vsub.s32 32, %v947
        %v949 = vshrl.u32 683565275, %v948
        %v950 = vshll.u32 683565275, %v947
        %v951 = vshrl.u32 2475754826, %v948
        %v952 = vor.u32 %v950, %v951
        %v953 = vshll.u32 2475754826, %v947
        %v954 = vshrl.u32 2131351028, %v948
        %v955 = vor.u32 %v953, %v954
        %v956 = vshll.u32 2131351028, %v947
        %v957 = vshrl.u32 2102212464, %v948
        %v958 = vor.u32 %v956, %v957
        %v959 = vshll.u32 2102212464, %v947
        %v960 = vshrl.u32 920167782, %v948
        %v961 = vor.u32 %v959, %v960
        %v962 = vshll.u32 920167782, %v947
        %v963 = vshrl.u32 1326507024, %v948
        %v964 = vor.u32 %v962, %v963
        %vm965 = vcmp.lt.s32.totalorder %v946, 1
        %vm966 = vcmp.lt.s32.totalorder %v946, 2
        %vm967 = vcmp.lt.s32.totalorder %v946, 3
        %vm968 = vcmp.lt.s32.totalorder %v946, 4
        %v969 = vsel %vm965, %v949, %v952
        %v970 = vsel %vm968, %v958, 2102212464
        %v971 = vsel %vm967, %v955, %v970
        %v972 = vsel %vm966, %v969, %v971
        %v973 = vsel %vm965, %v952, %v955
        %v974 = vsel %vm968, %v961, 920167782
        %v975 = vsel %vm967, %v958, %v974
        %v976 = vsel %vm966, %v973, %v975
        %v977 = vsel %vm965, %v955, %v958
        %v978 = vsel %vm968, %v964, 1326507024
        %v979 = vsel %vm967, %v961, %v978
        %v980 = vsel %vm966, %v977, %v979
        %v981 = vshll.u32 %v941, 8
        %v982 = vmul.u32.u64.compose %v981, %v980
        %v983 = vextract.low.u32 %v982
        %v984 = vextract.high.u32 %v982
        %v985 = vmul.u32.u64.compose %v981, %v976
        %v986 = vextract.low.u32 %v985
        %v987 = vextract.high.u32 %v985
        %v988 = vmul.u32 %v981, %v972
        %v989 = vadd.s32 %v984, %v986
        %vm990 = vc.u32 %v984, %v986
        %v991 = vadd.s32 %v987, 1
        %v992 = vsel %vm990, %v991, %v987
        %v993 = vadd.s32 %v988, %v992
        %v994 = vadd.s32 %v993, 536870912
        %v995 = vshrl.u32 %v994, 30
        %v996 = vshll.u32 %v995, 30
        %v997 = vsub.s32 %v993, %v996
        %vm998 = vcmp.lt.s32.totalorder %v997, 0
        %v999 = vsub.s32 0, %v997
        %v1000 = vsel %vm998, %v999, %v997
        %v1001 = vclz %v1000
        %v1002 = vsub.s32 %v1001, 2
        %vm1003 = vcmp.gt.s32.totalorder 0, %v1002
        %v1004 = vsel %vm1003, 0, %v1002
        %v1005 = vsub.s32 32, %v1004
        %v1006 = vshll.u32 %v997, %v1004
        %v1007 = vshrl.u32 %v989, %v1005
        %v1008 = vor.u32 %v1006, %v1007
        %v1009 = vsub.s32 4294967266, %v1004
        %v1010 = vadd.s32 %v1009, 127
        %v1011 = vshll.u32 %v1010, 23
        %v1012 = vor.u32 4788187, %v1011
        %v1013 = vand.u32 2147483647, %v1012
        %v1015 = vcvt.s32.f32 %v1008
        %v1016 = vmul.f32 %v1015, %v1013
        %v1017 = vxor.u32 %v1016, 2147483648
        %v1018 = vsel %vm935, %v1017, %v1016
        %v1019 = vsub.s32 4, %v995
        %v1020 = vsel %vm935, %v1019, %v995
        %v1021 = vsel %vm934, %v285, %v1018
        %v1022 = vsel %vm934, 0, %v1020
        %v1023 = vcosq.f32.pop %v1021
        %v1024 = vsinq.f32.pop %v1021
        %vm1025 = vweird.f32 %v285
        %v1026 = vand.u32 %v1022, 3
        %vm1027 = vcmp.lt.s32.totalorder %v1026, 2
        %vm1028 = vcmp.eq.s32.totalorder %v1026, 0
        %v1029 = vxor.u32 %v1024, 2147483648
        %v1030 = vsel %vm1028, %v1023, %v1029
        %vm1031 = vcmp.eq.s32.totalorder %v1026, 2
        %v1032 = vxor.u32 %v1023, 2147483648
        %v1033 = vsel %vm1031, %v1032, %v1024
        %v1034 = vsel %vm1027, %v1030, %v1033
        %v1035 = vsel %vm1025, nan, %v1034
        %v1036 = vand.u32 2147483647, %v286
        %vm1037 = vcmp.le.f32.partialorder %v1036, 0.7853982
        %vm1038 = vcmp.lt.s32.totalorder %v286, 0
        %v1039 = vand.u32 %v286, 2139095040
        %v1040 = vshrl.u32 %v1039, 23
        %v1041 = vsub.s32 %v1040, 127
        %v1042 = vand.u32 2147483647, %v286
        %v1043 = vand.u32 %v1042, 8388607
        %v1044 = vor.u32 %v1043, 8388608
        %v1045 = vsub.s32 0, %v1044
        %v1046 = vadd.s32 %v1041, 1
        %vm1047 = vcmp.gt.s32.totalorder %v1046, 0
        %v1048 = vsel %vm1047, %v1046, 0
        %v1049 = vshrl.u32 %v1048, 5
        %v1050 = vand.u32 %v1048, 31
        %v1051 = vsub.s32 32, %v1050
        %v1052 = vshrl.u32 683565275, %v1051
        %v1053 = vshll.u32 683565275, %v1050
        %v1054 = vshrl.u32 2475754826, %v1051
        %v1055 = vor.u32 %v1053, %v1054
        %v1056 = vshll.u32 2475754826, %v1050
        %v1057 = vshrl.u32 2131351028, %v1051
        %v1058 = vor.u32 %v1056, %v1057
        %v1059 = vshll.u32 2131351028, %v1050
        %v1060 = vshrl.u32 2102212464, %v1051
        %v1061 = vor.u32 %v1059, %v1060
        %v1062 = vshll.u32 2102212464, %v1050
        %v1063 = vshrl.u32 920167782, %v1051
        %v1064 = vor.u32 %v1062, %v1063
        %v1065 = vshll.u32 920167782, %v1050
        %v1066 = vshrl.u32 1326507024, %v1051
        %v1067 = vor.u32 %v1065, %v1066
        %vm1068 = vcmp.lt.s32.totalorder %v1049, 1
        %vm1069 = vcmp.lt.s32.totalorder %v1049, 2
        %vm1070 = vcmp.lt.s32.totalorder %v1049, 3
        %vm1071 = vcmp.lt.s32.totalorder %v1049, 4
        %v1072 = vsel %vm1068, %v1052, %v1055
        %v1073 = vsel %vm1071, %v1061, 2102212464
        %v1074 = vsel %vm1070, %v1058, %v1073
        %v1075 = vsel %vm1069, %v1072, %v1074
        %v1076 = vsel %vm1068, %v1055, %v1058
        %v1077 = vsel %vm1071, %v1064, 920167782
        %v1078 = vsel %vm1070, %v1061, %v1077
        %v1079 = vsel %vm1069, %v1076, %v1078
        %v1080 = vsel %vm1068, %v1058, %v1061
        %v1081 = vsel %vm1071, %v1067, 1326507024
        %v1082 = vsel %vm1070, %v1064, %v1081
        %v1083 = vsel %vm1069, %v1080, %v1082
        %v1084 = vshll.u32 %v1044, 8
        %v1085 = vmul.u32.u64.compose %v1084, %v1083
        %v1086 = vextract.low.u32 %v1085
        %v1087 = vextract.high.u32 %v1085
        %v1088 = vmul.u32.u64.compose %v1084, %v1079
        %v1089 = vextract.low.u32 %v1088
        %v1090 = vextract.high.u32 %v1088
        %v1091 = vmul.u32 %v1084, %v1075
        %v1092 = vadd.s32 %v1087, %v1089
        %vm1093 = vc.u32 %v1087, %v1089
        %v1094 = vadd.s32 %v1090, 1
        %v1095 = vsel %vm1093, %v1094, %v1090
        %v1096 = vadd.s32 %v1091, %v1095
        %v1097 = vadd.s32 %v1096, 536870912
        %v1098 = vshrl.u32 %v1097, 30
        %v1099 = vshll.u32 %v1098, 30
        %v1100 = vsub.s32 %v1096, %v1099
        %vm1101 = vcmp.lt.s32.totalorder %v1100, 0
        %v1102 = vsub.s32 0, %v1100
        %v1103 = vsel %vm1101, %v1102, %v1100
        %v1104 = vclz %v1103
        %v1105 = vsub.s32 %v1104, 2
        %vm1106 = vcmp.gt.s32.totalorder 0, %v1105
        %v1107 = vsel %vm1106, 0, %v1105
        %v1108 = vsub.s32 32, %v1107
        %v1109 = vshll.u32 %v1100, %v1107
        %v1110 = vshrl.u32 %v1092, %v1108
        %v1111 = vor.u32 %v1109, %v1110
        %v1112 = vsub.s32 4294967266, %v1107
        %v1113 = vadd.s32 %v1112, 127
        %v1114 = vshll.u32 %v1113, 23
        %v1115 = vor.u32 4788187, %v1114
        %v1116 = vand.u32 2147483647, %v1115
        %v1118 = vcvt.s32.f32 %v1111
        %v1119 = vmul.f32 %v1118, %v1116
        %v1120 = vxor.u32 %v1119, 2147483648
        %v1121 = vsel %vm1038, %v1120, %v1119
        %v1122 = vsub.s32 4, %v1098
        %v1123 = vsel %vm1038, %v1122, %v1098
        %v1124 = vsel %vm1037, %v286, %v1121
        %v1125 = vsel %vm1037, 0, %v1123
        %v1126 = vcosq.f32.pop %v1124
        %v1127 = vsinq.f32.pop %v1124
        %vm1128 = vweird.f32 %v286
        %v1129 = vand.u32 %v1125, 3
        %vm1130 = vcmp.lt.s32.totalorder %v1129, 2
        %vm1131 = vcmp.eq.s32.totalorder %v1129, 0
        %v1132 = vxor.u32 %v1127, 2147483648
        %v1133 = vsel %vm1131, %v1126, %v1132
        %vm1134 = vcmp.eq.s32.totalorder %v1129, 2
        %v1135 = vxor.u32 %v1126, 2147483648
        %v1136 = vsel %vm1134, %v1135, %v1127
        %v1137 = vsel %vm1130, %v1133, %v1136
        %v1138 = vsel %vm1128, nan, %v1137
        %s1139 = scalar_lea.vmem %s1, 16
        %v1140 = vld [vmem:[%s1139] sm:$0xf]
        %v1141 = vld [vmem:[%s1139 + $0x4] sm:$0xf]
        %v1142 = vld [vmem:[%s1139 + $0x8] sm:$0xf]
        %v1143 = vld [vmem:[%s1139 + $0xc] sm:$0xf]
        %v1148 = vcombine.high %v414, %v414
        %v1149 = vcombine.high %v518, %v518
        %v1150 = vcombine.high %v622, %v622
        %v1151 = vcombine.high %v726, %v726
        %v1156 = vpack.c.bf16 %v414, %v414
        %v1157 = vpack.c.bf16 %v1148, %v1148
        %v1158 = vpack.c.bf16 %v518, %v518
        %v1159 = vpack.c.bf16 %v1149, %v1149
        %v1160 = vpack.c.bf16 %v622, %v622
        %v1161 = vpack.c.bf16 %v1150, %v1150
        %v1162 = vpack.c.bf16 %v726, %v726
        %v1163 = vpack.c.bf16 %v1151, %v1151
        %v1168 = vunpack.c.l.b16 %v1140
        %v1169 = vunpack.c.l.b16 %v1141
        %v1170 = vunpack.c.l.b16 %v1142
        %v1171 = vunpack.c.l.b16 %v1143
        %v1172 = vpack.c.b16 %v1169, %v1168
        %v1173 = vpack.c.b16 %v1171, %v1170
        %vm1174 = vcmask 23552
        %v1176 = vsel %vm1174, %v1172, 0
        %v1179 = vsel %vm1174, %v1173, 0
        %vm1181 = vcmask 1040384
        %vm1182 = vcmask 1041408
        %v1183 = vsel %vm1181, 4294967295, 65535
        %v1184 = vsel %vm1182, %v1183, 0
        %v1186 = vand.u32 %v1156, %v1184
        %v1189 = vand.u32 %v1157, %v1184
        %v1192 = vand.u32 %v1158, %v1184
        %v1195 = vand.u32 %v1159, %v1184
        %v1198 = vand.u32 %v1160, %v1184
        %v1201 = vand.u32 %v1161, %v1184
        %v1204 = vand.u32 %v1162, %v1184
        %v1207 = vand.u32 %v1163, %v1184
        %1209 = vmatprep.subr.bf16.mxu0 %v1189
        %1210 = vmatpush1.bf16.msra.mxu0 %v1186
        %1211 = vmatprep.subr.bf16.mxu0 0
        %1212 = vmatpush1.bf16.msra.mxu0 0
        %1213 = vmatprep.subr.bf16.mxu0 0
        %1214 = vmatpush1.bf16.msra.mxu0 0
        %1215 = vmatprep.subr.bf16.mxu0 0
        %1216 = vmatpush1.bf16.msra.mxu0 0
        %1217 = vmatprep.subr.bf16.mxu0 0
        %1218 = vmatpush1.bf16.msra.mxu0 0
        %1219 = vmatprep.subr.bf16.mxu0 0
        %1220 = vmatpush1.bf16.msra.mxu0 0
        %1221 = vmatprep.subr.bf16.mxu0 0
        %1222 = vmatpush1.bf16.msra.mxu0 0
        %1223 = vmatprep.subr.bf16.mxu0 0
        %1224 = vmatpush1.bf16.msra.mxu0 0
        %1225 = vmatprep.subr.bf16.mxu0 0
        %1226 = vmatpush1.bf16.msra.mxu0 0
        %1227 = vmatprep.subr.bf16.mxu0 0
        %1228 = vmatpush1.bf16.msra.mxu0 0
        %1229 = vmatprep.subr.bf16.mxu0 0
        %1230 = vmatpush1.bf16.msra.mxu0 0
        %1231 = vmatprep.subr.bf16.mxu0 0
        %1232 = vmatpush1.bf16.msra.mxu0 0
        %1233 = vmatprep.subr.bf16.mxu0 0
        %1234 = vmatpush1.bf16.msra.mxu0 0
        %1235 = vmatprep.subr.bf16.mxu0 0
        %1236 = vmatpush1.bf16.msra.mxu0 0
        %1237 = vmatprep.subr.bf16.mxu0 0
        %1238 = vmatpush1.bf16.msra.mxu0 0
        %1239 = vmatprep.subr.bf16.mxu0 0
        %1240 = vmatpush1.bf16.msra.mxu0 0
        %1241 = vmatprep.mubr.bf16.mxu0 0
        %1242 = vmatmul.mubr.bf16.gmra.mrb[0].mxu0 %v1176
        %v1243 = vpop.f32.mrb[0].mxu0
        %v1244 = vadd.f32 0.0, %v1243
        %v1245 = vpop.f32.mrb[0].mxu0
        %v1246 = vadd.f32 0.0, %v1245
        %v1247 = vpop.f32.mrb[0].mxu0
        %v1248 = vadd.f32 0.0, %v1247
        %v1249 = vpop.f32.mrb[0].mxu0
        %v1250 = vadd.f32 0.0, %v1249
        %1251 = vmatprep.mubr.bf16.mxu0 0
        %1252 = vmatmul.mubr.bf16.gmra.mrb[0].mxu0 %v1179
        %v1253 = vpop.f32.mrb[0].mxu0
        %v1254 = vadd.f32 0.0, %v1253
        %v1255 = vpop.f32.mrb[0].mxu0
        %v1256 = vadd.f32 0.0, %v1255
        %v1257 = vpop.f32.mrb[0].mxu0
        %v1258 = vadd.f32 0.0, %v1257
        %v1259 = vpop.f32.mrb[0].mxu0
        %v1260 = vadd.f32 0.0, %v1259
        %1261 = vdwg.mxu0
        %1262 = vmatprep.subr.bf16.mxu0 %v1195
        %1263 = vmatpush1.bf16.msra.mxu0 %v1192
        %1264 = vmatprep.subr.bf16.mxu0 0
        %1265 = vmatpush1.bf16.msra.mxu0 0
        %1266 = vmatprep.subr.bf16.mxu0 0
        %1267 = vmatpush1.bf16.msra.mxu0 0
        %1268 = vmatprep.subr.bf16.mxu0 0
        %1269 = vmatpush1.bf16.msra.mxu0 0
        %1270 = vmatprep.subr.bf16.mxu0 0
        %1271 = vmatpush1.bf16.msra.mxu0 0
        %1272 = vmatprep.subr.bf16.mxu0 0
        %1273 = vmatpush1.bf16.msra.mxu0 0
        %1274 = vmatprep.subr.bf16.mxu0 0
        %1275 = vmatpush1.bf16.msra.mxu0 0
        %1276 = vmatprep.subr.bf16.mxu0 0
        %1277 = vmatpush1.bf16.msra.mxu0 0
        %1278 = vmatprep.subr.bf16.mxu0 0
        %1279 = vmatpush1.bf16.msra.mxu0 0
        %1280 = vmatprep.subr.bf16.mxu0 0
        %1281 = vmatpush1.bf16.msra.mxu0 0
        %1282 = vmatprep.subr.bf16.mxu0 0
        %1283 = vmatpush1.bf16.msra.mxu0 0
        %1284 = vmatprep.subr.bf16.mxu0 0
        %1285 = vmatpush1.bf16.msra.mxu0 0
        %1286 = vmatprep.subr.bf16.mxu0 0
        %1287 = vmatpush1.bf16.msra.mxu0 0
        %1288 = vmatprep.subr.bf16.mxu0 0
        %1289 = vmatpush1.bf16.msra.mxu0 0
        %1290 = vmatprep.subr.bf16.mxu0 0
        %1291 = vmatpush1.bf16.msra.mxu0 0
        %1292 = vmatprep.subr.bf16.mxu0 0
        %1293 = vmatpush1.bf16.msra.mxu0 0
        %1294 = vmatprep.mubr.bf16.mxu0 0
        %1295 = vmatmul.mubr.bf16.gmra.mrb[0].mxu0 %v1176
        %v1296 = vpop.f32.mrb[0].mxu0
        %v1297 = vadd.f32 0.0, %v1296
        %v1298 = vpop.f32.mrb[0].mxu0
        %v1299 = vadd.f32 0.0, %v1298
        %v1300 = vpop.f32.mrb[0].mxu0
        %v1301 = vadd.f32 0.0, %v1300
        %v1302 = vpop.f32.mrb[0].mxu0
        %v1303 = vadd.f32 0.0, %v1302
        %1304 = vmatprep.mubr.bf16.mxu0 0
        %1305 = vmatmul.mubr.bf16.gmra.mrb[0].mxu0 %v1179
        %v1306 = vpop.f32.mrb[0].mxu0
        %v1307 = vadd.f32 0.0, %v1306
        %v1308 = vpop.f32.mrb[0].mxu0
        %v1309 = vadd.f32 0.0, %v1308
        %v1310 = vpop.f32.mrb[0].mxu0
        %v1311 = vadd.f32 0.0, %v1310
        %v1312 = vpop.f32.mrb[0].mxu0
        %v1313 = vadd.f32 0.0, %v1312
        %1314 = vdwg.mxu0
        %1315 = vmatprep.subr.bf16.mxu0 %v1201
        %1316 = vmatpush1.bf16.msra.mxu0 %v1198
        %1317 = vmatprep.subr.bf16.mxu0 0
        %1318 = vmatpush1.bf16.msra.mxu0 0
        %1319 = vmatprep.subr.bf16.mxu0 0
        %1320 = vmatpush1.bf16.msra.mxu0 0
        %1321 = vmatprep.subr.bf16.mxu0 0
        %1322 = vmatpush1.bf16.msra.mxu0 0
        %1323 = vmatprep.subr.bf16.mxu0 0
        %1324 = vmatpush1.bf16.msra.mxu0 0
        %1325 = vmatprep.subr.bf16.mxu0 0
        %1326 = vmatpush1.bf16.msra.mxu0 0
        %1327 = vmatprep.subr.bf16.mxu0 0
        %1328 = vmatpush1.bf16.msra.mxu0 0
        %1329 = vmatprep.subr.bf16.mxu0 0
        %1330 = vmatpush1.bf16.msra.mxu0 0
        %1331 = vmatprep.subr.bf16.mxu0 0
        %1332 = vmatpush1.bf16.msra.mxu0 0
        %1333 = vmatprep.subr.bf16.mxu0 0
        %1334 = vmatpush1.bf16.msra.mxu0 0
        %1335 = vmatprep.subr.bf16.mxu0 0
        %1336 = vmatpush1.bf16.msra.mxu0 0
        %1337 = vmatprep.subr.bf16.mxu0 0
        %1338 = vmatpush1.bf16.msra.mxu0 0
        %1339 = vmatprep.subr.bf16.mxu0 0
        %1340 = vmatpush1.bf16.msra.mxu0 0
        %1341 = vmatprep.subr.bf16.mxu0 0
        %1342 = vmatpush1.bf16.msra.mxu0 0
        %1343 = vmatprep.subr.bf16.mxu0 0
        %1344 = vmatpush1.bf16.msra.mxu0 0
        %1345 = vmatprep.subr.bf16.mxu0 0
        %1346 = vmatpush1.bf16.msra.mxu0 0
        %1347 = vmatprep.mubr.bf16.mxu0 0
        %1348 = vmatmul.mubr.bf16.gmra.mrb[0].mxu0 %v1176
        %v1349 = vpop.f32.mrb[0].mxu0
        %v1350 = vadd.f32 0.0, %v1349
        %v1351 = vpop.f32.mrb[0].mxu0
        %v1352 = vadd.f32 0.0, %v1351
        %v1353 = vpop.f32.mrb[0].mxu0
        %v1354 = vadd.f32 0.0, %v1353
        %v1355 = vpop.f32.mrb[0].mxu0
        %v1356 = vadd.f32 0.0, %v1355
        %1357 = vmatprep.mubr.bf16.mxu0 0
        %1358 = vmatmul.mubr.bf16.gmra.mrb[0].mxu0 %v1179
        %v1359 = vpop.f32.mrb[0].mxu0
        %v1360 = vadd.f32 0.0, %v1359
        %v1361 = vpop.f32.mrb[0].mxu0
        %v1362 = vadd.f32 0.0, %v1361
        %v1363 = vpop.f32.mrb[0].mxu0
        %v1364 = vadd.f32 0.0, %v1363
        %v1365 = vpop.f32.mrb[0].mxu0
        %v1366 = vadd.f32 0.0, %v1365
        %1367 = vdwg.mxu0
        %1368 = vmatprep.subr.bf16.mxu0 %v1207
        %1369 = vmatpush1.bf16.msra.mxu0 %v1204
        %1370 = vmatprep.subr.bf16.mxu0 0
        %1371 = vmatpush1.bf16.msra.mxu0 0
        %1372 = vmatprep.subr.bf16.mxu0 0
        %1373 = vmatpush1.bf16.msra.mxu0 0
        %1374 = vmatprep.subr.bf16.mxu0 0
        %1375 = vmatpush1.bf16.msra.mxu0 0
        %1376 = vmatprep.subr.bf16.mxu0 0
        %1377 = vmatpush1.bf16.msra.mxu0 0
        %1378 = vmatprep.subr.bf16.mxu0 0
        %1379 = vmatpush1.bf16.msra.mxu0 0
        %1380 = vmatprep.subr.bf16.mxu0 0
        %1381 = vmatpush1.bf16.msra.mxu0 0
        %1382 = vmatprep.subr.bf16.mxu0 0
        %1383 = vmatpush1.bf16.msra.mxu0 0
        %1384 = vmatprep.subr.bf16.mxu0 0
        %1385 = vmatpush1.bf16.msra.mxu0 0
        %1386 = vmatprep.subr.bf16.mxu0 0
        %1387 = vmatpush1.bf16.msra.mxu0 0
        %1388 = vmatprep.subr.bf16.mxu0 0
        %1389 = vmatpush1.bf16.msra.mxu0 0
        %1390 = vmatprep.subr.bf16.mxu0 0
        %1391 = vmatpush1.bf16.msra.mxu0 0
        %1392 = vmatprep.subr.bf16.mxu0 0
        %1393 = vmatpush1.bf16.msra.mxu0 0
        %1394 = vmatprep.subr.bf16.mxu0 0
        %1395 = vmatpush1.bf16.msra.mxu0 0
        %1396 = vmatprep.subr.bf16.mxu0 0
        %1397 = vmatpush1.bf16.msra.mxu0 0
        %1398 = vmatprep.subr.bf16.mxu0 0
        %1399 = vmatpush1.bf16.msra.mxu0 0
        %1400 = vmatprep.mubr.bf16.mxu0 0
        %1401 = vmatmul.mubr.bf16.gmra.mrb[0].mxu0 %v1176
        %v1402 = vpop.f32.mrb[0].mxu0
        %v1403 = vadd.f32 0.0, %v1402
        %v1404 = vpop.f32.mrb[0].mxu0
        %v1405 = vadd.f32 0.0, %v1404
        %v1406 = vpop.f32.mrb[0].mxu0
        %v1407 = vadd.f32 0.0, %v1406
        %v1408 = vpop.f32.mrb[0].mxu0
        %v1409 = vadd.f32 0.0, %v1408
        %1410 = vmatprep.mubr.bf16.mxu0 0
        %1411 = vmatmul.mubr.bf16.gmra.mrb[0].mxu0 %v1179
        %v1412 = vpop.f32.mrb[0].mxu0
        %v1413 = vadd.f32 0.0, %v1412
        %v1414 = vpop.f32.mrb[0].mxu0
        %v1415 = vadd.f32 0.0, %v1414
        %v1416 = vpop.f32.mrb[0].mxu0
        %v1417 = vadd.f32 0.0, %v1416
        %v1418 = vpop.f32.mrb[0].mxu0
        %v1419 = vadd.f32 0.0, %v1418
        %1420 = vdwg.mxu0
        %v1425 = vunpack.c.l.b16 %v287
        %v1426 = vunpack.c.l.b16 %v288
        %v1427 = vunpack.c.l.b16 %v289
        %v1428 = vunpack.c.l.b16 %v290
        %v1429 = vpack.c.b16 %v1426, %v1425
        %v1430 = vpack.c.b16 %v1428, %v1427
        %v1432 = vsel %vm1174, %v1429, 0
        %v1435 = vsel %vm1174, %v1430, 0
        %v1438 = vand.u32 %v303, %v1184
        %v1441 = vand.u32 %v304, %v1184
        %v1444 = vand.u32 %v305, %v1184
        %v1447 = vand.u32 %v306, %v1184
        %v1450 = vand.u32 %v307, %v1184
        %v1453 = vand.u32 %v308, %v1184
        %v1456 = vand.u32 %v309, %v1184
        %v1459 = vand.u32 %v310, %v1184
        %1461 = vmatprep.subr.bf16.mxu0 %v1441
        %1462 = vmatpush1.bf16.msra.mxu0 %v1438
        %1463 = vmatprep.subr.bf16.mxu0 0
        %1464 = vmatpush1.bf16.msra.mxu0 0
        %1465 = vmatprep.subr.bf16.mxu0 0
        %1466 = vmatpush1.bf16.msra.mxu0 0
        %1467 = vmatprep.subr.bf16.mxu0 0
        %1468 = vmatpush1.bf16.msra.mxu0 0
        %1469 = vmatprep.subr.bf16.mxu0 0
        %1470 = vmatpush1.bf16.msra.mxu0 0
        %1471 = vmatprep.subr.bf16.mxu0 0
        %1472 = vmatpush1.bf16.msra.mxu0 0
        %1473 = vmatprep.subr.bf16.mxu0 0
        %1474 = vmatpush1.bf16.msra.mxu0 0
        %1475 = vmatprep.subr.bf16.mxu0 0
        %1476 = vmatpush1.bf16.msra.mxu0 0
        %1477 = vmatprep.subr.bf16.mxu0 0
        %1478 = vmatpush1.bf16.msra.mxu0 0
        %1479 = vmatprep.subr.bf16.mxu0 0
        %1480 = vmatpush1.bf16.msra.mxu0 0
        %1481 = vmatprep.subr.bf16.mxu0 0
        %1482 = vmatpush1.bf16.msra.mxu0 0
        %1483 = vmatprep.subr.bf16.mxu0 0
        %1484 = vmatpush1.bf16.msra.mxu0 0
        %1485 = vmatprep.subr.bf16.mxu0 0
        %1486 = vmatpush1.bf16.msra.mxu0 0
        %1487 = vmatprep.subr.bf16.mxu0 0
        %1488 = vmatpush1.bf16.msra.mxu0 0
        %1489 = vmatprep.subr.bf16.mxu0 0
        %1490 = vmatpush1.bf16.msra.mxu0 0
        %1491 = vmatprep.subr.bf16.mxu0 0
        %1492 = vmatpush1.bf16.msra.mxu0 0
        %1493 = vmatprep.mubr.bf16.mxu0 0
        %1494 = vmatmul.mubr.bf16.gmra.mrb[0].mxu0 %v1432
        %v1495 = vpop.f32.mrb[0].mxu0
        %v1496 = vadd.f32 %v1244, %v1495
        %v1497 = vpop.f32.mrb[0].mxu0
        %v1498 = vadd.f32 %v1246, %v1497
        %v1499 = vpop.f32.mrb[0].mxu0
        %v1500 = vadd.f32 %v1248, %v1499
        %v1501 = vpop.f32.mrb[0].mxu0
        %v1502 = vadd.f32 %v1250, %v1501
        %1503 = vmatprep.mubr.bf16.mxu0 0
        %1504 = vmatmul.mubr.bf16.gmra.mrb[0].mxu0 %v1435
        %v1505 = vpop.f32.mrb[0].mxu0
        %v1506 = vadd.f32 %v1254, %v1505
        %v1507 = vpop.f32.mrb[0].mxu0
        %v1508 = vadd.f32 %v1256, %v1507
        %v1509 = vpop.f32.mrb[0].mxu0
        %v1510 = vadd.f32 %v1258, %v1509
        %v1511 = vpop.f32.mrb[0].mxu0
        %v1512 = vadd.f32 %v1260, %v1511
        %1513 = vdwg.mxu0
        %1514 = vmatprep.subr.bf16.mxu0 %v1447
        %1515 = vmatpush1.bf16.msra.mxu0 %v1444
        %1516 = vmatprep.subr.bf16.mxu0 0
        %1517 = vmatpush1.bf16.msra.mxu0 0
        %1518 = vmatprep.subr.bf16.mxu0 0
        %1519 = vmatpush1.bf16.msra.mxu0 0
        %1520 = vmatprep.subr.bf16.mxu0 0
        %1521 = vmatpush1.bf16.msra.mxu0 0
        %1522 = vmatprep.subr.bf16.mxu0 0
        %1523 = vmatpush1.bf16.msra.mxu0 0
        %1524 = vmatprep.subr.bf16.mxu0 0
        %1525 = vmatpush1.bf16.msra.mxu0 0
        %1526 = vmatprep.subr.bf16.mxu0 0
        %1527 = vmatpush1.bf16.msra.mxu0 0
        %1528 = vmatprep.subr.bf16.mxu0 0
        %1529 = vmatpush1.bf16.msra.mxu0 0
        %1530 = vmatprep.subr.bf16.mxu0 0
        %1531 = vmatpush1.bf16.msra.mxu0 0
        %1532 = vmatprep.subr.bf16.mxu0 0
        %1533 = vmatpush1.bf16.msra.mxu0 0
        %1534 = vmatprep.subr.bf16.mxu0 0
        %1535 = vmatpush1.bf16.msra.mxu0 0
        %1536 = vmatprep.subr.bf16.mxu0 0
        %1537 = vmatpush1.bf16.msra.mxu0 0
        %1538 = vmatprep.subr.bf16.mxu0 0
        %1539 = vmatpush1.bf16.msra.mxu0 0
        %1540 = vmatprep.subr.bf16.mxu0 0
        %1541 = vmatpush1.bf16.msra.mxu0 0
        %1542 = vmatprep.subr.bf16.mxu0 0
        %1543 = vmatpush1.bf16.msra.mxu0 0
        %1544 = vmatprep.subr.bf16.mxu0 0
        %1545 = vmatpush1.bf16.msra.mxu0 0
        %1546 = vmatprep.mubr.bf16.mxu0 0
        %1547 = vmatmul.mubr.bf16.gmra.mrb[0].mxu0 %v1432
        %v1548 = vpop.f32.mrb[0].mxu0
        %v1549 = vadd.f32 %v1297, %v1548
        %v1550 = vpop.f32.mrb[0].mxu0
        %v1551 = vadd.f32 %v1299, %v1550
        %v1552 = vpop.f32.mrb[0].mxu0
        %v1553 = vadd.f32 %v1301, %v1552
        %v1554 = vpop.f32.mrb[0].mxu0
        %v1555 = vadd.f32 %v1303, %v1554
        %1556 = vmatprep.mubr.bf16.mxu0 0
        %1557 = vmatmul.mubr.bf16.gmra.mrb[0].mxu0 %v1435
        %v1558 = vpop.f32.mrb[0].mxu0
        %v1559 = vadd.f32 %v1307, %v1558
        %v1560 = vpop.f32.mrb[0].mxu0
        %v1561 = vadd.f32 %v1309, %v1560
        %v1562 = vpop.f32.mrb[0].mxu0
        %v1563 = vadd.f32 %v1311, %v1562
        %v1564 = vpop.f32.mrb[0].mxu0
        %v1565 = vadd.f32 %v1313, %v1564
        %1566 = vdwg.mxu0
        %1567 = vmatprep.subr.bf16.mxu0 %v1453
        %1568 = vmatpush1.bf16.msra.mxu0 %v1450
        %1569 = vmatprep.subr.bf16.mxu0 0
        %1570 = vmatpush1.bf16.msra.mxu0 0
        %1571 = vmatprep.subr.bf16.mxu0 0
        %1572 = vmatpush1.bf16.msra.mxu0 0
        %1573 = vmatprep.subr.bf16.mxu0 0
        %1574 = vmatpush1.bf16.msra.mxu0 0
        %1575 = vmatprep.subr.bf16.mxu0 0
        %1576 = vmatpush1.bf16.msra.mxu0 0
        %1577 = vmatprep.subr.bf16.mxu0 0
        %1578 = vmatpush1.bf16.msra.mxu0 0
        %1579 = vmatprep.subr.bf16.mxu0 0
        %1580 = vmatpush1.bf16.msra.mxu0 0
        %1581 = vmatprep.subr.bf16.mxu0 0
        %1582 = vmatpush1.bf16.msra.mxu0 0
        %1583 = vmatprep.subr.bf16.mxu0 0
        %1584 = vmatpush1.bf16.msra.mxu0 0
        %1585 = vmatprep.subr.bf16.mxu0 0
        %1586 = vmatpush1.bf16.msra.mxu0 0
        %1587 = vmatprep.subr.bf16.mxu0 0
        %1588 = vmatpush1.bf16.msra.mxu0 0
        %1589 = vmatprep.subr.bf16.mxu0 0
        %1590 = vmatpush1.bf16.msra.mxu0 0
        %1591 = vmatprep.subr.bf16.mxu0 0
        %1592 = vmatpush1.bf16.msra.mxu0 0
        %1593 = vmatprep.subr.bf16.mxu0 0
        %1594 = vmatpush1.bf16.msra.mxu0 0
        %1595 = vmatprep.subr.bf16.mxu0 0
        %1596 = vmatpush1.bf16.msra.mxu0 0
        %1597 = vmatprep.subr.bf16.mxu0 0
        %1598 = vmatpush1.bf16.msra.mxu0 0
        %1599 = vmatprep.mubr.bf16.mxu0 0
        %1600 = vmatmul.mubr.bf16.gmra.mrb[0].mxu0 %v1432
        %v1601 = vpop.f32.mrb[0].mxu0
        %v1602 = vadd.f32 %v1350, %v1601
        %v1603 = vpop.f32.mrb[0].mxu0
        %v1604 = vadd.f32 %v1352, %v1603
        %v1605 = vpop.f32.mrb[0].mxu0
        %v1606 = vadd.f32 %v1354, %v1605
        %v1607 = vpop.f32.mrb[0].mxu0
        %v1608 = vadd.f32 %v1356, %v1607
        %1609 = vmatprep.mubr.bf16.mxu0 0
        %1610 = vmatmul.mubr.bf16.gmra.mrb[0].mxu0 %v1435
        %v1611 = vpop.f32.mrb[0].mxu0
        %v1612 = vadd.f32 %v1360, %v1611
        %v1613 = vpop.f32.mrb[0].mxu0
        %v1614 = vadd.f32 %v1362, %v1613
        %v1615 = vpop.f32.mrb[0].mxu0
        %v1616 = vadd.f32 %v1364, %v1615
        %v1617 = vpop.f32.mrb[0].mxu0
        %v1618 = vadd.f32 %v1366, %v1617
        %1619 = vdwg.mxu0
        %1620 = vmatprep.subr.bf16.mxu0 %v1459
        %1621 = vmatpush1.bf16.msra.mxu0 %v1456
        %1622 = vmatprep.subr.bf16.mxu0 0
        %1623 = vmatpush1.bf16.msra.mxu0 0
        %1624 = vmatprep.subr.bf16.mxu0 0
        %1625 = vmatpush1.bf16.msra.mxu0 0
        %1626 = vmatprep.subr.bf16.mxu0 0
        %1627 = vmatpush1.bf16.msra.mxu0 0
        %1628 = vmatprep.subr.bf16.mxu0 0
        %1629 = vmatpush1.bf16.msra.mxu0 0
        %1630 = vmatprep.subr.bf16.mxu0 0
        %1631 = vmatpush1.bf16.msra.mxu0 0
        %1632 = vmatprep.subr.bf16.mxu0 0
        %1633 = vmatpush1.bf16.msra.mxu0 0
        %1634 = vmatprep.subr.bf16.mxu0 0
        %1635 = vmatpush1.bf16.msra.mxu0 0
        %1636 = vmatprep.subr.bf16.mxu0 0
        %1637 = vmatpush1.bf16.msra.mxu0 0
        %1638 = vmatprep.subr.bf16.mxu0 0
        %1639 = vmatpush1.bf16.msra.mxu0 0
        %1640 = vmatprep.subr.bf16.mxu0 0
        %1641 = vmatpush1.bf16.msra.mxu0 0
        %1642 = vmatprep.subr.bf16.mxu0 0
        %1643 = vmatpush1.bf16.msra.mxu0 0
        %1644 = vmatprep.subr.bf16.mxu0 0
        %1645 = vmatpush1.bf16.msra.mxu0 0
        %1646 = vmatprep.subr.bf16.mxu0 0
        %1647 = vmatpush1.bf16.msra.mxu0 0
        %1648 = vmatprep.subr.bf16.mxu0 0
        %1649 = vmatpush1.bf16.msra.mxu0 0
        %1650 = vmatprep.subr.bf16.mxu0 0
        %1651 = vmatpush1.bf16.msra.mxu0 0
        %1652 = vmatprep.mubr.bf16.mxu0 0
        %1653 = vmatmul.mubr.bf16.gmra.mrb[0].mxu0 %v1432
        %v1654 = vpop.f32.mrb[0].mxu0
        %v1655 = vadd.f32 %v1403, %v1654
        %v1656 = vpop.f32.mrb[0].mxu0
        %v1657 = vadd.f32 %v1405, %v1656
        %v1658 = vpop.f32.mrb[0].mxu0
        %v1659 = vadd.f32 %v1407, %v1658
        %v1660 = vpop.f32.mrb[0].mxu0
        %v1661 = vadd.f32 %v1409, %v1660
        %1662 = vmatprep.mubr.bf16.mxu0 0
        %1663 = vmatmul.mubr.bf16.gmra.mrb[0].mxu0 %v1435
        %v1664 = vpop.f32.mrb[0].mxu0
        %v1665 = vadd.f32 %v1413, %v1664
        %v1666 = vpop.f32.mrb[0].mxu0
        %v1667 = vadd.f32 %v1415, %v1666
        %v1668 = vpop.f32.mrb[0].mxu0
        %v1669 = vadd.f32 %v1417, %v1668
        %v1670 = vpop.f32.mrb[0].mxu0
        %v1671 = vadd.f32 %v1419, %v1670
        %1672 = vdwg.mxu0
        %s1673 = scalar_lea.vmem %s1, 32
        %v1674 = vld [vmem:[%s1673] sm:$0xf]
        %v1675 = vld [vmem:[%s1673 + $0x4] sm:$0xf]
        %v1676 = vld [vmem:[%s1673 + $0x8] sm:$0xf]
        %v1677 = vld [vmem:[%s1673 + $0xc] sm:$0xf]
        %v1682 = vcombine.high %v829, %v829
        %v1683 = vcombine.high %v932, %v932
        %v1684 = vcombine.high %v1035, %v1035
        %v1685 = vcombine.high %v1138, %v1138
        %v1690 = vpack.c.bf16 %v829, %v829
        %v1691 = vpack.c.bf16 %v1682, %v1682
        %v1692 = vpack.c.bf16 %v932, %v932
        %v1693 = vpack.c.bf16 %v1683, %v1683
        %v1694 = vpack.c.bf16 %v1035, %v1035
        %v1695 = vpack.c.bf16 %v1684, %v1684
        %v1696 = vpack.c.bf16 %v1138, %v1138
        %v1697 = vpack.c.bf16 %v1685, %v1685
        %v1702 = vunpack.c.l.b16 %v1674
        %v1703 = vunpack.c.l.b16 %v1675
        %v1704 = vunpack.c.l.b16 %v1676
        %v1705 = vunpack.c.l.b16 %v1677
        %v1706 = vpack.c.b16 %v1703, %v1702
        %v1707 = vpack.c.b16 %v1705, %v1704
        %v1709 = vsel %vm1174, %v1706, 0
        %v1712 = vsel %vm1174, %v1707, 0
        %v1715 = vand.u32 %v1690, %v1184
        %v1718 = vand.u32 %v1691, %v1184
        %v1721 = vand.u32 %v1692, %v1184
        %v1724 = vand.u32 %v1693, %v1184
        %v1727 = vand.u32 %v1694, %v1184
        %v1730 = vand.u32 %v1695, %v1184
        %v1733 = vand.u32 %v1696, %v1184
        %v1736 = vand.u32 %v1697, %v1184
        %1738 = vmatprep.subr.bf16.mxu0 %v1718
        %1739 = vmatpush1.bf16.msra.mxu0 %v1715
        %1740 = vmatprep.subr.bf16.mxu0 0
        %1741 = vmatpush1.bf16.msra.mxu0 0
        %1742 = vmatprep.subr.bf16.mxu0 0
        %1743 = vmatpush1.bf16.msra.mxu0 0
        %1744 = vmatprep.subr.bf16.mxu0 0
        %1745 = vmatpush1.bf16.msra.mxu0 0
        %1746 = vmatprep.subr.bf16.mxu0 0
        %1747 = vmatpush1.bf16.msra.mxu0 0
        %1748 = vmatprep.subr.bf16.mxu0 0
        %1749 = vmatpush1.bf16.msra.mxu0 0
        %1750 = vmatprep.subr.bf16.mxu0 0
        %1751 = vmatpush1.bf16.msra.mxu0 0
        %1752 = vmatprep.subr.bf16.mxu0 0
        %1753 = vmatpush1.bf16.msra.mxu0 0
        %1754 = vmatprep.subr.bf16.mxu0 0
        %1755 = vmatpush1.bf16.msra.mxu0 0
        %1756 = vmatprep.subr.bf16.mxu0 0
        %1757 = vmatpush1.bf16.msra.mxu0 0
        %1758 = vmatprep.subr.bf16.mxu0 0
        %1759 = vmatpush1.bf16.msra.mxu0 0
        %1760 = vmatprep.subr.bf16.mxu0 0
        %1761 = vmatpush1.bf16.msra.mxu0 0
        %1762 = vmatprep.subr.bf16.mxu0 0
        %1763 = vmatpush1.bf16.msra.mxu0 0
        %1764 = vmatprep.subr.bf16.mxu0 0
        %1765 = vmatpush1.bf16.msra.mxu0 0
        %1766 = vmatprep.subr.bf16.mxu0 0
        %1767 = vmatpush1.bf16.msra.mxu0 0
        %1768 = vmatprep.subr.bf16.mxu0 0
        %1769 = vmatpush1.bf16.msra.mxu0 0
        %1770 = vmatprep.mubr.bf16.mxu0 0
        %1771 = vmatmul.mubr.bf16.gmra.mrb[0].mxu0 %v1709
        %v1772 = vpop.f32.mrb[0].mxu0
        %v1773 = vadd.f32 0.0, %v1772
        %v1774 = vpop.f32.mrb[0].mxu0
        %v1775 = vadd.f32 0.0, %v1774
        %v1776 = vpop.f32.mrb[0].mxu0
        %v1777 = vadd.f32 0.0, %v1776
        %v1778 = vpop.f32.mrb[0].mxu0
        %v1779 = vadd.f32 0.0, %v1778
        %1780 = vmatprep.mubr.bf16.mxu0 0
        %1781 = vmatmul.mubr.bf16.gmra.mrb[0].mxu0 %v1712
        %v1782 = vpop.f32.mrb[0].mxu0
        %v1783 = vadd.f32 0.0, %v1782
        %v1784 = vpop.f32.mrb[0].mxu0
        %v1785 = vadd.f32 0.0, %v1784
        %v1786 = vpop.f32.mrb[0].mxu0
        %v1787 = vadd.f32 0.0, %v1786
        %v1788 = vpop.f32.mrb[0].mxu0
        %v1789 = vadd.f32 0.0, %v1788
        %1790 = vdwg.mxu0
        %1791 = vmatprep.subr.bf16.mxu0 %v1724
        %1792 = vmatpush1.bf16.msra.mxu0 %v1721
        %1793 = vmatprep.subr.bf16.mxu0 0
        %1794 = vmatpush1.bf16.msra.mxu0 0
        %1795 = vmatprep.subr.bf16.mxu0 0
        %1796 = vmatpush1.bf16.msra.mxu0 0
        %1797 = vmatprep.subr.bf16.mxu0 0
        %1798 = vmatpush1.bf16.msra.mxu0 0
        %1799 = vmatprep.subr.bf16.mxu0 0
        %1800 = vmatpush1.bf16.msra.mxu0 0
        %1801 = vmatprep.subr.bf16.mxu0 0
        %1802 = vmatpush1.bf16.msra.mxu0 0
        %1803 = vmatprep.subr.bf16.mxu0 0
        %1804 = vmatpush1.bf16.msra.mxu0 0
        %1805 = vmatprep.subr.bf16.mxu0 0
        %1806 = vmatpush1.bf16.msra.mxu0 0
        %1807 = vmatprep.subr.bf16.mxu0 0
        %1808 = vmatpush1.bf16.msra.mxu0 0
        %1809 = vmatprep.subr.bf16.mxu0 0
        %1810 = vmatpush1.bf16.msra.mxu0 0
        %1811 = vmatprep.subr.bf16.mxu0 0
        %1812 = vmatpush1.bf16.msra.mxu0 0
        %1813 = vmatprep.subr.bf16.mxu0 0
        %1814 = vmatpush1.bf16.msra.mxu0 0
        %1815 = vmatprep.subr.bf16.mxu0 0
        %1816 = vmatpush1.bf16.msra.mxu0 0
        %1817 = vmatprep.subr.bf16.mxu0 0
        %1818 = vmatpush1.bf16.msra.mxu0 0
        %1819 = vmatprep.subr.bf16.mxu0 0
        %1820 = vmatpush1.bf16.msra.mxu0 0
        %1821 = vmatprep.subr.bf16.mxu0 0
        %1822 = vmatpush1.bf16.msra.mxu0 0
        %1823 = vmatprep.mubr.bf16.mxu0 0
        %1824 = vmatmul.mubr.bf16.gmra.mrb[0].mxu0 %v1709
        %v1825 = vpop.f32.mrb[0].mxu0
        %v1826 = vadd.f32 0.0, %v1825
        %v1827 = vpop.f32.mrb[0].mxu0
        %v1828 = vadd.f32 0.0, %v1827
        %v1829 = vpop.f32.mrb[0].mxu0
        %v1830 = vadd.f32 0.0, %v1829
        %v1831 = vpop.f32.mrb[0].mxu0
        %v1832 = vadd.f32 0.0, %v1831
        %1833 = vmatprep.mubr.bf16.mxu0 0
        %1834 = vmatmul.mubr.bf16.gmra.mrb[0].mxu0 %v1712
        %v1835 = vpop.f32.mrb[0].mxu0
        %v1836 = vadd.f32 0.0, %v1835
        %v1837 = vpop.f32.mrb[0].mxu0
        %v1838 = vadd.f32 0.0, %v1837
        %v1839 = vpop.f32.mrb[0].mxu0
        %v1840 = vadd.f32 0.0, %v1839
        %v1841 = vpop.f32.mrb[0].mxu0
        %v1842 = vadd.f32 0.0, %v1841
        %1843 = vdwg.mxu0
        %1844 = vmatprep.subr.bf16.mxu0 %v1730
        %1845 = vmatpush1.bf16.msra.mxu0 %v1727
        %1846 = vmatprep.subr.bf16.mxu0 0
        %1847 = vmatpush1.bf16.msra.mxu0 0
        %1848 = vmatprep.subr.bf16.mxu0 0
        %1849 = vmatpush1.bf16.msra.mxu0 0
        %1850 = vmatprep.subr.bf16.mxu0 0
        %1851 = vmatpush1.bf16.msra.mxu0 0
        %1852 = vmatprep.subr.bf16.mxu0 0
        %1853 = vmatpush1.bf16.msra.mxu0 0
        %1854 = vmatprep.subr.bf16.mxu0 0
        %1855 = vmatpush1.bf16.msra.mxu0 0
        %1856 = vmatprep.subr.bf16.mxu0 0
        %1857 = vmatpush1.bf16.msra.mxu0 0
        %1858 = vmatprep.subr.bf16.mxu0 0
        %1859 = vmatpush1.bf16.msra.mxu0 0
        %1860 = vmatprep.subr.bf16.mxu0 0
        %1861 = vmatpush1.bf16.msra.mxu0 0
        %1862 = vmatprep.subr.bf16.mxu0 0
        %1863 = vmatpush1.bf16.msra.mxu0 0
        %1864 = vmatprep.subr.bf16.mxu0 0
        %1865 = vmatpush1.bf16.msra.mxu0 0
        %1866 = vmatprep.subr.bf16.mxu0 0
        %1867 = vmatpush1.bf16.msra.mxu0 0
        %1868 = vmatprep.subr.bf16.mxu0 0
        %1869 = vmatpush1.bf16.msra.mxu0 0
        %1870 = vmatprep.subr.bf16.mxu0 0
        %1871 = vmatpush1.bf16.msra.mxu0 0
        %1872 = vmatprep.subr.bf16.mxu0 0
        %1873 = vmatpush1.bf16.msra.mxu0 0
        %1874 = vmatprep.subr.bf16.mxu0 0
        %1875 = vmatpush1.bf16.msra.mxu0 0
        %1876 = vmatprep.mubr.bf16.mxu0 0
        %1877 = vmatmul.mubr.bf16.gmra.mrb[0].mxu0 %v1709
        %v1878 = vpop.f32.mrb[0].mxu0
        %v1879 = vadd.f32 0.0, %v1878
        %v1880 = vpop.f32.mrb[0].mxu0
        %v1881 = vadd.f32 0.0, %v1880
        %v1882 = vpop.f32.mrb[0].mxu0
        %v1883 = vadd.f32 0.0, %v1882
        %v1884 = vpop.f32.mrb[0].mxu0
        %v1885 = vadd.f32 0.0, %v1884
        %1886 = vmatprep.mubr.bf16.mxu0 0
        %1887 = vmatmul.mubr.bf16.gmra.mrb[0].mxu0 %v1712
        %v1888 = vpop.f32.mrb[0].mxu0
        %v1889 = vadd.f32 0.0, %v1888
        %v1890 = vpop.f32.mrb[0].mxu0
        %v1891 = vadd.f32 0.0, %v1890
        %v1892 = vpop.f32.mrb[0].mxu0
        %v1893 = vadd.f32 0.0, %v1892
        %v1894 = vpop.f32.mrb[0].mxu0
        %v1895 = vadd.f32 0.0, %v1894
        %1896 = vdwg.mxu0
        %1897 = vmatprep.subr.bf16.mxu0 %v1736
        %1898 = vmatpush1.bf16.msra.mxu0 %v1733
        %1899 = vmatprep.subr.bf16.mxu0 0
        %1900 = vmatpush1.bf16.msra.mxu0 0
        %1901 = vmatprep.subr.bf16.mxu0 0
        %1902 = vmatpush1.bf16.msra.mxu0 0
        %1903 = vmatprep.subr.bf16.mxu0 0
        %1904 = vmatpush1.bf16.msra.mxu0 0
        %1905 = vmatprep.subr.bf16.mxu0 0
        %1906 = vmatpush1.bf16.msra.mxu0 0
        %1907 = vmatprep.subr.bf16.mxu0 0
        %1908 = vmatpush1.bf16.msra.mxu0 0
        %1909 = vmatprep.subr.bf16.mxu0 0
        %1910 = vmatpush1.bf16.msra.mxu0 0
        %1911 = vmatprep.subr.bf16.mxu0 0
        %1912 = vmatpush1.bf16.msra.mxu0 0
        %1913 = vmatprep.subr.bf16.mxu0 0
        %1914 = vmatpush1.bf16.msra.mxu0 0
        %1915 = vmatprep.subr.bf16.mxu0 0
        %1916 = vmatpush1.bf16.msra.mxu0 0
        %1917 = vmatprep.subr.bf16.mxu0 0
        %1918 = vmatpush1.bf16.msra.mxu0 0
        %1919 = vmatprep.subr.bf16.mxu0 0
        %1920 = vmatpush1.bf16.msra.mxu0 0
        %1921 = vmatprep.subr.bf16.mxu0 0
        %1922 = vmatpush1.bf16.msra.mxu0 0
        %1923 = vmatprep.subr.bf16.mxu0 0
        %1924 = vmatpush1.bf16.msra.mxu0 0
        %1925 = vmatprep.subr.bf16.mxu0 0
        %1926 = vmatpush1.bf16.msra.mxu0 0
        %1927 = vmatprep.subr.bf16.mxu0 0
        %1928 = vmatpush1.bf16.msra.mxu0 0
        %1929 = vmatprep.mubr.bf16.mxu0 0
        %1930 = vmatmul.mubr.bf16.gmra.mrb[0].mxu0 %v1709
        %v1931 = vpop.f32.mrb[0].mxu0
        %v1932 = vadd.f32 0.0, %v1931
        %v1933 = vpop.f32.mrb[0].mxu0
        %v1934 = vadd.f32 0.0, %v1933
        %v1935 = vpop.f32.mrb[0].mxu0
        %v1936 = vadd.f32 0.0, %v1935
        %v1937 = vpop.f32.mrb[0].mxu0
        %v1938 = vadd.f32 0.0, %v1937
        %1939 = vmatprep.mubr.bf16.mxu0 0
        %1940 = vmatmul.mubr.bf16.gmra.mrb[0].mxu0 %v1712
        %v1941 = vpop.f32.mrb[0].mxu0
        %v1942 = vadd.f32 0.0, %v1941
        %v1943 = vpop.f32.mrb[0].mxu0
        %v1944 = vadd.f32 0.0, %v1943
        %v1945 = vpop.f32.mrb[0].mxu0
        %v1946 = vadd.f32 0.0, %v1945
        %v1947 = vpop.f32.mrb[0].mxu0
        %v1948 = vadd.f32 0.0, %v1947
        %1949 = vdwg.mxu0
        %v1950 = vadd.f32 %v1496, %v1773
        %v1951 = vadd.f32 %v1498, %v1775
        %v1952 = vadd.f32 %v1549, %v1826
        %v1953 = vadd.f32 %v1551, %v1828
        %v1954 = vadd.f32 %v1602, %v1879
        %v1955 = vadd.f32 %v1604, %v1881
        %v1956 = vadd.f32 %v1655, %v1932
        %v1957 = vadd.f32 %v1657, %v1934
        %v1958 = vadd.f32 %v1500, %v1777
        %v1959 = vadd.f32 %v1502, %v1779
        %v1960 = vadd.f32 %v1553, %v1830
        %v1961 = vadd.f32 %v1555, %v1832
        %v1962 = vadd.f32 %v1606, %v1883
        %v1963 = vadd.f32 %v1608, %v1885
        %v1964 = vadd.f32 %v1659, %v1936
        %v1965 = vadd.f32 %v1661, %v1938
        %v1966 = vadd.f32 %v1506, %v1783
        %v1967 = vadd.f32 %v1508, %v1785
        %v1968 = vadd.f32 %v1559, %v1836
        %v1969 = vadd.f32 %v1561, %v1838
        %v1970 = vadd.f32 %v1612, %v1889
        %v1971 = vadd.f32 %v1614, %v1891
        %v1972 = vadd.f32 %v1665, %v1942
        %v1973 = vadd.f32 %v1667, %v1944
        %v1974 = vadd.f32 %v1510, %v1787
        %v1975 = vadd.f32 %v1512, %v1789
        %v1976 = vadd.f32 %v1563, %v1840
        %v1977 = vadd.f32 %v1565, %v1842
        %v1978 = vadd.f32 %v1616, %v1893
        %v1979 = vadd.f32 %v1618, %v1895
        %v1980 = vadd.f32 %v1669, %v1946
        %v1981 = vadd.f32 %v1671, %v1948
        %v1982 = vmul.f32 %v414, 2.0
        %v1983 = vmul.f32 %v518, 2.0
        %v1984 = vmul.f32 %v622, 2.0
        %v1985 = vmul.f32 %v726, 2.0
        %v1986 = vmul.f32 %v1982, %v829
        %v1987 = vmul.f32 %v1983, %v932
        %v1988 = vmul.f32 %v1984, %v1035
        %v1989 = vmul.f32 %v1985, %v1138
        %v1990 = vmul.f32 %v829, %v829
        %v1991 = vmul.f32 %v932, %v932
        %v1992 = vmul.f32 %v1035, %v1035
        %v1993 = vmul.f32 %v1138, %v1138
        %v1994 = vmul.f32 %v414, %v414
        %v1995 = vmul.f32 %v518, %v518
        %v1996 = vmul.f32 %v622, %v622
        %v1997 = vmul.f32 %v726, %v726
        %v1998 = vsub.f32 %v1990, %v1994
        %v1999 = vsub.f32 %v1991, %v1995
        %v2000 = vsub.f32 %v1992, %v1996
        %v2001 = vsub.f32 %v1993, %v1997
        %s2002 = scalar_lea.vmem %s1, 48
        %v2003 = vld [vmem:[%s2002] sm:$0xf]
        %v2004 = vld [vmem:[%s2002 + $0x4] sm:$0xf]
        %v2005 = vld [vmem:[%s2002 + $0x8] sm:$0xf]
        %v2006 = vld [vmem:[%s2002 + $0xc] sm:$0xf]
        %v2011 = vcombine.high %v1986, %v1986
        %v2012 = vcombine.high %v1987, %v1987
        %v2013 = vcombine.high %v1988, %v1988
        %v2014 = vcombine.high %v1989, %v1989
        %v2019 = vpack.c.bf16 %v1986, %v1986
        %v2020 = vpack.c.bf16 %v2011, %v2011
        %v2021 = vpack.c.bf16 %v1987, %v1987
        %v2022 = vpack.c.bf16 %v2012, %v2012
        %v2023 = vpack.c.bf16 %v1988, %v1988
        %v2024 = vpack.c.bf16 %v2013, %v2013
        %v2025 = vpack.c.bf16 %v1989, %v1989
        %v2026 = vpack.c.bf16 %v2014, %v2014
        %v2031 = vunpack.c.l.b16 %v2003
        %v2032 = vunpack.c.l.b16 %v2004
        %v2033 = vunpack.c.l.b16 %v2005
        %v2034 = vunpack.c.l.b16 %v2006
        %v2035 = vpack.c.b16 %v2032, %v2031
        %v2036 = vpack.c.b16 %v2034, %v2033
        %v2038 = vsel %vm1174, %v2035, 0
        %v2041 = vsel %vm1174, %v2036, 0
        %v2044 = vand.u32 %v2019, %v1184
        %v2047 = vand.u32 %v2020, %v1184
        %v2050 = vand.u32 %v2021, %v1184
        %v2053 = vand.u32 %v2022, %v1184
        %v2056 = vand.u32 %v2023, %v1184
        %v2059 = vand.u32 %v2024, %v1184
        %v2062 = vand.u32 %v2025, %v1184
        %v2065 = vand.u32 %v2026, %v1184
        %2067 = vmatprep.subr.bf16.mxu0 %v2047
        %2068 = vmatpush1.bf16.msra.mxu0 %v2044
        %2069 = vmatprep.subr.bf16.mxu0 0
        %2070 = vmatpush1.bf16.msra.mxu0 0
        %2071 = vmatprep.subr.bf16.mxu0 0
        %2072 = vmatpush1.bf16.msra.mxu0 0
        %2073 = vmatprep.subr.bf16.mxu0 0
        %2074 = vmatpush1.bf16.msra.mxu0 0
        %2075 = vmatprep.subr.bf16.mxu0 0
        %2076 = vmatpush1.bf16.msra.mxu0 0
        %2077 = vmatprep.subr.bf16.mxu0 0
        %2078 = vmatpush1.bf16.msra.mxu0 0
        %2079 = vmatprep.subr.bf16.mxu0 0
        %2080 = vmatpush1.bf16.msra.mxu0 0
        %2081 = vmatprep.subr.bf16.mxu0 0
        %2082 = vmatpush1.bf16.msra.mxu0 0
        %2083 = vmatprep.subr.bf16.mxu0 0
        %2084 = vmatpush1.bf16.msra.mxu0 0
        %2085 = vmatprep.subr.bf16.mxu0 0
        %2086 = vmatpush1.bf16.msra.mxu0 0
        %2087 = vmatprep.subr.bf16.mxu0 0
        %2088 = vmatpush1.bf16.msra.mxu0 0
        %2089 = vmatprep.subr.bf16.mxu0 0
        %2090 = vmatpush1.bf16.msra.mxu0 0
        %2091 = vmatprep.subr.bf16.mxu0 0
        %2092 = vmatpush1.bf16.msra.mxu0 0
        %2093 = vmatprep.subr.bf16.mxu0 0
        %2094 = vmatpush1.bf16.msra.mxu0 0
        %2095 = vmatprep.subr.bf16.mxu0 0
        %2096 = vmatpush1.bf16.msra.mxu0 0
        %2097 = vmatprep.subr.bf16.mxu0 0
        %2098 = vmatpush1.bf16.msra.mxu0 0
        %2099 = vmatprep.mubr.bf16.mxu0 0
        %2100 = vmatmul.mubr.bf16.gmra.mrb[0].mxu0 %v2038
        %v2101 = vpop.f32.mrb[0].mxu0
        %v2102 = vadd.f32 0.0, %v2101
        %v2103 = vpop.f32.mrb[0].mxu0
        %v2104 = vadd.f32 0.0, %v2103
        %v2105 = vpop.f32.mrb[0].mxu0
        %v2106 = vadd.f32 0.0, %v2105
        %v2107 = vpop.f32.mrb[0].mxu0
        %v2108 = vadd.f32 0.0, %v2107
        %2109 = vmatprep.mubr.bf16.mxu0 0
        %2110 = vmatmul.mubr.bf16.gmra.mrb[0].mxu0 %v2041
        %v2111 = vpop.f32.mrb[0].mxu0
        %v2112 = vadd.f32 0.0, %v2111
        %v2113 = vpop.f32.mrb[0].mxu0
        %v2114 = vadd.f32 0.0, %v2113
        %v2115 = vpop.f32.mrb[0].mxu0
        %v2116 = vadd.f32 0.0, %v2115
        %v2117 = vpop.f32.mrb[0].mxu0
        %v2118 = vadd.f32 0.0, %v2117
        %2119 = vdwg.mxu0
        %2120 = vmatprep.subr.bf16.mxu0 %v2053
        %2121 = vmatpush1.bf16.msra.mxu0 %v2050
        %2122 = vmatprep.subr.bf16.mxu0 0
        %2123 = vmatpush1.bf16.msra.mxu0 0
        %2124 = vmatprep.subr.bf16.mxu0 0
        %2125 = vmatpush1.bf16.msra.mxu0 0
        %2126 = vmatprep.subr.bf16.mxu0 0
        %2127 = vmatpush1.bf16.msra.mxu0 0
        %2128 = vmatprep.subr.bf16.mxu0 0
        %2129 = vmatpush1.bf16.msra.mxu0 0
        %2130 = vmatprep.subr.bf16.mxu0 0
        %2131 = vmatpush1.bf16.msra.mxu0 0
        %2132 = vmatprep.subr.bf16.mxu0 0
        %2133 = vmatpush1.bf16.msra.mxu0 0
        %2134 = vmatprep.subr.bf16.mxu0 0
        %2135 = vmatpush1.bf16.msra.mxu0 0
        %2136 = vmatprep.subr.bf16.mxu0 0
        %2137 = vmatpush1.bf16.msra.mxu0 0
        %2138 = vmatprep.subr.bf16.mxu0 0
        %2139 = vmatpush1.bf16.msra.mxu0 0
        %2140 = vmatprep.subr.bf16.mxu0 0
        %2141 = vmatpush1.bf16.msra.mxu0 0
        %2142 = vmatprep.subr.bf16.mxu0 0
        %2143 = vmatpush1.bf16.msra.mxu0 0
        %2144 = vmatprep.subr.bf16.mxu0 0
        %2145 = vmatpush1.bf16.msra.mxu0 0
        %2146 = vmatprep.subr.bf16.mxu0 0
        %2147 = vmatpush1.bf16.msra.mxu0 0
        %2148 = vmatprep.subr.bf16.mxu0 0
        %2149 = vmatpush1.bf16.msra.mxu0 0
        %2150 = vmatprep.subr.bf16.mxu0 0
        %2151 = vmatpush1.bf16.msra.mxu0 0
        %2152 = vmatprep.mubr.bf16.mxu0 0
        %2153 = vmatmul.mubr.bf16.gmra.mrb[0].mxu0 %v2038
        %v2154 = vpop.f32.mrb[0].mxu0
        %v2155 = vadd.f32 0.0, %v2154
        %v2156 = vpop.f32.mrb[0].mxu0
        %v2157 = vadd.f32 0.0, %v2156
        %v2158 = vpop.f32.mrb[0].mxu0
        %v2159 = vadd.f32 0.0, %v2158
        %v2160 = vpop.f32.mrb[0].mxu0
        %v2161 = vadd.f32 0.0, %v2160
        %2162 = vmatprep.mubr.bf16.mxu0 0
        %2163 = vmatmul.mubr.bf16.gmra.mrb[0].mxu0 %v2041
        %v2164 = vpop.f32.mrb[0].mxu0
        %v2165 = vadd.f32 0.0, %v2164
        %v2166 = vpop.f32.mrb[0].mxu0
        %v2167 = vadd.f32 0.0, %v2166
        %v2168 = vpop.f32.mrb[0].mxu0
        %v2169 = vadd.f32 0.0, %v2168
        %v2170 = vpop.f32.mrb[0].mxu0
        %v2171 = vadd.f32 0.0, %v2170
        %2172 = vdwg.mxu0
        %2173 = vmatprep.subr.bf16.mxu0 %v2059
        %2174 = vmatpush1.bf16.msra.mxu0 %v2056
        %2175 = vmatprep.subr.bf16.mxu0 0
        %2176 = vmatpush1.bf16.msra.mxu0 0
        %2177 = vmatprep.subr.bf16.mxu0 0
        %2178 = vmatpush1.bf16.msra.mxu0 0
        %2179 = vmatprep.subr.bf16.mxu0 0
        %2180 = vmatpush1.bf16.msra.mxu0 0
        %2181 = vmatprep.subr.bf16.mxu0 0
        %2182 = vmatpush1.bf16.msra.mxu0 0
        %2183 = vmatprep.subr.bf16.mxu0 0
        %2184 = vmatpush1.bf16.msra.mxu0 0
        %2185 = vmatprep.subr.bf16.mxu0 0
        %2186 = vmatpush1.bf16.msra.mxu0 0
        %2187 = vmatprep.subr.bf16.mxu0 0
        %2188 = vmatpush1.bf16.msra.mxu0 0
        %2189 = vmatprep.subr.bf16.mxu0 0
        %2190 = vmatpush1.bf16.msra.mxu0 0
        %2191 = vmatprep.subr.bf16.mxu0 0
        %2192 = vmatpush1.bf16.msra.mxu0 0
        %2193 = vmatprep.subr.bf16.mxu0 0
        %2194 = vmatpush1.bf16.msra.mxu0 0
        %2195 = vmatprep.subr.bf16.mxu0 0
        %2196 = vmatpush1.bf16.msra.mxu0 0
        %2197 = vmatprep.subr.bf16.mxu0 0
        %2198 = vmatpush1.bf16.msra.mxu0 0
        %2199 = vmatprep.subr.bf16.mxu0 0
        %2200 = vmatpush1.bf16.msra.mxu0 0
        %2201 = vmatprep.subr.bf16.mxu0 0
        %2202 = vmatpush1.bf16.msra.mxu0 0
        %2203 = vmatprep.subr.bf16.mxu0 0
        %2204 = vmatpush1.bf16.msra.mxu0 0
        %2205 = vmatprep.mubr.bf16.mxu0 0
        %2206 = vmatmul.mubr.bf16.gmra.mrb[0].mxu0 %v2038
        %v2207 = vpop.f32.mrb[0].mxu0
        %v2208 = vadd.f32 0.0, %v2207
        %v2209 = vpop.f32.mrb[0].mxu0
        %v2210 = vadd.f32 0.0, %v2209
        %v2211 = vpop.f32.mrb[0].mxu0
        %v2212 = vadd.f32 0.0, %v2211
        %v2213 = vpop.f32.mrb[0].mxu0
        %v2214 = vadd.f32 0.0, %v2213
        %2215 = vmatprep.mubr.bf16.mxu0 0
        %2216 = vmatmul.mubr.bf16.gmra.mrb[0].mxu0 %v2041
        %v2217 = vpop.f32.mrb[0].mxu0
        %v2218 = vadd.f32 0.0, %v2217
        %v2219 = vpop.f32.mrb[0].mxu0
        %v2220 = vadd.f32 0.0, %v2219
        %v2221 = vpop.f32.mrb[0].mxu0
        %v2222 = vadd.f32 0.0, %v2221
        %v2223 = vpop.f32.mrb[0].mxu0
        %v2224 = vadd.f32 0.0, %v2223
        %2225 = vdwg.mxu0
        %2226 = vmatprep.subr.bf16.mxu0 %v2065
        %2227 = vmatpush1.bf16.msra.mxu0 %v2062
        %2228 = vmatprep.subr.bf16.mxu0 0
        %2229 = vmatpush1.bf16.msra.mxu0 0
        %2230 = vmatprep.subr.bf16.mxu0 0
        %2231 = vmatpush1.bf16.msra.mxu0 0
        %2232 = vmatprep.subr.bf16.mxu0 0
        %2233 = vmatpush1.bf16.msra.mxu0 0
        %2234 = vmatprep.subr.bf16.mxu0 0
        %2235 = vmatpush1.bf16.msra.mxu0 0
        %2236 = vmatprep.subr.bf16.mxu0 0
        %2237 = vmatpush1.bf16.msra.mxu0 0
        %2238 = vmatprep.subr.bf16.mxu0 0
        %2239 = vmatpush1.bf16.msra.mxu0 0
        %2240 = vmatprep.subr.bf16.mxu0 0
        %2241 = vmatpush1.bf16.msra.mxu0 0
        %2242 = vmatprep.subr.bf16.mxu0 0
        %2243 = vmatpush1.bf16.msra.mxu0 0
        %2244 = vmatprep.subr.bf16.mxu0 0
        %2245 = vmatpush1.bf16.msra.mxu0 0
        %2246 = vmatprep.subr.bf16.mxu0 0
        %2247 = vmatpush1.bf16.msra.mxu0 0
        %2248 = vmatprep.subr.bf16.mxu0 0
        %2249 = vmatpush1.bf16.msra.mxu0 0
        %2250 = vmatprep.subr.bf16.mxu0 0
        %2251 = vmatpush1.bf16.msra.mxu0 0
        %2252 = vmatprep.subr.bf16.mxu0 0
        %2253 = vmatpush1.bf16.msra.mxu0 0
        %2254 = vmatprep.subr.bf16.mxu0 0
        %2255 = vmatpush1.bf16.msra.mxu0 0
        %2256 = vmatprep.subr.bf16.mxu0 0
        %2257 = vmatpush1.bf16.msra.mxu0 0
        %2258 = vmatprep.mubr.bf16.mxu0 0
        %2259 = vmatmul.mubr.bf16.gmra.mrb[0].mxu0 %v2038
        %v2260 = vpop.f32.mrb[0].mxu0
        %v2261 = vadd.f32 0.0, %v2260
        %v2262 = vpop.f32.mrb[0].mxu0
        %v2263 = vadd.f32 0.0, %v2262
        %v2264 = vpop.f32.mrb[0].mxu0
        %v2265 = vadd.f32 0.0, %v2264
        %v2266 = vpop.f32.mrb[0].mxu0
        %v2267 = vadd.f32 0.0, %v2266
        %2268 = vmatprep.mubr.bf16.mxu0 0
        %2269 = vmatmul.mubr.bf16.gmra.mrb[0].mxu0 %v2041
        %v2270 = vpop.f32.mrb[0].mxu0
        %v2271 = vadd.f32 0.0, %v2270
        %v2272 = vpop.f32.mrb[0].mxu0
        %v2273 = vadd.f32 0.0, %v2272
        %v2274 = vpop.f32.mrb[0].mxu0
        %v2275 = vadd.f32 0.0, %v2274
        %v2276 = vpop.f32.mrb[0].mxu0
        %v2277 = vadd.f32 0.0, %v2276
        %2278 = vdwg.mxu0
        %v2279 = vadd.f32 %v1950, %v2102
        %v2280 = vadd.f32 %v1951, %v2104
        %v2281 = vadd.f32 %v1952, %v2155
        %v2282 = vadd.f32 %v1953, %v2157
        %v2283 = vadd.f32 %v1954, %v2208
        %v2284 = vadd.f32 %v1955, %v2210
        %v2285 = vadd.f32 %v1956, %v2261
        %v2286 = vadd.f32 %v1957, %v2263
        %v2287 = vadd.f32 %v1958, %v2106
        %v2288 = vadd.f32 %v1959, %v2108
        %v2289 = vadd.f32 %v1960, %v2159
        %v2290 = vadd.f32 %v1961, %v2161
        %v2291 = vadd.f32 %v1962, %v2212
        %v2292 = vadd.f32 %v1963, %v2214
        %v2293 = vadd.f32 %v1964, %v2265
        %v2294 = vadd.f32 %v1965, %v2267
        %v2295 = vadd.f32 %v1966, %v2112
        %v2296 = vadd.f32 %v1967, %v2114
        %v2297 = vadd.f32 %v1968, %v2165
        %v2298 = vadd.f32 %v1969, %v2167
        %v2299 = vadd.f32 %v1970, %v2218
        %v2300 = vadd.f32 %v1971, %v2220
        %v2301 = vadd.f32 %v1972, %v2271
        %v2302 = vadd.f32 %v1973, %v2273
        %v2303 = vadd.f32 %v1974, %v2116
        %v2304 = vadd.f32 %v1975, %v2118
        %v2305 = vadd.f32 %v1976, %v2169
        %v2306 = vadd.f32 %v1977, %v2171
        %v2307 = vadd.f32 %v1978, %v2222
        %v2308 = vadd.f32 %v1979, %v2224
        %v2309 = vadd.f32 %v1980, %v2275
        %v2310 = vadd.f32 %v1981, %v2277
        %s2311 = scalar_lea.vmem %s1, 64
        %v2312 = vld [vmem:[%s2311] sm:$0xf]
        %v2313 = vld [vmem:[%s2311 + $0x4] sm:$0xf]
        %v2314 = vld [vmem:[%s2311 + $0x8] sm:$0xf]
        %v2315 = vld [vmem:[%s2311 + $0xc] sm:$0xf]
        %v2320 = vcombine.high %v1998, %v1998
        %v2321 = vcombine.high %v1999, %v1999
        %v2322 = vcombine.high %v2000, %v2000
        %v2323 = vcombine.high %v2001, %v2001
        %v2328 = vpack.c.bf16 %v1998, %v1998
        %v2329 = vpack.c.bf16 %v2320, %v2320
        %v2330 = vpack.c.bf16 %v1999, %v1999
        %v2331 = vpack.c.bf16 %v2321, %v2321
        %v2332 = vpack.c.bf16 %v2000, %v2000
        %v2333 = vpack.c.bf16 %v2322, %v2322
        %v2334 = vpack.c.bf16 %v2001, %v2001
        %v2335 = vpack.c.bf16 %v2323, %v2323
        %v2340 = vunpack.c.l.b16 %v2312
        %v2341 = vunpack.c.l.b16 %v2313
        %v2342 = vunpack.c.l.b16 %v2314
        %v2343 = vunpack.c.l.b16 %v2315
        %v2344 = vpack.c.b16 %v2341, %v2340
        %v2345 = vpack.c.b16 %v2343, %v2342
        %v2347 = vsel %vm1174, %v2344, 0
        %v2350 = vsel %vm1174, %v2345, 0
        %v2353 = vand.u32 %v2328, %v1184
        %v2356 = vand.u32 %v2329, %v1184
        %v2359 = vand.u32 %v2330, %v1184
        %v2362 = vand.u32 %v2331, %v1184
        %v2365 = vand.u32 %v2332, %v1184
        %v2368 = vand.u32 %v2333, %v1184
        %v2371 = vand.u32 %v2334, %v1184
        %v2374 = vand.u32 %v2335, %v1184
        %2376 = vmatprep.subr.bf16.mxu0 %v2356
        %2377 = vmatpush1.bf16.msra.mxu0 %v2353
        %2378 = vmatprep.subr.bf16.mxu0 0
        %2379 = vmatpush1.bf16.msra.mxu0 0
        %2380 = vmatprep.subr.bf16.mxu0 0
        %2381 = vmatpush1.bf16.msra.mxu0 0
        %2382 = vmatprep.subr.bf16.mxu0 0
        %2383 = vmatpush1.bf16.msra.mxu0 0
        %2384 = vmatprep.subr.bf16.mxu0 0
        %2385 = vmatpush1.bf16.msra.mxu0 0
        %2386 = vmatprep.subr.bf16.mxu0 0
        %2387 = vmatpush1.bf16.msra.mxu0 0
        %2388 = vmatprep.subr.bf16.mxu0 0
        %2389 = vmatpush1.bf16.msra.mxu0 0
        %2390 = vmatprep.subr.bf16.mxu0 0
        %2391 = vmatpush1.bf16.msra.mxu0 0
        %2392 = vmatprep.subr.bf16.mxu0 0
        %2393 = vmatpush1.bf16.msra.mxu0 0
        %2394 = vmatprep.subr.bf16.mxu0 0
        %2395 = vmatpush1.bf16.msra.mxu0 0
        %2396 = vmatprep.subr.bf16.mxu0 0
        %2397 = vmatpush1.bf16.msra.mxu0 0
        %2398 = vmatprep.subr.bf16.mxu0 0
        %2399 = vmatpush1.bf16.msra.mxu0 0
        %2400 = vmatprep.subr.bf16.mxu0 0
        %2401 = vmatpush1.bf16.msra.mxu0 0
        %2402 = vmatprep.subr.bf16.mxu0 0
        %2403 = vmatpush1.bf16.msra.mxu0 0
        %2404 = vmatprep.subr.bf16.mxu0 0
        %2405 = vmatpush1.bf16.msra.mxu0 0
        %2406 = vmatprep.subr.bf16.mxu0 0
        %2407 = vmatpush1.bf16.msra.mxu0 0
        %2408 = vmatprep.mubr.bf16.mxu0 0
        %2409 = vmatmul.mubr.bf16.gmra.mrb[0].mxu0 %v2347
        %v2410 = vpop.f32.mrb[0].mxu0
        %v2411 = vadd.f32 0.0, %v2410
        %v2412 = vpop.f32.mrb[0].mxu0
        %v2413 = vadd.f32 0.0, %v2412
        %v2414 = vpop.f32.mrb[0].mxu0
        %v2415 = vadd.f32 0.0, %v2414
        %v2416 = vpop.f32.mrb[0].mxu0
        %v2417 = vadd.f32 0.0, %v2416
        %2418 = vmatprep.mubr.bf16.mxu0 0
        %2419 = vmatmul.mubr.bf16.gmra.mrb[0].mxu0 %v2350
        %v2420 = vpop.f32.mrb[0].mxu0
        %v2421 = vadd.f32 0.0, %v2420
        %v2422 = vpop.f32.mrb[0].mxu0
        %v2423 = vadd.f32 0.0, %v2422
        %v2424 = vpop.f32.mrb[0].mxu0
        %v2425 = vadd.f32 0.0, %v2424
        %v2426 = vpop.f32.mrb[0].mxu0
        %v2427 = vadd.f32 0.0, %v2426
        %2428 = vdwg.mxu0
        %2429 = vmatprep.subr.bf16.mxu0 %v2362
        %2430 = vmatpush1.bf16.msra.mxu0 %v2359
        %2431 = vmatprep.subr.bf16.mxu0 0
        %2432 = vmatpush1.bf16.msra.mxu0 0
        %2433 = vmatprep.subr.bf16.mxu0 0
        %2434 = vmatpush1.bf16.msra.mxu0 0
        %2435 = vmatprep.subr.bf16.mxu0 0
        %2436 = vmatpush1.bf16.msra.mxu0 0
        %2437 = vmatprep.subr.bf16.mxu0 0
        %2438 = vmatpush1.bf16.msra.mxu0 0
        %2439 = vmatprep.subr.bf16.mxu0 0
        %2440 = vmatpush1.bf16.msra.mxu0 0
        %2441 = vmatprep.subr.bf16.mxu0 0
        %2442 = vmatpush1.bf16.msra.mxu0 0
        %2443 = vmatprep.subr.bf16.mxu0 0
        %2444 = vmatpush1.bf16.msra.mxu0 0
        %2445 = vmatprep.subr.bf16.mxu0 0
        %2446 = vmatpush1.bf16.msra.mxu0 0
        %2447 = vmatprep.subr.bf16.mxu0 0
        %2448 = vmatpush1.bf16.msra.mxu0 0
        %2449 = vmatprep.subr.bf16.mxu0 0
        %2450 = vmatpush1.bf16.msra.mxu0 0
        %2451 = vmatprep.subr.bf16.mxu0 0
        %2452 = vmatpush1.bf16.msra.mxu0 0
        %2453 = vmatprep.subr.bf16.mxu0 0
        %2454 = vmatpush1.bf16.msra.mxu0 0
        %2455 = vmatprep.subr.bf16.mxu0 0
        %2456 = vmatpush1.bf16.msra.mxu0 0
        %2457 = vmatprep.subr.bf16.mxu0 0
        %2458 = vmatpush1.bf16.msra.mxu0 0
        %2459 = vmatprep.subr.bf16.mxu0 0
        %2460 = vmatpush1.bf16.msra.mxu0 0
        %2461 = vmatprep.mubr.bf16.mxu0 0
        %2462 = vmatmul.mubr.bf16.gmra.mrb[0].mxu0 %v2347
        %v2463 = vpop.f32.mrb[0].mxu0
        %v2464 = vadd.f32 0.0, %v2463
        %v2465 = vpop.f32.mrb[0].mxu0
        %v2466 = vadd.f32 0.0, %v2465
        %v2467 = vpop.f32.mrb[0].mxu0
        %v2468 = vadd.f32 0.0, %v2467
        %v2469 = vpop.f32.mrb[0].mxu0
        %v2470 = vadd.f32 0.0, %v2469
        %2471 = vmatprep.mubr.bf16.mxu0 0
        %2472 = vmatmul.mubr.bf16.gmra.mrb[0].mxu0 %v2350
        %v2473 = vpop.f32.mrb[0].mxu0
        %v2474 = vadd.f32 0.0, %v2473
        %v2475 = vpop.f32.mrb[0].mxu0
        %v2476 = vadd.f32 0.0, %v2475
        %v2477 = vpop.f32.mrb[0].mxu0
        %v2478 = vadd.f32 0.0, %v2477
        %v2479 = vpop.f32.mrb[0].mxu0
        %v2480 = vadd.f32 0.0, %v2479
        %2481 = vdwg.mxu0
        %2482 = vmatprep.subr.bf16.mxu0 %v2368
        %2483 = vmatpush1.bf16.msra.mxu0 %v2365
        %2484 = vmatprep.subr.bf16.mxu0 0
        %2485 = vmatpush1.bf16.msra.mxu0 0
        %2486 = vmatprep.subr.bf16.mxu0 0
        %2487 = vmatpush1.bf16.msra.mxu0 0
        %2488 = vmatprep.subr.bf16.mxu0 0
        %2489 = vmatpush1.bf16.msra.mxu0 0
        %2490 = vmatprep.subr.bf16.mxu0 0
        %2491 = vmatpush1.bf16.msra.mxu0 0
        %2492 = vmatprep.subr.bf16.mxu0 0
        %2493 = vmatpush1.bf16.msra.mxu0 0
        %2494 = vmatprep.subr.bf16.mxu0 0
        %2495 = vmatpush1.bf16.msra.mxu0 0
        %2496 = vmatprep.subr.bf16.mxu0 0
        %2497 = vmatpush1.bf16.msra.mxu0 0
        %2498 = vmatprep.subr.bf16.mxu0 0
        %2499 = vmatpush1.bf16.msra.mxu0 0
        %2500 = vmatprep.subr.bf16.mxu0 0
        %2501 = vmatpush1.bf16.msra.mxu0 0
        %2502 = vmatprep.subr.bf16.mxu0 0
        %2503 = vmatpush1.bf16.msra.mxu0 0
        %2504 = vmatprep.subr.bf16.mxu0 0
        %2505 = vmatpush1.bf16.msra.mxu0 0
        %2506 = vmatprep.subr.bf16.mxu0 0
        %2507 = vmatpush1.bf16.msra.mxu0 0
        %2508 = vmatprep.subr.bf16.mxu0 0
        %2509 = vmatpush1.bf16.msra.mxu0 0
        %2510 = vmatprep.subr.bf16.mxu0 0
        %2511 = vmatpush1.bf16.msra.mxu0 0
        %2512 = vmatprep.subr.bf16.mxu0 0
        %2513 = vmatpush1.bf16.msra.mxu0 0
        %2514 = vmatprep.mubr.bf16.mxu0 0
        %2515 = vmatmul.mubr.bf16.gmra.mrb[0].mxu0 %v2347
        %v2516 = vpop.f32.mrb[0].mxu0
        %v2517 = vadd.f32 0.0, %v2516
        %v2518 = vpop.f32.mrb[0].mxu0
        %v2519 = vadd.f32 0.0, %v2518
        %v2520 = vpop.f32.mrb[0].mxu0
        %v2521 = vadd.f32 0.0, %v2520
        %v2522 = vpop.f32.mrb[0].mxu0
        %v2523 = vadd.f32 0.0, %v2522
        %2524 = vmatprep.mubr.bf16.mxu0 0
        %2525 = vmatmul.mubr.bf16.gmra.mrb[0].mxu0 %v2350
        %v2526 = vpop.f32.mrb[0].mxu0
        %v2527 = vadd.f32 0.0, %v2526
        %v2528 = vpop.f32.mrb[0].mxu0
        %v2529 = vadd.f32 0.0, %v2528
        %v2530 = vpop.f32.mrb[0].mxu0
        %v2531 = vadd.f32 0.0, %v2530
        %v2532 = vpop.f32.mrb[0].mxu0
        %v2533 = vadd.f32 0.0, %v2532
        %2534 = vdwg.mxu0
        %2535 = vmatprep.subr.bf16.mxu0 %v2374
        %2536 = vmatpush1.bf16.msra.mxu0 %v2371
        %2537 = vmatprep.subr.bf16.mxu0 0
        %2538 = vmatpush1.bf16.msra.mxu0 0
        %2539 = vmatprep.subr.bf16.mxu0 0
        %2540 = vmatpush1.bf16.msra.mxu0 0
        %2541 = vmatprep.subr.bf16.mxu0 0
        %2542 = vmatpush1.bf16.msra.mxu0 0
        %2543 = vmatprep.subr.bf16.mxu0 0
        %2544 = vmatpush1.bf16.msra.mxu0 0
        %2545 = vmatprep.subr.bf16.mxu0 0
        %2546 = vmatpush1.bf16.msra.mxu0 0
        %2547 = vmatprep.subr.bf16.mxu0 0
        %2548 = vmatpush1.bf16.msra.mxu0 0
        %2549 = vmatprep.subr.bf16.mxu0 0
        %2550 = vmatpush1.bf16.msra.mxu0 0
        %2551 = vmatprep.subr.bf16.mxu0 0
        %2552 = vmatpush1.bf16.msra.mxu0 0
        %2553 = vmatprep.subr.bf16.mxu0 0
        %2554 = vmatpush1.bf16.msra.mxu0 0
        %2555 = vmatprep.subr.bf16.mxu0 0
        %2556 = vmatpush1.bf16.msra.mxu0 0
        %2557 = vmatprep.subr.bf16.mxu0 0
        %2558 = vmatpush1.bf16.msra.mxu0 0
        %2559 = vmatprep.subr.bf16.mxu0 0
        %2560 = vmatpush1.bf16.msra.mxu0 0
        %2561 = vmatprep.subr.bf16.mxu0 0
        %2562 = vmatpush1.bf16.msra.mxu0 0
        %2563 = vmatprep.subr.bf16.mxu0 0
        %2564 = vmatpush1.bf16.msra.mxu0 0
        %2565 = vmatprep.subr.bf16.mxu0 0
        %2566 = vmatpush1.bf16.msra.mxu0 0
        %2567 = vmatprep.mubr.bf16.mxu0 0
        %2568 = vmatmul.mubr.bf16.gmra.mrb[0].mxu0 %v2347
        %v2569 = vpop.f32.mrb[0].mxu0
        %v2570 = vadd.f32 0.0, %v2569
        %v2571 = vpop.f32.mrb[0].mxu0
        %v2572 = vadd.f32 0.0, %v2571
        %v2573 = vpop.f32.mrb[0].mxu0
        %v2574 = vadd.f32 0.0, %v2573
        %v2575 = vpop.f32.mrb[0].mxu0
        %v2576 = vadd.f32 0.0, %v2575
        %2577 = vmatprep.mubr.bf16.mxu0 0
        %2578 = vmatmul.mubr.bf16.gmra.mrb[0].mxu0 %v2350
        %v2579 = vpop.f32.mrb[0].mxu0
        %v2580 = vadd.f32 0.0, %v2579
        %v2581 = vpop.f32.mrb[0].mxu0
        %v2582 = vadd.f32 0.0, %v2581
        %v2583 = vpop.f32.mrb[0].mxu0
        %v2584 = vadd.f32 0.0, %v2583
        %v2585 = vpop.f32.mrb[0].mxu0
        %v2586 = vadd.f32 0.0, %v2585
        %2587 = vdwg.mxu0
        %v2588 = vadd.f32 %v2279, %v2411
        %v2589 = vadd.f32 %v2280, %v2413
        %v2590 = vadd.f32 %v2281, %v2464
        %v2591 = vadd.f32 %v2282, %v2466
        %v2592 = vadd.f32 %v2283, %v2517
        %v2593 = vadd.f32 %v2284, %v2519
        %v2594 = vadd.f32 %v2285, %v2570
        %v2595 = vadd.f32 %v2286, %v2572
        %v2596 = vadd.f32 %v2287, %v2415
        %v2597 = vadd.f32 %v2288, %v2417
        %v2598 = vadd.f32 %v2289, %v2468
        %v2599 = vadd.f32 %v2290, %v2470
        %v2600 = vadd.f32 %v2291, %v2521
        %v2601 = vadd.f32 %v2292, %v2523
        %v2602 = vadd.f32 %v2293, %v2574
        %v2603 = vadd.f32 %v2294, %v2576
        %v2604 = vadd.f32 %v2295, %v2421
        %v2605 = vadd.f32 %v2296, %v2423
        %v2606 = vadd.f32 %v2297, %v2474
        %v2607 = vadd.f32 %v2298, %v2476
        %v2608 = vadd.f32 %v2299, %v2527
        %v2609 = vadd.f32 %v2300, %v2529
        %v2610 = vadd.f32 %v2301, %v2580
        %v2611 = vadd.f32 %v2302, %v2582
        %v2612 = vadd.f32 %v2303, %v2425
        %v2613 = vadd.f32 %v2304, %v2427
        %v2614 = vadd.f32 %v2305, %v2478
        %v2615 = vadd.f32 %v2306, %v2480
        %v2616 = vadd.f32 %v2307, %v2531
        %v2617 = vadd.f32 %v2308, %v2533
        %v2618 = vadd.f32 %v2309, %v2584
        %v2619 = vadd.f32 %v2310, %v2586
        %v2620 = vld [vmem:[%s2] sm:$0xff]
        %v2621 = vld [vmem:[%s2 + $0x8] sm:$0xff]
        %v2622 = vld [vmem:[%s2 + $0x10] sm:$0xff]
        %v2623 = vld [vmem:[%s2 + $0x18] sm:$0xff]
        %2625 = vset.pattern.permute.xlu0 0
        %2626 = vperm.xlu0 %2625, %v2620
        %v2627 = vpop.permute.xlu0 %2626
        %2630 = vset.pattern.permute.xlu0 0
        %2631 = vperm.xlu0 %2630, %v2621
        %v2632 = vpop.permute.xlu0 %2631
        %2635 = vset.pattern.permute.xlu0 0
        %2636 = vperm.xlu0 %2635, %v2622
        %v2637 = vpop.permute.xlu0 %2636
        %2640 = vset.pattern.permute.xlu0 0
        %2641 = vperm.xlu0 %2640, %v2623
        %v2642 = vpop.permute.xlu0 %2641
        %v2644 = vadd.f32 %v2588, %v2627
        %v2645 = vadd.f32 %v2589, %v2627
        %v2646 = vadd.f32 %v2590, %v2627
        %v2647 = vadd.f32 %v2591, %v2627
        %v2648 = vadd.f32 %v2592, %v2627
        %v2649 = vadd.f32 %v2593, %v2627
        %v2650 = vadd.f32 %v2594, %v2627
        %v2651 = vadd.f32 %v2595, %v2627
        %v2652 = vadd.f32 %v2596, %v2632
        %v2653 = vadd.f32 %v2597, %v2632
        %v2654 = vadd.f32 %v2598, %v2632
        %v2655 = vadd.f32 %v2599, %v2632
        %v2656 = vadd.f32 %v2600, %v2632
        %v2657 = vadd.f32 %v2601, %v2632
        %v2658 = vadd.f32 %v2602, %v2632
        %v2659 = vadd.f32 %v2603, %v2632
        %v2660 = vadd.f32 %v2604, %v2637
        %v2661 = vadd.f32 %v2605, %v2637
        %v2662 = vadd.f32 %v2606, %v2637
        %v2663 = vadd.f32 %v2607, %v2637
        %v2664 = vadd.f32 %v2608, %v2637
        %v2665 = vadd.f32 %v2609, %v2637
        %v2666 = vadd.f32 %v2610, %v2637
        %v2667 = vadd.f32 %v2611, %v2637
        %v2668 = vadd.f32 %v2612, %v2642
        %v2669 = vadd.f32 %v2613, %v2642
        %v2670 = vadd.f32 %v2614, %v2642
        %v2671 = vadd.f32 %v2615, %v2642
        %v2672 = vadd.f32 %v2616, %v2642
        %v2673 = vadd.f32 %v2617, %v2642
        %v2674 = vadd.f32 %v2618, %v2642
        %v2675 = vadd.f32 %v2619, %v2642
        %v2676 = vmul.f32 %v2644, 100.0
        %v2677 = vmul.f32 %v2645, 100.0
        %v2678 = vmul.f32 %v2646, 100.0
        %v2679 = vmul.f32 %v2647, 100.0
        %v2680 = vmul.f32 %v2648, 100.0
        %v2681 = vmul.f32 %v2649, 100.0
        %v2682 = vmul.f32 %v2650, 100.0
        %v2683 = vmul.f32 %v2651, 100.0
        %v2684 = vmul.f32 %v2652, 100.0
        %v2685 = vmul.f32 %v2653, 100.0
        %v2686 = vmul.f32 %v2654, 100.0
        %v2687 = vmul.f32 %v2655, 100.0
        %v2688 = vmul.f32 %v2656, 100.0
        %v2689 = vmul.f32 %v2657, 100.0
        %v2690 = vmul.f32 %v2658, 100.0
        %v2691 = vmul.f32 %v2659, 100.0
        %v2692 = vmul.f32 %v2660, 100.0
        %v2693 = vmul.f32 %v2661, 100.0
        %v2694 = vmul.f32 %v2662, 100.0
        %v2695 = vmul.f32 %v2663, 100.0
        %v2696 = vmul.f32 %v2664, 100.0
        %v2697 = vmul.f32 %v2665, 100.0
        %v2698 = vmul.f32 %v2666, 100.0
        %v2699 = vmul.f32 %v2667, 100.0
        %v2700 = vmul.f32 %v2668, 100.0
        %v2701 = vmul.f32 %v2669, 100.0
        %v2702 = vmul.f32 %v2670, 100.0
        %v2703 = vmul.f32 %v2671, 100.0
        %v2704 = vmul.f32 %v2672, 100.0
        %v2705 = vmul.f32 %v2673, 100.0
        %v2706 = vmul.f32 %v2674, 100.0
        %v2707 = vmul.f32 %v2675, 100.0
        %v2708 = vmin.f32 %v2676, 20.0
        %v2709 = vmin.f32 %v2677, 20.0
        %v2710 = vmin.f32 %v2678, 20.0
        %v2711 = vmin.f32 %v2679, 20.0
        %v2712 = vmin.f32 %v2680, 20.0
        %v2713 = vmin.f32 %v2681, 20.0
        %v2714 = vmin.f32 %v2682, 20.0
        %v2715 = vmin.f32 %v2683, 20.0
        %v2716 = vmin.f32 %v2684, 20.0
        %v2717 = vmin.f32 %v2685, 20.0
        %v2718 = vmin.f32 %v2686, 20.0
        %v2719 = vmin.f32 %v2687, 20.0
        %v2720 = vmin.f32 %v2688, 20.0
        %v2721 = vmin.f32 %v2689, 20.0
        %v2722 = vmin.f32 %v2690, 20.0
        %v2723 = vmin.f32 %v2691, 20.0
        %v2724 = vmin.f32 %v2692, 20.0
        %v2725 = vmin.f32 %v2693, 20.0
        %v2726 = vmin.f32 %v2694, 20.0
        %v2727 = vmin.f32 %v2695, 20.0
        %v2728 = vmin.f32 %v2696, 20.0
        %v2729 = vmin.f32 %v2697, 20.0
        %v2730 = vmin.f32 %v2698, 20.0
        %v2731 = vmin.f32 %v2699, 20.0
        %v2732 = vmin.f32 %v2700, 20.0
        %v2733 = vmin.f32 %v2701, 20.0
        %v2734 = vmin.f32 %v2702, 20.0
        %v2735 = vmin.f32 %v2703, 20.0
        %v2736 = vmin.f32 %v2704, 20.0
        %v2737 = vmin.f32 %v2705, 20.0
        %v2738 = vmin.f32 %v2706, 20.0
        %v2739 = vmin.f32 %v2707, 20.0
        %vm2740 = vcmp.gt.f32.partialorder %v2676, 20.0
        %vm2741 = vcmp.gt.f32.partialorder %v2677, 20.0
        %vm2742 = vcmp.gt.f32.partialorder %v2678, 20.0
        %vm2743 = vcmp.gt.f32.partialorder %v2679, 20.0
        %vm2744 = vcmp.gt.f32.partialorder %v2680, 20.0
        %vm2745 = vcmp.gt.f32.partialorder %v2681, 20.0
        %vm2746 = vcmp.gt.f32.partialorder %v2682, 20.0
        %vm2747 = vcmp.gt.f32.partialorder %v2683, 20.0
        %vm2748 = vcmp.gt.f32.partialorder %v2684, 20.0
        %vm2749 = vcmp.gt.f32.partialorder %v2685, 20.0
        %vm2750 = vcmp.gt.f32.partialorder %v2686, 20.0
        %vm2751 = vcmp.gt.f32.partialorder %v2687, 20.0
        %vm2752 = vcmp.gt.f32.partialorder %v2688, 20.0
        %vm2753 = vcmp.gt.f32.partialorder %v2689, 20.0
        %vm2754 = vcmp.gt.f32.partialorder %v2690, 20.0
        %vm2755 = vcmp.gt.f32.partialorder %v2691, 20.0
        %vm2756 = vcmp.gt.f32.partialorder %v2692, 20.0
        %vm2757 = vcmp.gt.f32.partialorder %v2693, 20.0
        %vm2758 = vcmp.gt.f32.partialorder %v2694, 20.0
        %vm2759 = vcmp.gt.f32.partialorder %v2695, 20.0
        %vm2760 = vcmp.gt.f32.partialorder %v2696, 20.0
        %vm2761 = vcmp.gt.f32.partialorder %v2697, 20.0
        %vm2762 = vcmp.gt.f32.partialorder %v2698, 20.0
        %vm2763 = vcmp.gt.f32.partialorder %v2699, 20.0
        %vm2764 = vcmp.gt.f32.partialorder %v2700, 20.0
        %vm2765 = vcmp.gt.f32.partialorder %v2701, 20.0
        %vm2766 = vcmp.gt.f32.partialorder %v2702, 20.0
        %vm2767 = vcmp.gt.f32.partialorder %v2703, 20.0
        %vm2768 = vcmp.gt.f32.partialorder %v2704, 20.0
        %vm2769 = vcmp.gt.f32.partialorder %v2705, 20.0
        %vm2770 = vcmp.gt.f32.partialorder %v2706, 20.0
        %vm2771 = vcmp.gt.f32.partialorder %v2707, 20.0
        %v2772 = vmul.f32 %v2708, 1.442695
        %v2773 = vpow.pop %v2772
        %v2774 = vmul.f32 %v2709, 1.442695
        %v2775 = vpow.pop %v2774
        %v2776 = vmul.f32 %v2710, 1.442695
        %v2777 = vpow.pop %v2776
        %v2778 = vmul.f32 %v2711, 1.442695
        %v2779 = vpow.pop %v2778
        %v2780 = vmul.f32 %v2712, 1.442695
        %v2781 = vpow.pop %v2780
        %v2782 = vmul.f32 %v2713, 1.442695
        %v2783 = vpow.pop %v2782
        %v2784 = vmul.f32 %v2714, 1.442695
        %v2785 = vpow.pop %v2784
        %v2786 = vmul.f32 %v2715, 1.442695
        %v2787 = vpow.pop %v2786
        %v2788 = vmul.f32 %v2716, 1.442695
        %v2789 = vpow.pop %v2788
        %v2790 = vmul.f32 %v2717, 1.442695
        %v2791 = vpow.pop %v2790
        %v2792 = vmul.f32 %v2718, 1.442695
        %v2793 = vpow.pop %v2792
        %v2794 = vmul.f32 %v2719, 1.442695
        %v2795 = vpow.pop %v2794
        %v2796 = vmul.f32 %v2720, 1.442695
        %v2797 = vpow.pop %v2796
        %v2798 = vmul.f32 %v2721, 1.442695
        %v2799 = vpow.pop %v2798
        %v2800 = vmul.f32 %v2722, 1.442695
        %v2801 = vpow.pop %v2800
        %v2802 = vmul.f32 %v2723, 1.442695
        %v2803 = vpow.pop %v2802
        %v2804 = vmul.f32 %v2724, 1.442695
        %v2805 = vpow.pop %v2804
        %v2806 = vmul.f32 %v2725, 1.442695
        %v2807 = vpow.pop %v2806
        %v2808 = vmul.f32 %v2726, 1.442695
        %v2809 = vpow.pop %v2808
        %v2810 = vmul.f32 %v2727, 1.442695
        %v2811 = vpow.pop %v2810
        %v2812 = vmul.f32 %v2728, 1.442695
        %v2813 = vpow.pop %v2812
        %v2814 = vmul.f32 %v2729, 1.442695
        %v2815 = vpow.pop %v2814
        %v2816 = vmul.f32 %v2730, 1.442695
        %v2817 = vpow.pop %v2816
        %v2818 = vmul.f32 %v2731, 1.442695
        %v2819 = vpow.pop %v2818
        %v2820 = vmul.f32 %v2732, 1.442695
        %v2821 = vpow.pop %v2820
        %v2822 = vmul.f32 %v2733, 1.442695
        %v2823 = vpow.pop %v2822
        %v2824 = vmul.f32 %v2734, 1.442695
        %v2825 = vpow.pop %v2824
        %v2826 = vmul.f32 %v2735, 1.442695
        %v2827 = vpow.pop %v2826
        %v2828 = vmul.f32 %v2736, 1.442695
        %v2829 = vpow.pop %v2828
        %v2830 = vmul.f32 %v2737, 1.442695
        %v2831 = vpow.pop %v2830
        %v2832 = vmul.f32 %v2738, 1.442695
        %v2833 = vpow.pop %v2832
        %v2834 = vmul.f32 %v2739, 1.442695
        %v2835 = vpow.pop %v2834
        %v2836 = vadd.f32 %v2773, 1.0
        %v2837 = vlog2.pop %v2836
        %v2838 = vmul.f32 %v2837, 0.6931472
        %v2839 = vmul.f32 -0.5, %v2773
        %v2840 = vadd.f32 %v2839, 1.0
        %v2841 = vmul.f32 %v2840, %v2773
        %v2842 = vand.u32 2147483647, %v2773
        %vm2843 = vcmp.lt.f32.partialorder %v2842, 0.0004427343
        %v2844 = vsel %vm2843, %v2841, %v2838
        %v2845 = vadd.f32 %v2775, 1.0
        %v2846 = vlog2.pop %v2845
        %v2847 = vmul.f32 %v2846, 0.6931472
        %v2848 = vmul.f32 -0.5, %v2775
        %v2849 = vadd.f32 %v2848, 1.0
        %v2850 = vmul.f32 %v2849, %v2775
        %v2851 = vand.u32 2147483647, %v2775
        %vm2852 = vcmp.lt.f32.partialorder %v2851, 0.0004427343
        %v2853 = vsel %vm2852, %v2850, %v2847
        %v2854 = vadd.f32 %v2777, 1.0
        %v2855 = vlog2.pop %v2854
        %v2856 = vmul.f32 %v2855, 0.6931472
        %v2857 = vmul.f32 -0.5, %v2777
        %v2858 = vadd.f32 %v2857, 1.0
        %v2859 = vmul.f32 %v2858, %v2777
        %v2860 = vand.u32 2147483647, %v2777
        %vm2861 = vcmp.lt.f32.partialorder %v2860, 0.0004427343
        %v2862 = vsel %vm2861, %v2859, %v2856
        %v2863 = vadd.f32 %v2779, 1.0
        %v2864 = vlog2.pop %v2863
        %v2865 = vmul.f32 %v2864, 0.6931472
        %v2866 = vmul.f32 -0.5, %v2779
        %v2867 = vadd.f32 %v2866, 1.0
        %v2868 = vmul.f32 %v2867, %v2779
        %v2869 = vand.u32 2147483647, %v2779
        %vm2870 = vcmp.lt.f32.partialorder %v2869, 0.0004427343
        %v2871 = vsel %vm2870, %v2868, %v2865
        %v2872 = vadd.f32 %v2781, 1.0
        %v2873 = vlog2.pop %v2872
        %v2874 = vmul.f32 %v2873, 0.6931472
        %v2875 = vmul.f32 -0.5, %v2781
        %v2876 = vadd.f32 %v2875, 1.0
        %v2877 = vmul.f32 %v2876, %v2781
        %v2878 = vand.u32 2147483647, %v2781
        %vm2879 = vcmp.lt.f32.partialorder %v2878, 0.0004427343
        %v2880 = vsel %vm2879, %v2877, %v2874
        %v2881 = vadd.f32 %v2783, 1.0
        %v2882 = vlog2.pop %v2881
        %v2883 = vmul.f32 %v2882, 0.6931472
        %v2884 = vmul.f32 -0.5, %v2783
        %v2885 = vadd.f32 %v2884, 1.0
        %v2886 = vmul.f32 %v2885, %v2783
        %v2887 = vand.u32 2147483647, %v2783
        %vm2888 = vcmp.lt.f32.partialorder %v2887, 0.0004427343
        %v2889 = vsel %vm2888, %v2886, %v2883
        %v2890 = vadd.f32 %v2785, 1.0
        %v2891 = vlog2.pop %v2890
        %v2892 = vmul.f32 %v2891, 0.6931472
        %v2893 = vmul.f32 -0.5, %v2785
        %v2894 = vadd.f32 %v2893, 1.0
        %v2895 = vmul.f32 %v2894, %v2785
        %v2896 = vand.u32 2147483647, %v2785
        %vm2897 = vcmp.lt.f32.partialorder %v2896, 0.0004427343
        %v2898 = vsel %vm2897, %v2895, %v2892
        %v2899 = vadd.f32 %v2787, 1.0
        %v2900 = vlog2.pop %v2899
        %v2901 = vmul.f32 %v2900, 0.6931472
        %v2902 = vmul.f32 -0.5, %v2787
        %v2903 = vadd.f32 %v2902, 1.0
        %v2904 = vmul.f32 %v2903, %v2787
        %v2905 = vand.u32 2147483647, %v2787
        %vm2906 = vcmp.lt.f32.partialorder %v2905, 0.0004427343
        %v2907 = vsel %vm2906, %v2904, %v2901
        %v2908 = vadd.f32 %v2789, 1.0
        %v2909 = vlog2.pop %v2908
        %v2910 = vmul.f32 %v2909, 0.6931472
        %v2911 = vmul.f32 -0.5, %v2789
        %v2912 = vadd.f32 %v2911, 1.0
        %v2913 = vmul.f32 %v2912, %v2789
        %v2914 = vand.u32 2147483647, %v2789
        %vm2915 = vcmp.lt.f32.partialorder %v2914, 0.0004427343
        %v2916 = vsel %vm2915, %v2913, %v2910
        %v2917 = vadd.f32 %v2791, 1.0
        %v2918 = vlog2.pop %v2917
        %v2919 = vmul.f32 %v2918, 0.6931472
        %v2920 = vmul.f32 -0.5, %v2791
        %v2921 = vadd.f32 %v2920, 1.0
        %v2922 = vmul.f32 %v2921, %v2791
        %v2923 = vand.u32 2147483647, %v2791
        %vm2924 = vcmp.lt.f32.partialorder %v2923, 0.0004427343
        %v2925 = vsel %vm2924, %v2922, %v2919
        %v2926 = vadd.f32 %v2793, 1.0
        %v2927 = vlog2.pop %v2926
        %v2928 = vmul.f32 %v2927, 0.6931472
        %v2929 = vmul.f32 -0.5, %v2793
        %v2930 = vadd.f32 %v2929, 1.0
        %v2931 = vmul.f32 %v2930, %v2793
        %v2932 = vand.u32 2147483647, %v2793
        %vm2933 = vcmp.lt.f32.partialorder %v2932, 0.0004427343
        %v2934 = vsel %vm2933, %v2931, %v2928
        %v2935 = vadd.f32 %v2795, 1.0
        %v2936 = vlog2.pop %v2935
        %v2937 = vmul.f32 %v2936, 0.6931472
        %v2938 = vmul.f32 -0.5, %v2795
        %v2939 = vadd.f32 %v2938, 1.0
        %v2940 = vmul.f32 %v2939, %v2795
        %v2941 = vand.u32 2147483647, %v2795
        %vm2942 = vcmp.lt.f32.partialorder %v2941, 0.0004427343
        %v2943 = vsel %vm2942, %v2940, %v2937
        %v2944 = vadd.f32 %v2797, 1.0
        %v2945 = vlog2.pop %v2944
        %v2946 = vmul.f32 %v2945, 0.6931472
        %v2947 = vmul.f32 -0.5, %v2797
        %v2948 = vadd.f32 %v2947, 1.0
        %v2949 = vmul.f32 %v2948, %v2797
        %v2950 = vand.u32 2147483647, %v2797
        %vm2951 = vcmp.lt.f32.partialorder %v2950, 0.0004427343
        %v2952 = vsel %vm2951, %v2949, %v2946
        %v2953 = vadd.f32 %v2799, 1.0
        %v2954 = vlog2.pop %v2953
        %v2955 = vmul.f32 %v2954, 0.6931472
        %v2956 = vmul.f32 -0.5, %v2799
        %v2957 = vadd.f32 %v2956, 1.0
        %v2958 = vmul.f32 %v2957, %v2799
        %v2959 = vand.u32 2147483647, %v2799
        %vm2960 = vcmp.lt.f32.partialorder %v2959, 0.0004427343
        %v2961 = vsel %vm2960, %v2958, %v2955
        %v2962 = vadd.f32 %v2801, 1.0
        %v2963 = vlog2.pop %v2962
        %v2964 = vmul.f32 %v2963, 0.6931472
        %v2965 = vmul.f32 -0.5, %v2801
        %v2966 = vadd.f32 %v2965, 1.0
        %v2967 = vmul.f32 %v2966, %v2801
        %v2968 = vand.u32 2147483647, %v2801
        %vm2969 = vcmp.lt.f32.partialorder %v2968, 0.0004427343
        %v2970 = vsel %vm2969, %v2967, %v2964
        %v2971 = vadd.f32 %v2803, 1.0
        %v2972 = vlog2.pop %v2971
        %v2973 = vmul.f32 %v2972, 0.6931472
        %v2974 = vmul.f32 -0.5, %v2803
        %v2975 = vadd.f32 %v2974, 1.0
        %v2976 = vmul.f32 %v2975, %v2803
        %v2977 = vand.u32 2147483647, %v2803
        %vm2978 = vcmp.lt.f32.partialorder %v2977, 0.0004427343
        %v2979 = vsel %vm2978, %v2976, %v2973
        %v2980 = vadd.f32 %v2805, 1.0
        %v2981 = vlog2.pop %v2980
        %v2982 = vmul.f32 %v2981, 0.6931472
        %v2983 = vmul.f32 -0.5, %v2805
        %v2984 = vadd.f32 %v2983, 1.0
        %v2985 = vmul.f32 %v2984, %v2805
        %v2986 = vand.u32 2147483647, %v2805
        %vm2987 = vcmp.lt.f32.partialorder %v2986, 0.0004427343
        %v2988 = vsel %vm2987, %v2985, %v2982
        %v2989 = vadd.f32 %v2807, 1.0
        %v2990 = vlog2.pop %v2989
        %v2991 = vmul.f32 %v2990, 0.6931472
        %v2992 = vmul.f32 -0.5, %v2807
        %v2993 = vadd.f32 %v2992, 1.0
        %v2994 = vmul.f32 %v2993, %v2807
        %v2995 = vand.u32 2147483647, %v2807
        %vm2996 = vcmp.lt.f32.partialorder %v2995, 0.0004427343
        %v2997 = vsel %vm2996, %v2994, %v2991
        %v2998 = vadd.f32 %v2809, 1.0
        %v2999 = vlog2.pop %v2998
        %v3000 = vmul.f32 %v2999, 0.6931472
        %v3001 = vmul.f32 -0.5, %v2809
        %v3002 = vadd.f32 %v3001, 1.0
        %v3003 = vmul.f32 %v3002, %v2809
        %v3004 = vand.u32 2147483647, %v2809
        %vm3005 = vcmp.lt.f32.partialorder %v3004, 0.0004427343
        %v3006 = vsel %vm3005, %v3003, %v3000
        %v3007 = vadd.f32 %v2811, 1.0
        %v3008 = vlog2.pop %v3007
        %v3009 = vmul.f32 %v3008, 0.6931472
        %v3010 = vmul.f32 -0.5, %v2811
        %v3011 = vadd.f32 %v3010, 1.0
        %v3012 = vmul.f32 %v3011, %v2811
        %v3013 = vand.u32 2147483647, %v2811
        %vm3014 = vcmp.lt.f32.partialorder %v3013, 0.0004427343
        %v3015 = vsel %vm3014, %v3012, %v3009
        %v3016 = vadd.f32 %v2813, 1.0
        %v3017 = vlog2.pop %v3016
        %v3018 = vmul.f32 %v3017, 0.6931472
        %v3019 = vmul.f32 -0.5, %v2813
        %v3020 = vadd.f32 %v3019, 1.0
        %v3021 = vmul.f32 %v3020, %v2813
        %v3022 = vand.u32 2147483647, %v2813
        %vm3023 = vcmp.lt.f32.partialorder %v3022, 0.0004427343
        %v3024 = vsel %vm3023, %v3021, %v3018
        %v3025 = vadd.f32 %v2815, 1.0
        %v3026 = vlog2.pop %v3025
        %v3027 = vmul.f32 %v3026, 0.6931472
        %v3028 = vmul.f32 -0.5, %v2815
        %v3029 = vadd.f32 %v3028, 1.0
        %v3030 = vmul.f32 %v3029, %v2815
        %v3031 = vand.u32 2147483647, %v2815
        %vm3032 = vcmp.lt.f32.partialorder %v3031, 0.0004427343
        %v3033 = vsel %vm3032, %v3030, %v3027
        %v3034 = vadd.f32 %v2817, 1.0
        %v3035 = vlog2.pop %v3034
        %v3036 = vmul.f32 %v3035, 0.6931472
        %v3037 = vmul.f32 -0.5, %v2817
        %v3038 = vadd.f32 %v3037, 1.0
        %v3039 = vmul.f32 %v3038, %v2817
        %v3040 = vand.u32 2147483647, %v2817
        %vm3041 = vcmp.lt.f32.partialorder %v3040, 0.0004427343
        %v3042 = vsel %vm3041, %v3039, %v3036
        %v3043 = vadd.f32 %v2819, 1.0
        %v3044 = vlog2.pop %v3043
        %v3045 = vmul.f32 %v3044, 0.6931472
        %v3046 = vmul.f32 -0.5, %v2819
        %v3047 = vadd.f32 %v3046, 1.0
        %v3048 = vmul.f32 %v3047, %v2819
        %v3049 = vand.u32 2147483647, %v2819
        %vm3050 = vcmp.lt.f32.partialorder %v3049, 0.0004427343
        %v3051 = vsel %vm3050, %v3048, %v3045
        %v3052 = vadd.f32 %v2821, 1.0
        %v3053 = vlog2.pop %v3052
        %v3054 = vmul.f32 %v3053, 0.6931472
        %v3055 = vmul.f32 -0.5, %v2821
        %v3056 = vadd.f32 %v3055, 1.0
        %v3057 = vmul.f32 %v3056, %v2821
        %v3058 = vand.u32 2147483647, %v2821
        %vm3059 = vcmp.lt.f32.partialorder %v3058, 0.0004427343
        %v3060 = vsel %vm3059, %v3057, %v3054
        %v3061 = vadd.f32 %v2823, 1.0
        %v3062 = vlog2.pop %v3061
        %v3063 = vmul.f32 %v3062, 0.6931472
        %v3064 = vmul.f32 -0.5, %v2823
        %v3065 = vadd.f32 %v3064, 1.0
        %v3066 = vmul.f32 %v3065, %v2823
        %v3067 = vand.u32 2147483647, %v2823
        %vm3068 = vcmp.lt.f32.partialorder %v3067, 0.0004427343
        %v3069 = vsel %vm3068, %v3066, %v3063
        %v3070 = vadd.f32 %v2825, 1.0
        %v3071 = vlog2.pop %v3070
        %v3072 = vmul.f32 %v3071, 0.6931472
        %v3073 = vmul.f32 -0.5, %v2825
        %v3074 = vadd.f32 %v3073, 1.0
        %v3075 = vmul.f32 %v3074, %v2825
        %v3076 = vand.u32 2147483647, %v2825
        %vm3077 = vcmp.lt.f32.partialorder %v3076, 0.0004427343
        %v3078 = vsel %vm3077, %v3075, %v3072
        %v3079 = vadd.f32 %v2827, 1.0
        %v3080 = vlog2.pop %v3079
        %v3081 = vmul.f32 %v3080, 0.6931472
        %v3082 = vmul.f32 -0.5, %v2827
        %v3083 = vadd.f32 %v3082, 1.0
        %v3084 = vmul.f32 %v3083, %v2827
        %v3085 = vand.u32 2147483647, %v2827
        %vm3086 = vcmp.lt.f32.partialorder %v3085, 0.0004427343
        %v3087 = vsel %vm3086, %v3084, %v3081
        %v3088 = vadd.f32 %v2829, 1.0
        %v3089 = vlog2.pop %v3088
        %v3090 = vmul.f32 %v3089, 0.6931472
        %v3091 = vmul.f32 -0.5, %v2829
        %v3092 = vadd.f32 %v3091, 1.0
        %v3093 = vmul.f32 %v3092, %v2829
        %v3094 = vand.u32 2147483647, %v2829
        %vm3095 = vcmp.lt.f32.partialorder %v3094, 0.0004427343
        %v3096 = vsel %vm3095, %v3093, %v3090
        %v3097 = vadd.f32 %v2831, 1.0
        %v3098 = vlog2.pop %v3097
        %v3099 = vmul.f32 %v3098, 0.6931472
        %v3100 = vmul.f32 -0.5, %v2831
        %v3101 = vadd.f32 %v3100, 1.0
        %v3102 = vmul.f32 %v3101, %v2831
        %v3103 = vand.u32 2147483647, %v2831
        %vm3104 = vcmp.lt.f32.partialorder %v3103, 0.0004427343
        %v3105 = vsel %vm3104, %v3102, %v3099
        %v3106 = vadd.f32 %v2833, 1.0
        %v3107 = vlog2.pop %v3106
        %v3108 = vmul.f32 %v3107, 0.6931472
        %v3109 = vmul.f32 -0.5, %v2833
        %v3110 = vadd.f32 %v3109, 1.0
        %v3111 = vmul.f32 %v3110, %v2833
        %v3112 = vand.u32 2147483647, %v2833
        %vm3113 = vcmp.lt.f32.partialorder %v3112, 0.0004427343
        %v3114 = vsel %vm3113, %v3111, %v3108
        %v3115 = vadd.f32 %v2835, 1.0
        %v3116 = vlog2.pop %v3115
        %v3117 = vmul.f32 %v3116, 0.6931472
        %v3118 = vmul.f32 -0.5, %v2835
        %v3119 = vadd.f32 %v3118, 1.0
        %v3120 = vmul.f32 %v3119, %v2835
        %v3121 = vand.u32 2147483647, %v2835
        %vm3122 = vcmp.lt.f32.partialorder %v3121, 0.0004427343
        %v3123 = vsel %vm3122, %v3120, %v3117
        %v3124 = vmul.f32 %v2844, 0.01
        %v3125 = vmul.f32 %v2853, 0.01
        %v3126 = vmul.f32 %v2862, 0.01
        %v3127 = vmul.f32 %v2871, 0.01
        %v3128 = vmul.f32 %v2880, 0.01
        %v3129 = vmul.f32 %v2889, 0.01
        %v3130 = vmul.f32 %v2898, 0.01
        %v3131 = vmul.f32 %v2907, 0.01
        %v3132 = vmul.f32 %v2916, 0.01
        %v3133 = vmul.f32 %v2925, 0.01
        %v3134 = vmul.f32 %v2934, 0.01
        %v3135 = vmul.f32 %v2943, 0.01
        %v3136 = vmul.f32 %v2952, 0.01
        %v3137 = vmul.f32 %v2961, 0.01
        %v3138 = vmul.f32 %v2970, 0.01
        %v3139 = vmul.f32 %v2979, 0.01
        %v3140 = vmul.f32 %v2988, 0.01
        %v3141 = vmul.f32 %v2997, 0.01
        %v3142 = vmul.f32 %v3006, 0.01
        %v3143 = vmul.f32 %v3015, 0.01
        %v3144 = vmul.f32 %v3024, 0.01
        %v3145 = vmul.f32 %v3033, 0.01
        %v3146 = vmul.f32 %v3042, 0.01
        %v3147 = vmul.f32 %v3051, 0.01
        %v3148 = vmul.f32 %v3060, 0.01
        %v3149 = vmul.f32 %v3069, 0.01
        %v3150 = vmul.f32 %v3078, 0.01
        %v3151 = vmul.f32 %v3087, 0.01
        %v3152 = vmul.f32 %v3096, 0.01
        %v3153 = vmul.f32 %v3105, 0.01
        %v3154 = vmul.f32 %v3114, 0.01
        %v3155 = vmul.f32 %v3123, 0.01
        %v3156 = vsel %vm2740, %v2644, %v3124
        %v3157 = vsel %vm2741, %v2645, %v3125
        %v3158 = vsel %vm2742, %v2646, %v3126
        %v3159 = vsel %vm2743, %v2647, %v3127
        %v3160 = vsel %vm2744, %v2648, %v3128
        %v3161 = vsel %vm2745, %v2649, %v3129
        %v3162 = vsel %vm2746, %v2650, %v3130
        %v3163 = vsel %vm2747, %v2651, %v3131
        %v3164 = vsel %vm2748, %v2652, %v3132
        %v3165 = vsel %vm2749, %v2653, %v3133
        %v3166 = vsel %vm2750, %v2654, %v3134
        %v3167 = vsel %vm2751, %v2655, %v3135
        %v3168 = vsel %vm2752, %v2656, %v3136
        %v3169 = vsel %vm2753, %v2657, %v3137
        %v3170 = vsel %vm2754, %v2658, %v3138
        %v3171 = vsel %vm2755, %v2659, %v3139
        %v3172 = vsel %vm2756, %v2660, %v3140
        %v3173 = vsel %vm2757, %v2661, %v3141
        %v3174 = vsel %vm2758, %v2662, %v3142
        %v3175 = vsel %vm2759, %v2663, %v3143
        %v3176 = vsel %vm2760, %v2664, %v3144
        %v3177 = vsel %vm2761, %v2665, %v3145
        %v3178 = vsel %vm2762, %v2666, %v3146
        %v3179 = vsel %vm2763, %v2667, %v3147
        %v3180 = vsel %vm2764, %v2668, %v3148
        %v3181 = vsel %vm2765, %v2669, %v3149
        %v3182 = vsel %vm2766, %v2670, %v3150
        %v3183 = vsel %vm2767, %v2671, %v3151
        %v3184 = vsel %vm2768, %v2672, %v3152
        %v3185 = vsel %vm2769, %v2673, %v3153
        %v3186 = vsel %vm2770, %v2674, %v3154
        %v3187 = vsel %vm2771, %v2675, %v3155
        %v3188 = vld [vmem:[%s3] sm:$0xf]
        %v3189 = vld [vmem:[%s3 + $0x4] sm:$0xf]
        %v3190 = vld [vmem:[%s3 + $0x8] sm:$0xf]
        %v3191 = vld [vmem:[%s3 + $0xc] sm:$0xf]
        %v3192 = vpack.c.bf16 %v3164, %v3156
        %v3193 = vpack.c.bf16 %v3165, %v3157
        %v3194 = vpack.c.bf16 %v3166, %v3158
        %v3195 = vpack.c.bf16 %v3167, %v3159
        %v3196 = vpack.c.bf16 %v3168, %v3160
        %v3197 = vpack.c.bf16 %v3169, %v3161
        %v3198 = vpack.c.bf16 %v3170, %v3162
        %v3199 = vpack.c.bf16 %v3171, %v3163
        %v3200 = vpack.c.bf16 %v3180, %v3172
        %v3201 = vpack.c.bf16 %v3181, %v3173
        %v3202 = vpack.c.bf16 %v3182, %v3174
        %v3203 = vpack.c.bf16 %v3183, %v3175
        %v3204 = vpack.c.bf16 %v3184, %v3176
        %v3205 = vpack.c.bf16 %v3185, %v3177
        %v3206 = vpack.c.bf16 %v3186, %v3178
        %v3207 = vpack.c.bf16 %v3187, %v3179
        %v3208 = vld [vmem:[%s4] sm:$0xff]
        %v3209 = vld [vmem:[%s4 + $0x8] sm:$0xff]
        %v3210 = vld [vmem:[%s4 + $0x10] sm:$0xff]
        %v3211 = vld [vmem:[%s4 + $0x18] sm:$0xff]
        %3213 = vset.pattern.permute.xlu0 0
        %3214 = vperm.xlu0 %3213, %v3208
        %v3215 = vpop.permute.xlu0 %3214
        %3218 = vset.pattern.permute.xlu0 0
        %3219 = vperm.xlu0 %3218, %v3209
        %v3220 = vpop.permute.xlu0 %3219
        %3223 = vset.pattern.permute.xlu0 0
        %3224 = vperm.xlu0 %3223, %v3210
        %v3225 = vpop.permute.xlu0 %3224
        %3228 = vset.pattern.permute.xlu0 0
        %3229 = vperm.xlu0 %3228, %v3211
        %v3230 = vpop.permute.xlu0 %3229
        %v3236 = vunpack.c.l.b16 %v3188
        %v3237 = vunpack.c.l.b16 %v3189
        %v3238 = vunpack.c.l.b16 %v3190
        %v3239 = vunpack.c.l.b16 %v3191
        %v3240 = vpack.c.b16 %v3237, %v3236
        %v3241 = vpack.c.b16 %v3239, %v3238
        %vm3242 = vcmask 261120
        %v3244 = vsel %vm3242, %v3240, 0
        %v3247 = vsel %vm3242, %v3241, 0
        %3249 = vmatprep.subr.bf16.mxu0 %v3193
        %3250 = vmatpush1.bf16.msra.mxu0 %v3192
        %3251 = vmatprep.subr.bf16.mxu0 %v3201
        %3252 = vmatpush1.bf16.msra.mxu0 %v3200
        %3253 = vmatprep.subr.bf16.mxu0 0
        %3254 = vmatpush1.bf16.msra.mxu0 0
        %3255 = vmatprep.subr.bf16.mxu0 0
        %3256 = vmatpush1.bf16.msra.mxu0 0
        %3257 = vmatprep.subr.bf16.mxu0 0
        %3258 = vmatpush1.bf16.msra.mxu0 0
        %3259 = vmatprep.subr.bf16.mxu0 0
        %3260 = vmatpush1.bf16.msra.mxu0 0
        %3261 = vmatprep.subr.bf16.mxu0 0
        %3262 = vmatpush1.bf16.msra.mxu0 0
        %3263 = vmatprep.subr.bf16.mxu0 0
        %3264 = vmatpush1.bf16.msra.mxu0 0
        %3265 = vmatprep.subr.bf16.mxu0 0
        %3266 = vmatpush1.bf16.msra.mxu0 0
        %3267 = vmatprep.subr.bf16.mxu0 0
        %3268 = vmatpush1.bf16.msra.mxu0 0
        %3269 = vmatprep.subr.bf16.mxu0 0
        %3270 = vmatpush1.bf16.msra.mxu0 0
        %3271 = vmatprep.subr.bf16.mxu0 0
        %3272 = vmatpush1.bf16.msra.mxu0 0
        %3273 = vmatprep.subr.bf16.mxu0 0
        %3274 = vmatpush1.bf16.msra.mxu0 0
        %3275 = vmatprep.subr.bf16.mxu0 0
        %3276 = vmatpush1.bf16.msra.mxu0 0
        %3277 = vmatprep.subr.bf16.mxu0 0
        %3278 = vmatpush1.bf16.msra.mxu0 0
        %3279 = vmatprep.subr.bf16.mxu0 0
        %3280 = vmatpush1.bf16.msra.mxu0 0
        %3281 = vmatprep.mubr.bf16.mxu0 0
        %3282 = vmatmul.mubr.bf16.gmra.mrb[0].mxu0 %v3244
        %v3283 = vpop.f32.mrb[0].mxu0
        %v3284 = vadd.f32 %v3215, %v3283
        %v3285 = vpop.f32.mrb[0].mxu0
        %v3286 = vadd.f32 %v3215, %v3285
        %v3287 = vpop.f32.mrb[0].mxu0
        %v3288 = vadd.f32 %v3220, %v3287
        %v3289 = vpop.f32.mrb[0].mxu0
        %v3290 = vadd.f32 %v3220, %v3289
        %3291 = vmatprep.mubr.bf16.mxu0 0
        %3292 = vmatmul.mubr.bf16.gmra.mrb[0].mxu0 %v3247
        %v3293 = vpop.f32.mrb[0].mxu0
        %v3294 = vadd.f32 %v3225, %v3293
        %v3295 = vpop.f32.mrb[0].mxu0
        %v3296 = vadd.f32 %v3225, %v3295
        %v3297 = vpop.f32.mrb[0].mxu0
        %v3298 = vadd.f32 %v3230, %v3297
        %v3299 = vpop.f32.mrb[0].mxu0
        %v3300 = vadd.f32 %v3230, %v3299
        %3301 = vdwg.mxu0
        %3302 = vmatprep.subr.bf16.mxu0 %v3195
        %3303 = vmatpush1.bf16.msra.mxu0 %v3194
        %3304 = vmatprep.subr.bf16.mxu0 %v3203
        %3305 = vmatpush1.bf16.msra.mxu0 %v3202
        %3306 = vmatprep.subr.bf16.mxu0 0
        %3307 = vmatpush1.bf16.msra.mxu0 0
        %3308 = vmatprep.subr.bf16.mxu0 0
        %3309 = vmatpush1.bf16.msra.mxu0 0
        %3310 = vmatprep.subr.bf16.mxu0 0
        %3311 = vmatpush1.bf16.msra.mxu0 0
        %3312 = vmatprep.subr.bf16.mxu0 0
        %3313 = vmatpush1.bf16.msra.mxu0 0
        %3314 = vmatprep.subr.bf16.mxu0 0
        %3315 = vmatpush1.bf16.msra.mxu0 0
        %3316 = vmatprep.subr.bf16.mxu0 0
        %3317 = vmatpush1.bf16.msra.mxu0 0
        %3318 = vmatprep.subr.bf16.mxu0 0
        %3319 = vmatpush1.bf16.msra.mxu0 0
        %3320 = vmatprep.subr.bf16.mxu0 0
        %3321 = vmatpush1.bf16.msra.mxu0 0
        %3322 = vmatprep.subr.bf16.mxu0 0
        %3323 = vmatpush1.bf16.msra.mxu0 0
        %3324 = vmatprep.subr.bf16.mxu0 0
        %3325 = vmatpush1.bf16.msra.mxu0 0
        %3326 = vmatprep.subr.bf16.mxu0 0
        %3327 = vmatpush1.bf16.msra.mxu0 0
        %3328 = vmatprep.subr.bf16.mxu0 0
        %3329 = vmatpush1.bf16.msra.mxu0 0
        %3330 = vmatprep.subr.bf16.mxu0 0
        %3331 = vmatpush1.bf16.msra.mxu0 0
        %3332 = vmatprep.subr.bf16.mxu0 0
        %3333 = vmatpush1.bf16.msra.mxu0 0
        %3334 = vmatprep.mubr.bf16.mxu0 0
        %3335 = vmatmul.mubr.bf16.gmra.mrb[0].mxu0 %v3244
        %v3336 = vpop.f32.mrb[0].mxu0
        %v3337 = vadd.f32 %v3215, %v3336
        %v3338 = vpop.f32.mrb[0].mxu0
        %v3339 = vadd.f32 %v3215, %v3338
        %v3340 = vpop.f32.mrb[0].mxu0
        %v3341 = vadd.f32 %v3220, %v3340
        %v3342 = vpop.f32.mrb[0].mxu0
        %v3343 = vadd.f32 %v3220, %v3342
        %3344 = vmatprep.mubr.bf16.mxu0 0
        %3345 = vmatmul.mubr.bf16.gmra.mrb[0].mxu0 %v3247
        %v3346 = vpop.f32.mrb[0].mxu0
        %v3347 = vadd.f32 %v3225, %v3346
        %v3348 = vpop.f32.mrb[0].mxu0
        %v3349 = vadd.f32 %v3225, %v3348
        %v3350 = vpop.f32.mrb[0].mxu0
        %v3351 = vadd.f32 %v3230, %v3350
        %v3352 = vpop.f32.mrb[0].mxu0
        %v3353 = vadd.f32 %v3230, %v3352
        %3354 = vdwg.mxu0
        %3355 = vmatprep.subr.bf16.mxu0 %v3197
        %3356 = vmatpush1.bf16.msra.mxu0 %v3196
        %3357 = vmatprep.subr.bf16.mxu0 %v3205
        %3358 = vmatpush1.bf16.msra.mxu0 %v3204
        %3359 = vmatprep.subr.bf16.mxu0 0
        %3360 = vmatpush1.bf16.msra.mxu0 0
        %3361 = vmatprep.subr.bf16.mxu0 0
        %3362 = vmatpush1.bf16.msra.mxu0 0
        %3363 = vmatprep.subr.bf16.mxu0 0
        %3364 = vmatpush1.bf16.msra.mxu0 0
        %3365 = vmatprep.subr.bf16.mxu0 0
        %3366 = vmatpush1.bf16.msra.mxu0 0
        %3367 = vmatprep.subr.bf16.mxu0 0
        %3368 = vmatpush1.bf16.msra.mxu0 0
        %3369 = vmatprep.subr.bf16.mxu0 0
        %3370 = vmatpush1.bf16.msra.mxu0 0
        %3371 = vmatprep.subr.bf16.mxu0 0
        %3372 = vmatpush1.bf16.msra.mxu0 0
        %3373 = vmatprep.subr.bf16.mxu0 0
        %3374 = vmatpush1.bf16.msra.mxu0 0
        %3375 = vmatprep.subr.bf16.mxu0 0
        %3376 = vmatpush1.bf16.msra.mxu0 0
        %3377 = vmatprep.subr.bf16.mxu0 0
        %3378 = vmatpush1.bf16.msra.mxu0 0
        %3379 = vmatprep.subr.bf16.mxu0 0
        %3380 = vmatpush1.bf16.msra.mxu0 0
        %3381 = vmatprep.subr.bf16.mxu0 0
        %3382 = vmatpush1.bf16.msra.mxu0 0
        %3383 = vmatprep.subr.bf16.mxu0 0
        %3384 = vmatpush1.bf16.msra.mxu0 0
        %3385 = vmatprep.subr.bf16.mxu0 0
        %3386 = vmatpush1.bf16.msra.mxu0 0
        %3387 = vmatprep.mubr.bf16.mxu0 0
        %3388 = vmatmul.mubr.bf16.gmra.mrb[0].mxu0 %v3244
        %v3389 = vpop.f32.mrb[0].mxu0
        %v3390 = vadd.f32 %v3215, %v3389
        %v3391 = vpop.f32.mrb[0].mxu0
        %v3392 = vadd.f32 %v3215, %v3391
        %v3393 = vpop.f32.mrb[0].mxu0
        %v3394 = vadd.f32 %v3220, %v3393
        %v3395 = vpop.f32.mrb[0].mxu0
        %v3396 = vadd.f32 %v3220, %v3395
        %3397 = vmatprep.mubr.bf16.mxu0 0
        %3398 = vmatmul.mubr.bf16.gmra.mrb[0].mxu0 %v3247
        %v3399 = vpop.f32.mrb[0].mxu0
        %v3400 = vadd.f32 %v3225, %v3399
        %v3401 = vpop.f32.mrb[0].mxu0
        %v3402 = vadd.f32 %v3225, %v3401
        %v3403 = vpop.f32.mrb[0].mxu0
        %v3404 = vadd.f32 %v3230, %v3403
        %v3405 = vpop.f32.mrb[0].mxu0
        %v3406 = vadd.f32 %v3230, %v3405
        %3407 = vdwg.mxu0
        %3408 = vmatprep.subr.bf16.mxu0 %v3199
        %3409 = vmatpush1.bf16.msra.mxu0 %v3198
        %3410 = vmatprep.subr.bf16.mxu0 %v3207
        %3411 = vmatpush1.bf16.msra.mxu0 %v3206
        %3412 = vmatprep.subr.bf16.mxu0 0
        %3413 = vmatpush1.bf16.msra.mxu0 0
        %3414 = vmatprep.subr.bf16.mxu0 0
        %3415 = vmatpush1.bf16.msra.mxu0 0
        %3416 = vmatprep.subr.bf16.mxu0 0
        %3417 = vmatpush1.bf16.msra.mxu0 0
        %3418 = vmatprep.subr.bf16.mxu0 0
        %3419 = vmatpush1.bf16.msra.mxu0 0
        %3420 = vmatprep.subr.bf16.mxu0 0
        %3421 = vmatpush1.bf16.msra.mxu0 0
        %3422 = vmatprep.subr.bf16.mxu0 0
        %3423 = vmatpush1.bf16.msra.mxu0 0
        %3424 = vmatprep.subr.bf16.mxu0 0
        %3425 = vmatpush1.bf16.msra.mxu0 0
        %3426 = vmatprep.subr.bf16.mxu0 0
        %3427 = vmatpush1.bf16.msra.mxu0 0
        %3428 = vmatprep.subr.bf16.mxu0 0
        %3429 = vmatpush1.bf16.msra.mxu0 0
        %3430 = vmatprep.subr.bf16.mxu0 0
        %3431 = vmatpush1.bf16.msra.mxu0 0
        %3432 = vmatprep.subr.bf16.mxu0 0
        %3433 = vmatpush1.bf16.msra.mxu0 0
        %3434 = vmatprep.subr.bf16.mxu0 0
        %3435 = vmatpush1.bf16.msra.mxu0 0
        %3436 = vmatprep.subr.bf16.mxu0 0
        %3437 = vmatpush1.bf16.msra.mxu0 0
        %3438 = vmatprep.subr.bf16.mxu0 0
        %3439 = vmatpush1.bf16.msra.mxu0 0
        %3440 = vmatprep.mubr.bf16.mxu0 0
        %3441 = vmatmul.mubr.bf16.gmra.mrb[0].mxu0 %v3244
        %v3442 = vpop.f32.mrb[0].mxu0
        %v3443 = vadd.f32 %v3215, %v3442
        %v3444 = vpop.f32.mrb[0].mxu0
        %v3445 = vadd.f32 %v3215, %v3444
        %v3446 = vpop.f32.mrb[0].mxu0
        %v3447 = vadd.f32 %v3220, %v3446
        %v3448 = vpop.f32.mrb[0].mxu0
        %v3449 = vadd.f32 %v3220, %v3448
        %3450 = vmatprep.mubr.bf16.mxu0 0
        %3451 = vmatmul.mubr.bf16.gmra.mrb[0].mxu0 %v3247
        %v3452 = vpop.f32.mrb[0].mxu0
        %v3453 = vadd.f32 %v3225, %v3452
        %v3454 = vpop.f32.mrb[0].mxu0
        %v3455 = vadd.f32 %v3225, %v3454
        %v3456 = vpop.f32.mrb[0].mxu0
        %v3457 = vadd.f32 %v3230, %v3456
        %v3458 = vpop.f32.mrb[0].mxu0
        %v3459 = vadd.f32 %v3230, %v3458
        %3460 = vdwg.mxu0
        %v3461 = vmul.f32 %v3284, 100.0
        %v3462 = vmul.f32 %v3286, 100.0
        %v3463 = vmul.f32 %v3337, 100.0
        %v3464 = vmul.f32 %v3339, 100.0
        %v3465 = vmul.f32 %v3390, 100.0
        %v3466 = vmul.f32 %v3392, 100.0
        %v3467 = vmul.f32 %v3443, 100.0
        %v3468 = vmul.f32 %v3445, 100.0
        %v3469 = vmul.f32 %v3288, 100.0
        %v3470 = vmul.f32 %v3290, 100.0
        %v3471 = vmul.f32 %v3341, 100.0
        %v3472 = vmul.f32 %v3343, 100.0
        %v3473 = vmul.f32 %v3394, 100.0
        %v3474 = vmul.f32 %v3396, 100.0
        %v3475 = vmul.f32 %v3447, 100.0
        %v3476 = vmul.f32 %v3449, 100.0
        %v3477 = vmul.f32 %v3294, 100.0
        %v3478 = vmul.f32 %v3296, 100.0
        %v3479 = vmul.f32 %v3347, 100.0
        %v3480 = vmul.f32 %v3349, 100.0
        %v3481 = vmul.f32 %v3400, 100.0
        %v3482 = vmul.f32 %v3402, 100.0
        %v3483 = vmul.f32 %v3453, 100.0
        %v3484 = vmul.f32 %v3455, 100.0
        %v3485 = vmul.f32 %v3298, 100.0
        %v3486 = vmul.f32 %v3300, 100.0
        %v3487 = vmul.f32 %v3351, 100.0
        %v3488 = vmul.f32 %v3353, 100.0
        %v3489 = vmul.f32 %v3404, 100.0
        %v3490 = vmul.f32 %v3406, 100.0
        %v3491 = vmul.f32 %v3457, 100.0
        %v3492 = vmul.f32 %v3459, 100.0
        %v3493 = vmin.f32 %v3461, 20.0
        %v3494 = vmin.f32 %v3462, 20.0
        %v3495 = vmin.f32 %v3463, 20.0
        %v3496 = vmin.f32 %v3464, 20.0
        %v3497 = vmin.f32 %v3465, 20.0
        %v3498 = vmin.f32 %v3466, 20.0
        %v3499 = vmin.f32 %v3467, 20.0
        %v3500 = vmin.f32 %v3468, 20.0
        %v3501 = vmin.f32 %v3469, 20.0
        %v3502 = vmin.f32 %v3470, 20.0
        %v3503 = vmin.f32 %v3471, 20.0
        %v3504 = vmin.f32 %v3472, 20.0
        %v3505 = vmin.f32 %v3473, 20.0
        %v3506 = vmin.f32 %v3474, 20.0
        %v3507 = vmin.f32 %v3475, 20.0
        %v3508 = vmin.f32 %v3476, 20.0
        %v3509 = vmin.f32 %v3477, 20.0
        %v3510 = vmin.f32 %v3478, 20.0
        %v3511 = vmin.f32 %v3479, 20.0
        %v3512 = vmin.f32 %v3480, 20.0
        %v3513 = vmin.f32 %v3481, 20.0
        %v3514 = vmin.f32 %v3482, 20.0
        %v3515 = vmin.f32 %v3483, 20.0
        %v3516 = vmin.f32 %v3484, 20.0
        %v3517 = vmin.f32 %v3485, 20.0
        %v3518 = vmin.f32 %v3486, 20.0
        %v3519 = vmin.f32 %v3487, 20.0
        %v3520 = vmin.f32 %v3488, 20.0
        %v3521 = vmin.f32 %v3489, 20.0
        %v3522 = vmin.f32 %v3490, 20.0
        %v3523 = vmin.f32 %v3491, 20.0
        %v3524 = vmin.f32 %v3492, 20.0
        %vm3525 = vcmp.gt.f32.partialorder %v3461, 20.0
        %vm3526 = vcmp.gt.f32.partialorder %v3462, 20.0
        %vm3527 = vcmp.gt.f32.partialorder %v3463, 20.0
        %vm3528 = vcmp.gt.f32.partialorder %v3464, 20.0
        %vm3529 = vcmp.gt.f32.partialorder %v3465, 20.0
        %vm3530 = vcmp.gt.f32.partialorder %v3466, 20.0
        %vm3531 = vcmp.gt.f32.partialorder %v3467, 20.0
        %vm3532 = vcmp.gt.f32.partialorder %v3468, 20.0
        %vm3533 = vcmp.gt.f32.partialorder %v3469, 20.0
        %vm3534 = vcmp.gt.f32.partialorder %v3470, 20.0
        %vm3535 = vcmp.gt.f32.partialorder %v3471, 20.0
        %vm3536 = vcmp.gt.f32.partialorder %v3472, 20.0
        %vm3537 = vcmp.gt.f32.partialorder %v3473, 20.0
        %vm3538 = vcmp.gt.f32.partialorder %v3474, 20.0
        %vm3539 = vcmp.gt.f32.partialorder %v3475, 20.0
        %vm3540 = vcmp.gt.f32.partialorder %v3476, 20.0
        %vm3541 = vcmp.gt.f32.partialorder %v3477, 20.0
        %vm3542 = vcmp.gt.f32.partialorder %v3478, 20.0
        %vm3543 = vcmp.gt.f32.partialorder %v3479, 20.0
        %vm3544 = vcmp.gt.f32.partialorder %v3480, 20.0
        %vm3545 = vcmp.gt.f32.partialorder %v3481, 20.0
        %vm3546 = vcmp.gt.f32.partialorder %v3482, 20.0
        %vm3547 = vcmp.gt.f32.partialorder %v3483, 20.0
        %vm3548 = vcmp.gt.f32.partialorder %v3484, 20.0
        %vm3549 = vcmp.gt.f32.partialorder %v3485, 20.0
        %vm3550 = vcmp.gt.f32.partialorder %v3486, 20.0
        %vm3551 = vcmp.gt.f32.partialorder %v3487, 20.0
        %vm3552 = vcmp.gt.f32.partialorder %v3488, 20.0
        %vm3553 = vcmp.gt.f32.partialorder %v3489, 20.0
        %vm3554 = vcmp.gt.f32.partialorder %v3490, 20.0
        %vm3555 = vcmp.gt.f32.partialorder %v3491, 20.0
        %vm3556 = vcmp.gt.f32.partialorder %v3492, 20.0
        %v3557 = vmul.f32 %v3493, 1.442695
        %v3558 = vpow.pop %v3557
        %v3559 = vmul.f32 %v3494, 1.442695
        %v3560 = vpow.pop %v3559
        %v3561 = vmul.f32 %v3495, 1.442695
        %v3562 = vpow.pop %v3561
        %v3563 = vmul.f32 %v3496, 1.442695
        %v3564 = vpow.pop %v3563
        %v3565 = vmul.f32 %v3497, 1.442695
        %v3566 = vpow.pop %v3565
        %v3567 = vmul.f32 %v3498, 1.442695
        %v3568 = vpow.pop %v3567
        %v3569 = vmul.f32 %v3499, 1.442695
        %v3570 = vpow.pop %v3569
        %v3571 = vmul.f32 %v3500, 1.442695
        %v3572 = vpow.pop %v3571
        %v3573 = vmul.f32 %v3501, 1.442695
        %v3574 = vpow.pop %v3573
        %v3575 = vmul.f32 %v3502, 1.442695
        %v3576 = vpow.pop %v3575
        %v3577 = vmul.f32 %v3503, 1.442695
        %v3578 = vpow.pop %v3577
        %v3579 = vmul.f32 %v3504, 1.442695
        %v3580 = vpow.pop %v3579
        %v3581 = vmul.f32 %v3505, 1.442695
        %v3582 = vpow.pop %v3581
        %v3583 = vmul.f32 %v3506, 1.442695
        %v3584 = vpow.pop %v3583
        %v3585 = vmul.f32 %v3507, 1.442695
        %v3586 = vpow.pop %v3585
        %v3587 = vmul.f32 %v3508, 1.442695
        %v3588 = vpow.pop %v3587
        %v3589 = vmul.f32 %v3509, 1.442695
        %v3590 = vpow.pop %v3589
        %v3591 = vmul.f32 %v3510, 1.442695
        %v3592 = vpow.pop %v3591
        %v3593 = vmul.f32 %v3511, 1.442695
        %v3594 = vpow.pop %v3593
        %v3595 = vmul.f32 %v3512, 1.442695
        %v3596 = vpow.pop %v3595
        %v3597 = vmul.f32 %v3513, 1.442695
        %v3598 = vpow.pop %v3597
        %v3599 = vmul.f32 %v3514, 1.442695
        %v3600 = vpow.pop %v3599
        %v3601 = vmul.f32 %v3515, 1.442695
        %v3602 = vpow.pop %v3601
        %v3603 = vmul.f32 %v3516, 1.442695
        %v3604 = vpow.pop %v3603
        %v3605 = vmul.f32 %v3517, 1.442695
        %v3606 = vpow.pop %v3605
        %v3607 = vmul.f32 %v3518, 1.442695
        %v3608 = vpow.pop %v3607
        %v3609 = vmul.f32 %v3519, 1.442695
        %v3610 = vpow.pop %v3609
        %v3611 = vmul.f32 %v3520, 1.442695
        %v3612 = vpow.pop %v3611
        %v3613 = vmul.f32 %v3521, 1.442695
        %v3614 = vpow.pop %v3613
        %v3615 = vmul.f32 %v3522, 1.442695
        %v3616 = vpow.pop %v3615
        %v3617 = vmul.f32 %v3523, 1.442695
        %v3618 = vpow.pop %v3617
        %v3619 = vmul.f32 %v3524, 1.442695
        %v3620 = vpow.pop %v3619
        %v3621 = vadd.f32 %v3558, 1.0
        %v3622 = vlog2.pop %v3621
        %v3623 = vmul.f32 %v3622, 0.6931472
        %v3624 = vmul.f32 -0.5, %v3558
        %v3625 = vadd.f32 %v3624, 1.0
        %v3626 = vmul.f32 %v3625, %v3558
        %v3627 = vand.u32 2147483647, %v3558
        %vm3628 = vcmp.lt.f32.partialorder %v3627, 0.0004427343
        %v3629 = vsel %vm3628, %v3626, %v3623
        %v3630 = vadd.f32 %v3560, 1.0
        %v3631 = vlog2.pop %v3630
        %v3632 = vmul.f32 %v3631, 0.6931472
        %v3633 = vmul.f32 -0.5, %v3560
        %v3634 = vadd.f32 %v3633, 1.0
        %v3635 = vmul.f32 %v3634, %v3560
        %v3636 = vand.u32 2147483647, %v3560
        %vm3637 = vcmp.lt.f32.partialorder %v3636, 0.0004427343
        %v3638 = vsel %vm3637, %v3635, %v3632
        %v3639 = vadd.f32 %v3562, 1.0
        %v3640 = vlog2.pop %v3639
        %v3641 = vmul.f32 %v3640, 0.6931472
        %v3642 = vmul.f32 -0.5, %v3562
        %v3643 = vadd.f32 %v3642, 1.0
        %v3644 = vmul.f32 %v3643, %v3562
        %v3645 = vand.u32 2147483647, %v3562
        %vm3646 = vcmp.lt.f32.partialorder %v3645, 0.0004427343
        %v3647 = vsel %vm3646, %v3644, %v3641
        %v3648 = vadd.f32 %v3564, 1.0
        %v3649 = vlog2.pop %v3648
        %v3650 = vmul.f32 %v3649, 0.6931472
        %v3651 = vmul.f32 -0.5, %v3564
        %v3652 = vadd.f32 %v3651, 1.0
        %v3653 = vmul.f32 %v3652, %v3564
        %v3654 = vand.u32 2147483647, %v3564
        %vm3655 = vcmp.lt.f32.partialorder %v3654, 0.0004427343
        %v3656 = vsel %vm3655, %v3653, %v3650
        %v3657 = vadd.f32 %v3566, 1.0
        %v3658 = vlog2.pop %v3657
        %v3659 = vmul.f32 %v3658, 0.6931472
        %v3660 = vmul.f32 -0.5, %v3566
        %v3661 = vadd.f32 %v3660, 1.0
        %v3662 = vmul.f32 %v3661, %v3566
        %v3663 = vand.u32 2147483647, %v3566
        %vm3664 = vcmp.lt.f32.partialorder %v3663, 0.0004427343
        %v3665 = vsel %vm3664, %v3662, %v3659
        %v3666 = vadd.f32 %v3568, 1.0
        %v3667 = vlog2.pop %v3666
        %v3668 = vmul.f32 %v3667, 0.6931472
        %v3669 = vmul.f32 -0.5, %v3568
        %v3670 = vadd.f32 %v3669, 1.0
        %v3671 = vmul.f32 %v3670, %v3568
        %v3672 = vand.u32 2147483647, %v3568
        %vm3673 = vcmp.lt.f32.partialorder %v3672, 0.0004427343
        %v3674 = vsel %vm3673, %v3671, %v3668
        %v3675 = vadd.f32 %v3570, 1.0
        %v3676 = vlog2.pop %v3675
        %v3677 = vmul.f32 %v3676, 0.6931472
        %v3678 = vmul.f32 -0.5, %v3570
        %v3679 = vadd.f32 %v3678, 1.0
        %v3680 = vmul.f32 %v3679, %v3570
        %v3681 = vand.u32 2147483647, %v3570
        %vm3682 = vcmp.lt.f32.partialorder %v3681, 0.0004427343
        %v3683 = vsel %vm3682, %v3680, %v3677
        %v3684 = vadd.f32 %v3572, 1.0
        %v3685 = vlog2.pop %v3684
        %v3686 = vmul.f32 %v3685, 0.6931472
        %v3687 = vmul.f32 -0.5, %v3572
        %v3688 = vadd.f32 %v3687, 1.0
        %v3689 = vmul.f32 %v3688, %v3572
        %v3690 = vand.u32 2147483647, %v3572
        %vm3691 = vcmp.lt.f32.partialorder %v3690, 0.0004427343
        %v3692 = vsel %vm3691, %v3689, %v3686
        %v3693 = vadd.f32 %v3574, 1.0
        %v3694 = vlog2.pop %v3693
        %v3695 = vmul.f32 %v3694, 0.6931472
        %v3696 = vmul.f32 -0.5, %v3574
        %v3697 = vadd.f32 %v3696, 1.0
        %v3698 = vmul.f32 %v3697, %v3574
        %v3699 = vand.u32 2147483647, %v3574
        %vm3700 = vcmp.lt.f32.partialorder %v3699, 0.0004427343
        %v3701 = vsel %vm3700, %v3698, %v3695
        %v3702 = vadd.f32 %v3576, 1.0
        %v3703 = vlog2.pop %v3702
        %v3704 = vmul.f32 %v3703, 0.6931472
        %v3705 = vmul.f32 -0.5, %v3576
        %v3706 = vadd.f32 %v3705, 1.0
        %v3707 = vmul.f32 %v3706, %v3576
        %v3708 = vand.u32 2147483647, %v3576
        %vm3709 = vcmp.lt.f32.partialorder %v3708, 0.0004427343
        %v3710 = vsel %vm3709, %v3707, %v3704
        %v3711 = vadd.f32 %v3578, 1.0
        %v3712 = vlog2.pop %v3711
        %v3713 = vmul.f32 %v3712, 0.6931472
        %v3714 = vmul.f32 -0.5, %v3578
        %v3715 = vadd.f32 %v3714, 1.0
        %v3716 = vmul.f32 %v3715, %v3578
        %v3717 = vand.u32 2147483647, %v3578
        %vm3718 = vcmp.lt.f32.partialorder %v3717, 0.0004427343
        %v3719 = vsel %vm3718, %v3716, %v3713
        %v3720 = vadd.f32 %v3580, 1.0
        %v3721 = vlog2.pop %v3720
        %v3722 = vmul.f32 %v3721, 0.6931472
        %v3723 = vmul.f32 -0.5, %v3580
        %v3724 = vadd.f32 %v3723, 1.0
        %v3725 = vmul.f32 %v3724, %v3580
        %v3726 = vand.u32 2147483647, %v3580
        %vm3727 = vcmp.lt.f32.partialorder %v3726, 0.0004427343
        %v3728 = vsel %vm3727, %v3725, %v3722
        %v3729 = vadd.f32 %v3582, 1.0
        %v3730 = vlog2.pop %v3729
        %v3731 = vmul.f32 %v3730, 0.6931472
        %v3732 = vmul.f32 -0.5, %v3582
        %v3733 = vadd.f32 %v3732, 1.0
        %v3734 = vmul.f32 %v3733, %v3582
        %v3735 = vand.u32 2147483647, %v3582
        %vm3736 = vcmp.lt.f32.partialorder %v3735, 0.0004427343
        %v3737 = vsel %vm3736, %v3734, %v3731
        %v3738 = vadd.f32 %v3584, 1.0
        %v3739 = vlog2.pop %v3738
        %v3740 = vmul.f32 %v3739, 0.6931472
        %v3741 = vmul.f32 -0.5, %v3584
        %v3742 = vadd.f32 %v3741, 1.0
        %v3743 = vmul.f32 %v3742, %v3584
        %v3744 = vand.u32 2147483647, %v3584
        %vm3745 = vcmp.lt.f32.partialorder %v3744, 0.0004427343
        %v3746 = vsel %vm3745, %v3743, %v3740
        %v3747 = vadd.f32 %v3586, 1.0
        %v3748 = vlog2.pop %v3747
        %v3749 = vmul.f32 %v3748, 0.6931472
        %v3750 = vmul.f32 -0.5, %v3586
        %v3751 = vadd.f32 %v3750, 1.0
        %v3752 = vmul.f32 %v3751, %v3586
        %v3753 = vand.u32 2147483647, %v3586
        %vm3754 = vcmp.lt.f32.partialorder %v3753, 0.0004427343
        %v3755 = vsel %vm3754, %v3752, %v3749
        %v3756 = vadd.f32 %v3588, 1.0
        %v3757 = vlog2.pop %v3756
        %v3758 = vmul.f32 %v3757, 0.6931472
        %v3759 = vmul.f32 -0.5, %v3588
        %v3760 = vadd.f32 %v3759, 1.0
        %v3761 = vmul.f32 %v3760, %v3588
        %v3762 = vand.u32 2147483647, %v3588
        %vm3763 = vcmp.lt.f32.partialorder %v3762, 0.0004427343
        %v3764 = vsel %vm3763, %v3761, %v3758
        %v3765 = vadd.f32 %v3590, 1.0
        %v3766 = vlog2.pop %v3765
        %v3767 = vmul.f32 %v3766, 0.6931472
        %v3768 = vmul.f32 -0.5, %v3590
        %v3769 = vadd.f32 %v3768, 1.0
        %v3770 = vmul.f32 %v3769, %v3590
        %v3771 = vand.u32 2147483647, %v3590
        %vm3772 = vcmp.lt.f32.partialorder %v3771, 0.0004427343
        %v3773 = vsel %vm3772, %v3770, %v3767
        %v3774 = vadd.f32 %v3592, 1.0
        %v3775 = vlog2.pop %v3774
        %v3776 = vmul.f32 %v3775, 0.6931472
        %v3777 = vmul.f32 -0.5, %v3592
        %v3778 = vadd.f32 %v3777, 1.0
        %v3779 = vmul.f32 %v3778, %v3592
        %v3780 = vand.u32 2147483647, %v3592
        %vm3781 = vcmp.lt.f32.partialorder %v3780, 0.0004427343
        %v3782 = vsel %vm3781, %v3779, %v3776
        %v3783 = vadd.f32 %v3594, 1.0
        %v3784 = vlog2.pop %v3783
        %v3785 = vmul.f32 %v3784, 0.6931472
        %v3786 = vmul.f32 -0.5, %v3594
        %v3787 = vadd.f32 %v3786, 1.0
        %v3788 = vmul.f32 %v3787, %v3594
        %v3789 = vand.u32 2147483647, %v3594
        %vm3790 = vcmp.lt.f32.partialorder %v3789, 0.0004427343
        %v3791 = vsel %vm3790, %v3788, %v3785
        %v3792 = vadd.f32 %v3596, 1.0
        %v3793 = vlog2.pop %v3792
        %v3794 = vmul.f32 %v3793, 0.6931472
        %v3795 = vmul.f32 -0.5, %v3596
        %v3796 = vadd.f32 %v3795, 1.0
        %v3797 = vmul.f32 %v3796, %v3596
        %v3798 = vand.u32 2147483647, %v3596
        %vm3799 = vcmp.lt.f32.partialorder %v3798, 0.0004427343
        %v3800 = vsel %vm3799, %v3797, %v3794
        %v3801 = vadd.f32 %v3598, 1.0
        %v3802 = vlog2.pop %v3801
        %v3803 = vmul.f32 %v3802, 0.6931472
        %v3804 = vmul.f32 -0.5, %v3598
        %v3805 = vadd.f32 %v3804, 1.0
        %v3806 = vmul.f32 %v3805, %v3598
        %v3807 = vand.u32 2147483647, %v3598
        %vm3808 = vcmp.lt.f32.partialorder %v3807, 0.0004427343
        %v3809 = vsel %vm3808, %v3806, %v3803
        %v3810 = vadd.f32 %v3600, 1.0
        %v3811 = vlog2.pop %v3810
        %v3812 = vmul.f32 %v3811, 0.6931472
        %v3813 = vmul.f32 -0.5, %v3600
        %v3814 = vadd.f32 %v3813, 1.0
        %v3815 = vmul.f32 %v3814, %v3600
        %v3816 = vand.u32 2147483647, %v3600
        %vm3817 = vcmp.lt.f32.partialorder %v3816, 0.0004427343
        %v3818 = vsel %vm3817, %v3815, %v3812
        %v3819 = vadd.f32 %v3602, 1.0
        %v3820 = vlog2.pop %v3819
        %v3821 = vmul.f32 %v3820, 0.6931472
        %v3822 = vmul.f32 -0.5, %v3602
        %v3823 = vadd.f32 %v3822, 1.0
        %v3824 = vmul.f32 %v3823, %v3602
        %v3825 = vand.u32 2147483647, %v3602
        %vm3826 = vcmp.lt.f32.partialorder %v3825, 0.0004427343
        %v3827 = vsel %vm3826, %v3824, %v3821
        %v3828 = vadd.f32 %v3604, 1.0
        %v3829 = vlog2.pop %v3828
        %v3830 = vmul.f32 %v3829, 0.6931472
        %v3831 = vmul.f32 -0.5, %v3604
        %v3832 = vadd.f32 %v3831, 1.0
        %v3833 = vmul.f32 %v3832, %v3604
        %v3834 = vand.u32 2147483647, %v3604
        %vm3835 = vcmp.lt.f32.partialorder %v3834, 0.0004427343
        %v3836 = vsel %vm3835, %v3833, %v3830
        %v3837 = vadd.f32 %v3606, 1.0
        %v3838 = vlog2.pop %v3837
        %v3839 = vmul.f32 %v3838, 0.6931472
        %v3840 = vmul.f32 -0.5, %v3606
        %v3841 = vadd.f32 %v3840, 1.0
        %v3842 = vmul.f32 %v3841, %v3606
        %v3843 = vand.u32 2147483647, %v3606
        %vm3844 = vcmp.lt.f32.partialorder %v3843, 0.0004427343
        %v3845 = vsel %vm3844, %v3842, %v3839
        %v3846 = vadd.f32 %v3608, 1.0
        %v3847 = vlog2.pop %v3846
        %v3848 = vmul.f32 %v3847, 0.6931472
        %v3849 = vmul.f32 -0.5, %v3608
        %v3850 = vadd.f32 %v3849, 1.0
        %v3851 = vmul.f32 %v3850, %v3608
        %v3852 = vand.u32 2147483647, %v3608
        %vm3853 = vcmp.lt.f32.partialorder %v3852, 0.0004427343
        %v3854 = vsel %vm3853, %v3851, %v3848
        %v3855 = vadd.f32 %v3610, 1.0
        %v3856 = vlog2.pop %v3855
        %v3857 = vmul.f32 %v3856, 0.6931472
        %v3858 = vmul.f32 -0.5, %v3610
        %v3859 = vadd.f32 %v3858, 1.0
        %v3860 = vmul.f32 %v3859, %v3610
        %v3861 = vand.u32 2147483647, %v3610
        %vm3862 = vcmp.lt.f32.partialorder %v3861, 0.0004427343
        %v3863 = vsel %vm3862, %v3860, %v3857
        %v3864 = vadd.f32 %v3612, 1.0
        %v3865 = vlog2.pop %v3864
        %v3866 = vmul.f32 %v3865, 0.6931472
        %v3867 = vmul.f32 -0.5, %v3612
        %v3868 = vadd.f32 %v3867, 1.0
        %v3869 = vmul.f32 %v3868, %v3612
        %v3870 = vand.u32 2147483647, %v3612
        %vm3871 = vcmp.lt.f32.partialorder %v3870, 0.0004427343
        %v3872 = vsel %vm3871, %v3869, %v3866
        %v3873 = vadd.f32 %v3614, 1.0
        %v3874 = vlog2.pop %v3873
        %v3875 = vmul.f32 %v3874, 0.6931472
        %v3876 = vmul.f32 -0.5, %v3614
        %v3877 = vadd.f32 %v3876, 1.0
        %v3878 = vmul.f32 %v3877, %v3614
        %v3879 = vand.u32 2147483647, %v3614
        %vm3880 = vcmp.lt.f32.partialorder %v3879, 0.0004427343
        %v3881 = vsel %vm3880, %v3878, %v3875
        %v3882 = vadd.f32 %v3616, 1.0
        %v3883 = vlog2.pop %v3882
        %v3884 = vmul.f32 %v3883, 0.6931472
        %v3885 = vmul.f32 -0.5, %v3616
        %v3886 = vadd.f32 %v3885, 1.0
        %v3887 = vmul.f32 %v3886, %v3616
        %v3888 = vand.u32 2147483647, %v3616
        %vm3889 = vcmp.lt.f32.partialorder %v3888, 0.0004427343
        %v3890 = vsel %vm3889, %v3887, %v3884
        %v3891 = vadd.f32 %v3618, 1.0
        %v3892 = vlog2.pop %v3891
        %v3893 = vmul.f32 %v3892, 0.6931472
        %v3894 = vmul.f32 -0.5, %v3618
        %v3895 = vadd.f32 %v3894, 1.0
        %v3896 = vmul.f32 %v3895, %v3618
        %v3897 = vand.u32 2147483647, %v3618
        %vm3898 = vcmp.lt.f32.partialorder %v3897, 0.0004427343
        %v3899 = vsel %vm3898, %v3896, %v3893
        %v3900 = vadd.f32 %v3620, 1.0
        %v3901 = vlog2.pop %v3900
        %v3902 = vmul.f32 %v3901, 0.6931472
        %v3903 = vmul.f32 -0.5, %v3620
        %v3904 = vadd.f32 %v3903, 1.0
        %v3905 = vmul.f32 %v3904, %v3620
        %v3906 = vand.u32 2147483647, %v3620
        %vm3907 = vcmp.lt.f32.partialorder %v3906, 0.0004427343
        %v3908 = vsel %vm3907, %v3905, %v3902
        %v3909 = vmul.f32 %v3629, 0.01
        %v3910 = vmul.f32 %v3638, 0.01
        %v3911 = vmul.f32 %v3647, 0.01
        %v3912 = vmul.f32 %v3656, 0.01
        %v3913 = vmul.f32 %v3665, 0.01
        %v3914 = vmul.f32 %v3674, 0.01
        %v3915 = vmul.f32 %v3683, 0.01
        %v3916 = vmul.f32 %v3692, 0.01
        %v3917 = vmul.f32 %v3701, 0.01
        %v3918 = vmul.f32 %v3710, 0.01
        %v3919 = vmul.f32 %v3719, 0.01
        %v3920 = vmul.f32 %v3728, 0.01
        %v3921 = vmul.f32 %v3737, 0.01
        %v3922 = vmul.f32 %v3746, 0.01
        %v3923 = vmul.f32 %v3755, 0.01
        %v3924 = vmul.f32 %v3764, 0.01
        %v3925 = vmul.f32 %v3773, 0.01
        %v3926 = vmul.f32 %v3782, 0.01
        %v3927 = vmul.f32 %v3791, 0.01
        %v3928 = vmul.f32 %v3800, 0.01
        %v3929 = vmul.f32 %v3809, 0.01
        %v3930 = vmul.f32 %v3818, 0.01
        %v3931 = vmul.f32 %v3827, 0.01
        %v3932 = vmul.f32 %v3836, 0.01
        %v3933 = vmul.f32 %v3845, 0.01
        %v3934 = vmul.f32 %v3854, 0.01
        %v3935 = vmul.f32 %v3863, 0.01
        %v3936 = vmul.f32 %v3872, 0.01
        %v3937 = vmul.f32 %v3881, 0.01
        %v3938 = vmul.f32 %v3890, 0.01
        %v3939 = vmul.f32 %v3899, 0.01
        %v3940 = vmul.f32 %v3908, 0.01
        %v3941 = vsel %vm3525, %v3284, %v3909
        %v3942 = vsel %vm3526, %v3286, %v3910
        %v3943 = vsel %vm3527, %v3337, %v3911
        %v3944 = vsel %vm3528, %v3339, %v3912
        %v3945 = vsel %vm3529, %v3390, %v3913
        %v3946 = vsel %vm3530, %v3392, %v3914
        %v3947 = vsel %vm3531, %v3443, %v3915
        %v3948 = vsel %vm3532, %v3445, %v3916
        %v3949 = vsel %vm3533, %v3288, %v3917
        %v3950 = vsel %vm3534, %v3290, %v3918
        %v3951 = vsel %vm3535, %v3341, %v3919
        %v3952 = vsel %vm3536, %v3343, %v3920
        %v3953 = vsel %vm3537, %v3394, %v3921
        %v3954 = vsel %vm3538, %v3396, %v3922
        %v3955 = vsel %vm3539, %v3447, %v3923
        %v3956 = vsel %vm3540, %v3449, %v3924
        %v3957 = vsel %vm3541, %v3294, %v3925
        %v3958 = vsel %vm3542, %v3296, %v3926
        %v3959 = vsel %vm3543, %v3347, %v3927
        %v3960 = vsel %vm3544, %v3349, %v3928
        %v3961 = vsel %vm3545, %v3400, %v3929
        %v3962 = vsel %vm3546, %v3402, %v3930
        %v3963 = vsel %vm3547, %v3453, %v3931
        %v3964 = vsel %vm3548, %v3455, %v3932
        %v3965 = vsel %vm3549, %v3298, %v3933
        %v3966 = vsel %vm3550, %v3300, %v3934
        %v3967 = vsel %vm3551, %v3351, %v3935
        %v3968 = vsel %vm3552, %v3353, %v3936
        %v3969 = vsel %vm3553, %v3404, %v3937
        %v3970 = vsel %vm3554, %v3406, %v3938
        %v3971 = vsel %vm3555, %v3457, %v3939
        %v3972 = vsel %vm3556, %v3459, %v3940
        %v3973 = vld [vmem:[%s5] sm:$0x1]
        %v3974 = vpack.c.bf16 %v3949, %v3941
        %v3975 = vpack.c.bf16 %v3950, %v3942
        %v3976 = vpack.c.bf16 %v3951, %v3943
        %v3977 = vpack.c.bf16 %v3952, %v3944
        %v3978 = vpack.c.bf16 %v3953, %v3945
        %v3979 = vpack.c.bf16 %v3954, %v3946
        %v3980 = vpack.c.bf16 %v3955, %v3947
        %v3981 = vpack.c.bf16 %v3956, %v3948
        %v3982 = vpack.c.bf16 %v3965, %v3957
        %v3983 = vpack.c.bf16 %v3966, %v3958
        %v3984 = vpack.c.bf16 %v3967, %v3959
        %v3985 = vpack.c.bf16 %v3968, %v3960
        %v3986 = vpack.c.bf16 %v3969, %v3961
        %v3987 = vpack.c.bf16 %v3970, %v3962
        %v3988 = vpack.c.bf16 %v3971, %v3963
        %v3989 = vpack.c.bf16 %v3972, %v3964
        %v3990 = vld [vmem:[#allocation2] sm:$0x1]
        %3992 = vset.pattern.permute.xlu0 0
        %3993 = vperm.xlu0 %3992, %v3990
        %v3994 = vpop.permute.xlu0 %3993
        %v3996 = vlaneseq
        %v3997 = vshrl.u32 %v3996, 7
        %v3998 = vsub.s32 0, %v3997
        %v3999 = vrot.slane %v3994, %v3998
        %v4001 = vsel %vm3242, %v3973, 0
        %4003 = vmatprep.subr.bf16.mxu0 %v3975
        %4004 = vmatpush1.bf16.msra.mxu0 %v3974
        %4005 = vmatprep.subr.bf16.mxu0 %v3983
        %4006 = vmatpush1.bf16.msra.mxu0 %v3982
        %4007 = vmatprep.subr.bf16.mxu0 0
        %4008 = vmatpush1.bf16.msra.mxu0 0
        %4009 = vmatprep.subr.bf16.mxu0 0
        %4010 = vmatpush1.bf16.msra.mxu0 0
        %4011 = vmatprep.subr.bf16.mxu0 0
        %4012 = vmatpush1.bf16.msra.mxu0 0
        %4013 = vmatprep.subr.bf16.mxu0 0
        %4014 = vmatpush1.bf16.msra.mxu0 0
        %4015 = vmatprep.subr.bf16.mxu0 0
        %4016 = vmatpush1.bf16.msra.mxu0 0
        %4017 = vmatprep.subr.bf16.mxu0 0
        %4018 = vmatpush1.bf16.msra.mxu0 0
        %4019 = vmatprep.subr.bf16.mxu0 0
        %4020 = vmatpush1.bf16.msra.mxu0 0
        %4021 = vmatprep.subr.bf16.mxu0 0
        %4022 = vmatpush1.bf16.msra.mxu0 0
        %4023 = vmatprep.subr.bf16.mxu0 0
        %4024 = vmatpush1.bf16.msra.mxu0 0
        %4025 = vmatprep.subr.bf16.mxu0 0
        %4026 = vmatpush1.bf16.msra.mxu0 0
        %4027 = vmatprep.subr.bf16.mxu0 0
        %4028 = vmatpush1.bf16.msra.mxu0 0
        %4029 = vmatprep.subr.bf16.mxu0 0
        %4030 = vmatpush1.bf16.msra.mxu0 0
        %4031 = vmatprep.subr.bf16.mxu0 0
        %4032 = vmatpush1.bf16.msra.mxu0 0
        %4033 = vmatprep.subr.bf16.mxu0 0
        %4034 = vmatpush1.bf16.msra.mxu0 0
        %4035 = vmatprep.mubr.bf16.mxu0 0
        %4036 = vmatmul.mubr.bf16.gmra.mrb[0].mxu0 %v4001
        %v4037 = vpop.f32.mrb[0].mxu0
        %v4038 = vadd.f32 %v3999, %v4037
        %v4039 = vpop.f32.mrb[0].mxu0
        %v4040 = vadd.f32 %v3999, %v4039
        %v4041 = vpop.f32.mrb[0].mxu0
        %v4042 = vpop.f32.mrb[0].mxu0
        %4043 = vdwg.mxu0
        %4044 = vmatprep.subr.bf16.mxu0 %v3977
        %4045 = vmatpush1.bf16.msra.mxu0 %v3976
        %4046 = vmatprep.subr.bf16.mxu0 %v3985
        %4047 = vmatpush1.bf16.msra.mxu0 %v3984
        %4048 = vmatprep.subr.bf16.mxu0 0
        %4049 = vmatpush1.bf16.msra.mxu0 0
        %4050 = vmatprep.subr.bf16.mxu0 0
        %4051 = vmatpush1.bf16.msra.mxu0 0
        %4052 = vmatprep.subr.bf16.mxu0 0
        %4053 = vmatpush1.bf16.msra.mxu0 0
        %4054 = vmatprep.subr.bf16.mxu0 0
        %4055 = vmatpush1.bf16.msra.mxu0 0
        %4056 = vmatprep.subr.bf16.mxu0 0
        %4057 = vmatpush1.bf16.msra.mxu0 0
        %4058 = vmatprep.subr.bf16.mxu0 0
        %4059 = vmatpush1.bf16.msra.mxu0 0
        %4060 = vmatprep.subr.bf16.mxu0 0
        %4061 = vmatpush1.bf16.msra.mxu0 0
        %4062 = vmatprep.subr.bf16.mxu0 0
        %4063 = vmatpush1.bf16.msra.mxu0 0
        %4064 = vmatprep.subr.bf16.mxu0 0
        %4065 = vmatpush1.bf16.msra.mxu0 0
        %4066 = vmatprep.subr.bf16.mxu0 0
        %4067 = vmatpush1.bf16.msra.mxu0 0
        %4068 = vmatprep.subr.bf16.mxu0 0
        %4069 = vmatpush1.bf16.msra.mxu0 0
        %4070 = vmatprep.subr.bf16.mxu0 0
        %4071 = vmatpush1.bf16.msra.mxu0 0
        %4072 = vmatprep.subr.bf16.mxu0 0
        %4073 = vmatpush1.bf16.msra.mxu0 0
        %4074 = vmatprep.subr.bf16.mxu0 0
        %4075 = vmatpush1.bf16.msra.mxu0 0
        %4076 = vmatprep.mubr.bf16.mxu0 0
        %4077 = vmatmul.mubr.bf16.gmra.mrb[0].mxu0 %v4001
        %v4078 = vpop.f32.mrb[0].mxu0
        %v4079 = vadd.f32 %v3999, %v4078
        %v4080 = vpop.f32.mrb[0].mxu0
        %v4081 = vadd.f32 %v3999, %v4080
        %v4082 = vpop.f32.mrb[0].mxu0
        %v4083 = vpop.f32.mrb[0].mxu0
        %4084 = vdwg.mxu0
        %4085 = vmatprep.subr.bf16.mxu0 %v3979
        %4086 = vmatpush1.bf16.msra.mxu0 %v3978
        %4087 = vmatprep.subr.bf16.mxu0 %v3987
        %4088 = vmatpush1.bf16.msra.mxu0 %v3986
        %4089 = vmatprep.subr.bf16.mxu0 0
        %4090 = vmatpush1.bf16.msra.mxu0 0
        %4091 = vmatprep.subr.bf16.mxu0 0
        %4092 = vmatpush1.bf16.msra.mxu0 0
        %4093 = vmatprep.subr.bf16.mxu0 0
        %4094 = vmatpush1.bf16.msra.mxu0 0
        %4095 = vmatprep.subr.bf16.mxu0 0
        %4096 = vmatpush1.bf16.msra.mxu0 0
        %4097 = vmatprep.subr.bf16.mxu0 0
        %4098 = vmatpush1.bf16.msra.mxu0 0
        %4099 = vmatprep.subr.bf16.mxu0 0
        %4100 = vmatpush1.bf16.msra.mxu0 0
        %4101 = vmatprep.subr.bf16.mxu0 0
        %4102 = vmatpush1.bf16.msra.mxu0 0
        %4103 = vmatprep.subr.bf16.mxu0 0
        %4104 = vmatpush1.bf16.msra.mxu0 0
        %4105 = vmatprep.subr.bf16.mxu0 0
        %4106 = vmatpush1.bf16.msra.mxu0 0
        %4107 = vmatprep.subr.bf16.mxu0 0
        %4108 = vmatpush1.bf16.msra.mxu0 0
        %4109 = vmatprep.subr.bf16.mxu0 0
        %4110 = vmatpush1.bf16.msra.mxu0 0
        %4111 = vmatprep.subr.bf16.mxu0 0
        %4112 = vmatpush1.bf16.msra.mxu0 0
        %4113 = vmatprep.subr.bf16.mxu0 0
        %4114 = vmatpush1.bf16.msra.mxu0 0
        %4115 = vmatprep.subr.bf16.mxu0 0
        %4116 = vmatpush1.bf16.msra.mxu0 0
        %4117 = vmatprep.mubr.bf16.mxu0 0
        %4118 = vmatmul.mubr.bf16.gmra.mrb[0].mxu0 %v4001
        %v4119 = vpop.f32.mrb[0].mxu0
        %v4120 = vadd.f32 %v3999, %v4119
        %v4121 = vpop.f32.mrb[0].mxu0
        %v4122 = vadd.f32 %v3999, %v4121
        %v4123 = vpop.f32.mrb[0].mxu0
        %v4124 = vpop.f32.mrb[0].mxu0
        %4125 = vdwg.mxu0
        %4126 = vmatprep.subr.bf16.mxu0 %v3981
        %4127 = vmatpush1.bf16.msra.mxu0 %v3980
        %4128 = vmatprep.subr.bf16.mxu0 %v3989
        %4129 = vmatpush1.bf16.msra.mxu0 %v3988
        %4130 = vmatprep.subr.bf16.mxu0 0
        %4131 = vmatpush1.bf16.msra.mxu0 0
        %4132 = vmatprep.subr.bf16.mxu0 0
        %4133 = vmatpush1.bf16.msra.mxu0 0
        %4134 = vmatprep.subr.bf16.mxu0 0
        %4135 = vmatpush1.bf16.msra.mxu0 0
        %4136 = vmatprep.subr.bf16.mxu0 0
        %4137 = vmatpush1.bf16.msra.mxu0 0
        %4138 = vmatprep.subr.bf16.mxu0 0
        %4139 = vmatpush1.bf16.msra.mxu0 0
        %4140 = vmatprep.subr.bf16.mxu0 0
        %4141 = vmatpush1.bf16.msra.mxu0 0
        %4142 = vmatprep.subr.bf16.mxu0 0
        %4143 = vmatpush1.bf16.msra.mxu0 0
        %4144 = vmatprep.subr.bf16.mxu0 0
        %4145 = vmatpush1.bf16.msra.mxu0 0
        %4146 = vmatprep.subr.bf16.mxu0 0
        %4147 = vmatpush1.bf16.msra.mxu0 0
        %4148 = vmatprep.subr.bf16.mxu0 0
        %4149 = vmatpush1.bf16.msra.mxu0 0
        %4150 = vmatprep.subr.bf16.mxu0 0
        %4151 = vmatpush1.bf16.msra.mxu0 0
        %4152 = vmatprep.subr.bf16.mxu0 0
        %4153 = vmatpush1.bf16.msra.mxu0 0
        %4154 = vmatprep.subr.bf16.mxu0 0
        %4155 = vmatpush1.bf16.msra.mxu0 0
        %4156 = vmatprep.subr.bf16.mxu0 0
        %4157 = vmatpush1.bf16.msra.mxu0 0
        %4158 = vmatprep.mubr.bf16.mxu0 0
        %4159 = vmatmul.mubr.bf16.gmra.mrb[0].mxu0 %v4001
        %v4160 = vpop.f32.mrb[0].mxu0
        %v4161 = vadd.f32 %v3999, %v4160
        %v4162 = vpop.f32.mrb[0].mxu0
        %v4163 = vadd.f32 %v3999, %v4162
        %v4164 = vpop.f32.mrb[0].mxu0
        %v4165 = vpop.f32.mrb[0].mxu0
        %4166 = vdwg.mxu0
        %v4175 = vcombine.low %v4038, %v4040
        %v4176 = vcombine.low %v4079, %v4081
        %v4177 = vcombine.low %v4120, %v4122
        %v4178 = vcombine.low %v4161, %v4163
        %v4180 = vunpack.c.l.s4 1966171168
        %v4181 = vunpack.c.0.s8 %v4180
        %v4182 = vlaneseq
        %v4183 = vshrl.u32 %v4182, 7
        %v4184 = vsub.s32 %v4181, %v4183
        %v4185 = vrot.slane %v4175, %v4184
        %v4187 = vunpack.c.l.s4 1966171168
        %v4188 = vunpack.c.0.s8 %v4187
        %v4189 = vlaneseq
        %v4190 = vshrl.u32 %v4189, 7
        %v4191 = vsub.s32 %v4188, %v4190
        %v4192 = vrot.slane %v4176, %v4191
        %v4194 = vunpack.c.l.s4 1966171168
        %v4195 = vunpack.c.0.s8 %v4194
        %v4196 = vlaneseq
        %v4197 = vshrl.u32 %v4196, 7
        %v4198 = vsub.s32 %v4195, %v4197
        %v4199 = vrot.slane %v4177, %v4198
        %v4201 = vunpack.c.l.s4 1966171168
        %v4202 = vunpack.c.0.s8 %v4201
        %v4203 = vlaneseq
        %v4204 = vshrl.u32 %v4203, 7
        %v4205 = vsub.s32 %v4202, %v4204
        %v4206 = vrot.slane %v4178, %v4205
        %v4207 = vcombine.low %v4185, %v4192
        %v4208 = vcombine.low %v4199, %v4206
        %v4210 = vunpack.c.l.s4 1966171168
        %v4211 = vunpack.c.0.s8 %v4210
        %v4212 = vlaneseq
        %v4213 = vshrl.u32 %v4212, 7
        %v4214 = vsub.s32 %v4211, %v4213
        %v4215 = vrot.slane %v4207, %v4214
        %v4217 = vunpack.c.l.s4 1966171168
        %v4218 = vunpack.c.0.s8 %v4217
        %v4219 = vlaneseq
        %v4220 = vshrl.u32 %v4219, 7
        %v4221 = vsub.s32 %v4218, %v4220
        %v4222 = vrot.slane %v4208, %v4221
        %v4223 = vcombine.low %v4215, %v4222
        %4225 = vst [vmem:[%s274] sm:$0xff] %v4223
        %s4226 = sand.u32 %s183, 1
        %s4227 = scalar_lea.sflag [#allocation4], %s4226
        %s4228 = sand.u32 %s183, 1
        %s4229 = smul.addr %s4228, 8
        %s4230 = scalar_lea.vmem [#allocation3], %s4229
        // Predicated region
        $region49: #{tpu_custom_call.1} parent=47 // pred_check
          %p4231 = pneg %p193
        $region50: #{tpu_custom_call.1} parent=47 // pred_check_branch
          %4233 = sbr.rel (%p4231) target = $region52
        $region51: #{tpu_custom_call.1} parent=47 // pred_region
          %s4234 = smul.u32 8, %s23
          %s4236 = ssub.s32 128, 128
          %4237 = vsyncadd %s4227, %s4236
          %s4238 = smul.addr %s4234, 16
          %s4239 = scalar_lea.hbm %s7, %s4238
          %s4241 = sshll.u32 %s4230, 4
          %s4242 = int_to_ptr.vmem [resolvable:$true] %s4241
          %4244 = dma.vmem_to_hbm [thread:$0]  %s4242, 128, %s4239, %s4227
        $region52: #{tpu_custom_call.1} parent=47 // pred_fallthru
          _
      $region48: #{tpu_custom_call.1} parent=5 // pred_fallthru
        _
      %p4245 = scmp.le.s32.totalorder 2, %s18
      // Predicated region
      $region53: #{tpu_custom_call.1} parent=5 // pred_check
        %p4246 = pneg %p4245
      $region54: #{tpu_custom_call.1} parent=5 // pred_check_branch
        %4248 = sbr.rel (%p4246) target = $region56
      $region55: #{tpu_custom_call.1} parent=5 // pred_region
        %s4249 = ssub.s32 %s18, 2
        // Predicated region
        $region57: #{tpu_custom_call.1} parent=55 // pred_check
          %p4250 = pneg %p199
        $region58: #{tpu_custom_call.1} parent=55 // pred_check_branch
          %4252 = sbr.rel (%p4250) target = $region60
        $region59: #{tpu_custom_call.1} parent=55 // pred_region
          %s4253 = sand.u32 %s184, 1
          %s4254 = scalar_lea.sflag [#allocation4], %s4253
          %s4255 = sand.u32 %s184, 1
          %s4256 = smul.addr %s4255, 8
          %s4257 = scalar_lea.vmem [#allocation3], %s4256
          %4258 = dma.done %s4254, 128
        $region60: #{tpu_custom_call.1} parent=55 // pred_fallthru
          _
      $region56: #{tpu_custom_call.1} parent=5 // pred_fallthru
        _
    $region6: #{tpu_custom_call.1} parent=1 // loop_footer
      %s22 = sadd.s32 1, %s18
    $region7: #{tpu_custom_call.1} parent=1 // loop_footer_branch
      %17 = sbr.rel target = $region3
    $region8: #{tpu_custom_call.1} parent=1 // loop_exit
      _
    %4259 = vsyncpa [#allocation4], 1
    %s4260 = scalar_lea.sflag [#allocation4], 1
    %4261 = vsyncpa %s4260, 1

</llo_original>
